<compile_context>
chip_gen: v5e
topology: v5e:2x2
jax: 0.10.0
libtpu: 0.0.40
codegen_flags: <defaults>
</compile_context>

<pallas_src>
import functools

import jax
import jax.numpy as jnp
from jax import lax
from jax.experimental import pallas as pl
from jax.experimental.pallas import tpu as pltpu


# ---------------------------------------------------------------------------
# Pallas kernel: tiled matmul  C = A @ B + bias  (optional fused ReLU)
#   A, B arrive as bf16 tiles; accumulation / bias / ReLU epilogue are f32.
# ---------------------------------------------------------------------------
def matmul_bias_kernel(a_ref, b_ref, bias_ref, o_ref, acc_ref, *, apply_relu):
    k = pl.program_id(2)

    @pl.when(k == 0)
    def _():
        acc_ref[...] = jnp.zeros_like(acc_ref)

    acc_ref[...] += jnp.dot(a_ref[...], b_ref[...],
                            preferred_element_type=jnp.float32)

    @pl.when(k == pl.num_programs(2) - 1)
    def _():
        out = acc_ref[...] + bias_ref[...]          # (tm,tn) + (1,tn) broadcast
        if apply_relu:
            out = jnp.maximum(out, 0.0)
        o_ref[...] = out.astype(o_ref.dtype)


def _round_up(v, m):
    return ((v + m - 1) // m) * m


def _choose_tiles(M, K, N):
    """Shape-adaptive tiles (perf review): tiny-M GEMMs (fc_) -> tm=16 with large
    tk/tn; conv GEMMs -> ~256-wide tiles.  bf16 operands -> tm multiple of 16,
    tk/tn multiples of 128."""
    tm = min(_round_up(M, 16), 256)
    tn = min(_round_up(N, 128), 512)
    tk = min(_round_up(K, 128), 2048)

    def footprint(tk_, tn_):
        # double-buffered bf16 A/B + f32 bias/out tiles, plus the f32 accumulator.
        return (2 * (tm * tk_ * 2 + tk_ * tn_ * 2 + tn_ * 4 + tm * tn_ * 4)
                + tm * tn_ * 4)

    # Stay well under v7x's 64 MiB physical VMEM.
    while footprint(tk, tn) > 20 * 2**20 and tk > 512:
        tk = _round_up(tk // 2, 128)
    while footprint(tk, tn) > 20 * 2**20 and tn > 256:
        tn //= 2
    return tm, tk, tn, footprint(tk, tn)


def pallas_linear(x, w, b, *, apply_relu):
    """x: (M, K), w: (K, N), b: (N,) f32 -> (M, N) f32, computed on the MXU."""
    M, K = x.shape
    K2, N = w.shape
    assert K == K2
    tm, tk, tn, fp = _choose_tiles(M, K, N)
    Mp = pl.cdiv(M, tm) * tm
    Kp = pl.cdiv(K, tk) * tk
    Np = pl.cdiv(N, tn) * tn

    # bf16 operands (halves the HBM weight stream, MXU-native rate); f32 epilogue.
    xp = x.astype(jnp.bfloat16)
    wp = w.astype(jnp.bfloat16)
    # Zero-pad only when a tile does not divide the true dim (zero K columns
    # contribute nothing; padded M rows / N cols are sliced off below).
    if (Mp, Kp) != (M, K):
        xp = jnp.pad(xp, ((0, Mp - M), (0, Kp - K)))
    if (Kp, Np) != (K, N):
        wp = jnp.pad(wp, ((0, Kp - K), (0, Np - N)))
    bp = b.reshape(1, -1).astype(jnp.float32)
    if Np != N:
        bp = jnp.pad(bp, ((0, 0), (0, Np - N)))

    grid = (Mp // tm, Np // tn, Kp // tk)
    # Explicit VMEM budget: >=32 MiB (v5e's scoped default is only 16 MiB),
    # <=~40 MiB (fits v7x's 64 MiB physical VMEM).
    vmem_limit = int(min(100 * 2**20, max(32 * 2**20, 2 * fp)))

    out = pl.pallas_call(
        functools.partial(matmul_bias_kernel, apply_relu=apply_relu),
        out_shape=jax.ShapeDtypeStruct((Mp, Np), jnp.float32),
        grid_spec=pltpu.PrefetchScalarGridSpec(
            num_scalar_prefetch=0,
            grid=grid,
            in_specs=[
                pl.BlockSpec((tm, tk), lambda i, j, k: (i, k)),
                pl.BlockSpec((tk, tn), lambda i, j, k: (k, j)),
                pl.BlockSpec((1, tn), lambda i, j, k: (0, j)),
            ],
            out_specs=pl.BlockSpec((tm, tn), lambda i, j, k: (i, j)),
            scratch_shapes=[pltpu.VMEM((tm, tn), jnp.float32)],
        ),
        compiler_params=pltpu.CompilerParams(
            dimension_semantics=("parallel", "parallel", "arbitrary"),
            vmem_limit_bytes=vmem_limit),
    )(xp, wp, bp)
    if (Mp, Np) != (M, N):
        out = out[:M, :N]
    return out


# ---------------------------------------------------------------------------
# Conv via NHWC im2col + Pallas GEMM (no per-layer layout transposes), max-pool glue
# ---------------------------------------------------------------------------
def _im2col_nhwc(x, kh, kw, stride, pad):
    """x: (N, H, W, C) -> patches (N*Ho*Wo, kh*kw*C), column order (kh, kw, c)."""
    N, H, W, C = x.shape
    xpad = jnp.pad(x, ((0, 0), (pad, pad), (pad, pad), (0, 0)))
    Ho = (H + 2 * pad - kh) // stride + 1
    Wo = (W + 2 * pad - kw) // stride + 1
    cols = []
    for i in range(kh):
        for j in range(kw):
            cols.append(xpad[:, i:i + stride * Ho:stride,
                             j:j + stride * Wo:stride, :])
    p = jnp.stack(cols, axis=3)                     # (N, Ho, Wo, kh*kw, C)
    # TODO(synk): fold patch extraction into the GEMM kernel (extra (kh,kw)
    # reduction grid axes indexing a padded NHWC input) to avoid materializing
    # the patches matrix in HBM at full scale.
    return p.reshape(N * Ho * Wo, kh * kw * C), Ho, Wo


def conv2d_nhwc_pallas(x, w, b, *, stride, pad, apply_relu):
    """x: (N, H, W, C), w: (OC, IC, kh, kw) [PyTorch layout], b: (OC,) -> NHWC out."""
    N = x.shape[0]
    OC, IC, kh, kw = w.shape
    patches, Ho, Wo = _im2col_nhwc(x, kh, kw, stride, pad)
    w2 = w.transpose(2, 3, 1, 0).reshape(kh * kw * IC, OC)   # matches (kh,kw,c) cols
    out = pallas_linear(patches, w2, b, apply_relu=apply_relu)
    return out.reshape(N, Ho, Wo, OC)


def maxpool_3x3_s2_nhwc(x):
    # TODO(synk): overlapping 3x3 / stride-2 max-pool kept as lax.reduce_window;
    # the odd 15/7 (full-size: 55/27) spatial extents don't tile to (8,128).
    return lax.reduce_window(x, -jnp.inf, lax.max,
                             (1, 3, 3, 1), (1, 2, 2, 1), "VALID")


# ---------------------------------------------------------------------------
# PhaseNet forward (same op graph as the PyTorch module)
# ---------------------------------------------------------------------------
@functools.partial(jax.jit,
                   static_argnames=("img_size", "seq_len", "num_classes", "conv_cfg"))
def phasenet_forward(x, params, *, img_size, seq_len, num_classes, conv_cfg):
    x = x.reshape(-1, 3, img_size, img_size)        # x.view(-1, 3, H, W)
    x = x.transpose(0, 2, 3, 1)                     # NCHW -> NHWC once; stay NHWC

    # AlexNet.features[:-2] structure (last ReLU + MaxPool dropped -> conv5 bare).
    for li, (_oc, k, s, p, relu_after, pool_after) in enumerate(conv_cfg):
        x = conv2d_nhwc_pallas(x, params[f"c{li}_w"], params[f"c{li}_b"],
                               stride=s, pad=p, apply_relu=relu_after)
        if pool_after:
            x = maxpool_3x3_s2_nhwc(x)

    # x.view(-1, flat): PyTorch flattens NCHW-contiguously -> (C, H, W) order.
    n, ho, wo, c = x.shape
    x = x.transpose(0, 3, 1, 2).reshape(-1, c * ho * wo)

    # fc_ then (view, ReLU): ReLU(view(z)) == view(ReLU(z)) -> fuse ReLU into the GEMM.
    x = pallas_linear(x, params["fc__w"], params["fc__b"], apply_relu=True)
    hidden = params["fc_w"].shape[0]
    x = x.reshape(-1, seq_len, hidden)

    # Final fc is microscopic (rows = seq_len*batch, cols = num_classes): plain XLA
    # dot per perf review (a Pallas call would only pad M and N).
    y = jnp.dot(x.reshape(-1, hidden), params["fc_w"],
                preferred_element_type=jnp.float32) + params["fc_b"]
    return y.reshape(-1, num_classes)


# ---------------------------------------------------------------------------
# Configuration + deterministic synthetic parameters
# ---------------------------------------------------------------------------
# Full PhaseNet geometry (documented; times out under the sandbox interpreter):
#   IMG_SIZE=224, HIDDEN=4096, CONV_CFG=FULL_CONV_CFG  ->  flat = 256*13*13 = 43264.
FULL_CONV_CFG = (
    # (out_ch, kernel, stride, pad, relu_after, maxpool_after)
    (64, 11, 4, 2, True, True),
    (192, 5, 1, 2, True, True),
    (384, 3, 1, 1, True, False),
    (256, 3, 1, 1, True, False),
    (256, 3, 1, 1, False, False),   # features[:-2]: conv5 keeps neither ReLU nor pool
)

# Reduced configuration actually executed (same op graph, small shapes).
IMG_SIZE = 64
SEQ_LEN = 2
NUM_CLASSES = 7
HIDDEN = 256
CONV_CFG = (
    (16, 11, 4, 2, True, True),
    (32, 5, 1, 2, True, True),
    (48, 3, 1, 1, True, False),
    (32, 3, 1, 1, True, False),
    (32, 3, 1, 1, False, False),
)


def _feature_geometry(img_size, conv_cfg):
    h, c = img_size, 3
    per_layer = []
    for (oc, k, s, p, _relu, pool) in conv_cfg:
        per_layer.append((c, oc, k))
        h = (h + 2 * p - k) // s + 1
        if pool:
            h = (h - 3) // 2 + 1
        c = oc
    return per_layer, c * h * h


def make_params(key, img_size, conv_cfg, hidden, num_classes):
    per_layer, flat = _feature_geometry(img_size, conv_cfg)

    def nrm(k, shape, scale, dtype=jnp.float32):
        return (scale * jax.random.normal(k, shape, dtype=jnp.float32)).astype(dtype)

    keys = jax.random.split(key, 2 * len(per_layer) + 4)
    p = {}
    for li, (ic, oc, k) in enumerate(per_layer):
        # conv weights kept in PyTorch (OC, IC, kh, kw) layout; stored bf16 (perf review)
        p[f"c{li}_w"] = nrm(keys[2 * li], (oc, ic, k, k), 0.02, jnp.bfloat16)
        p[f"c{li}_b"] = nrm(keys[2 * li + 1], (oc,), 0.01)
    ko = 2 * len(per_layer)
    # fc_ : Linear(flat, hidden), stored pre-transposed (K, N), bf16 weight stream
    p["fc__w"] = nrm(keys[ko], (flat, hidden), 0.01, jnp.bfloat16)
    p["fc__b"] = nrm(keys[ko + 1], (hidden,), 0.01)
    # fc : Linear(hidden, num_classes), pre-transposed, stays f32 (tiny jnp.dot)
    p["fc_w"] = nrm(keys[ko + 2], (hidden, num_classes), 0.02)
    p["fc_b"] = nrm(keys[ko + 3], (num_classes,), 0.01)
    return p, flat


if __name__ == "__main__":
    key = jax.random.PRNGKey(0)
    kx, kp = jax.random.split(key)

    params, flat = make_params(kp, IMG_SIZE, CONV_CFG, HIDDEN, NUM_CLASSES)
    # one clip: (batch_groups=1, seq_len, 3, H, W); forward views to (-1, 3, H, W)
    x = jax.random.normal(kx, (1, SEQ_LEN, 3, IMG_SIZE, IMG_SIZE), dtype=jnp.float32)

    y = phasenet_forward(x, params, img_size=IMG_SIZE, seq_len=SEQ_LEN,
                         num_classes=NUM_CLASSES, conv_cfg=CONV_CFG)
    y = jax.block_until_ready(y)
    assert y.shape == (SEQ_LEN, NUM_CLASSES), y.shape
    assert y.dtype == jnp.float32, y.dtype
    print("KERNEL_OK")
</pallas_src>

<mosaic_0001>
module attributes {stable_mosaic.version = 11 : i64} {
  func.func @matmul_bias_kernel(%arg0: i32, %arg1: i32, %arg2: i32, %arg3: memref<256x384xbf16, #tpu.memory_space<vmem>>, %arg4: memref<384x128xbf16, #tpu.memory_space<vmem>>, %arg5: memref<1x128xf32, #tpu.memory_space<vmem>>, %arg6: memref<256x128xf32, #tpu.memory_space<vmem>>, %arg7: memref<256x128xf32, #tpu.memory_space<vmem>>) attributes {dimension_semantics = [#tpu.dimension_semantics<parallel>, #tpu.dimension_semantics<parallel>, #tpu.dimension_semantics<arbitrary>], iteration_bounds = array<i64: 2, 1, 1>, scalar_prefetch = 0 : i64, scratch_operands = 1 : i64, tpu.core_type = #tpu.core_type<tc>, window_params = [{transform_indices = @transform_0, window_bounds = array<i64: 256, 384>}, {transform_indices = @transform_1, window_bounds = array<i64: 384, 128>}, {transform_indices = @transform_2, window_bounds = array<i64: 1, 128>}, {transform_indices = @transform_3, window_bounds = array<i64: 256, 128>}]} {
    %c0_i32 = arith.constant 0 : i32
    %0 = arith.cmpi eq, %arg2, %c0_i32 : i32
    %1 = arith.extui %0 : i1 to i32
    %c0_i32_0 = arith.constant 0 : i32
    %2 = arith.cmpi ne, %1, %c0_i32_0 : i32
    scf.if %2 {
      %cst_10 = arith.constant 0.000000e+00 : f32
      %12 = vector.broadcast %cst_10 : f32 to vector<256x128xf32>
      %c0_11 = arith.constant 0 : index
      %c0_12 = arith.constant 0 : index
      %13 = vector.load %arg7[%c0_11, %c0_12] : memref<256x128xf32, #tpu.memory_space<vmem>>, vector<256x128xf32>
      tpu.vector_store %arg7[%c0_11, %c0_12], %12 {strides = array<i32>} : memref<256x128xf32, #tpu.memory_space<vmem>>, vector<256x128xf32>,
    } else {
    }
    %c0 = arith.constant 0 : index
    %c0_1 = arith.constant 0 : index
    %3 = vector.load %arg7[%c0, %c0_1] : memref<256x128xf32, #tpu.memory_space<vmem>>, vector<256x128xf32>
    %c0_2 = arith.constant 0 : index
    %c0_3 = arith.constant 0 : index
    %4 = vector.load %arg3[%c0_2, %c0_3] : memref<256x384xbf16, #tpu.memory_space<vmem>>, vector<256x384xbf16>
    %c0_4 = arith.constant 0 : index
    %c0_5 = arith.constant 0 : index
    %5 = vector.load %arg4[%c0_4, %c0_5] : memref<384x128xbf16, #tpu.memory_space<vmem>>, vector<384x128xbf16>
    %cst = arith.constant dense<0.000000e+00> : vector<256x128xf32>
    %6 = tpu.matmul %4, %5, %cst {dimension_numbers = #tpu.dot_dimension_numbers<[1], [0], [0], [1], [0, 0, 1, 1], [], []>} : vector<256x384xbf16>, vector<384x128xbf16>, vector<256x128xf32> -> vector<256x128xf32>
    %7 = arith.addf %3, %6 : vector<256x128xf32>
    %c0_6 = arith.constant 0 : index
    %c0_7 = arith.constant 0 : index
    %8 = vector.load %arg7[%c0_6, %c0_7] : memref<256x128xf32, #tpu.memory_space<vmem>>, vector<256x128xf32>
    tpu.vector_store %arg7[%c0_6, %c0_7], %7 {strides = array<i32>} : memref<256x128xf32, #tpu.memory_space<vmem>>, vector<256x128xf32>,
    %c0_i32_8 = arith.constant 0 : i32
    %9 = arith.cmpi eq, %arg2, %c0_i32_8 : i32
    %10 = arith.extui %9 : i1 to i32
    %c0_i32_9 = arith.constant 0 : i32
    %11 = arith.cmpi ne, %10, %c0_i32_9 : i32
    scf.if %11 {
      %c0_10 = arith.constant 0 : index
      %c0_11 = arith.constant 0 : index
      %12 = vector.load %arg7[%c0_10, %c0_11] : memref<256x128xf32, #tpu.memory_space<vmem>>, vector<256x128xf32>
      %c0_12 = arith.constant 0 : index
      %c0_13 = arith.constant 0 : index
      %13 = vector.load %arg5[%c0_12, %c0_13] : memref<1x128xf32, #tpu.memory_space<vmem>>, vector<1x128xf32>
      %14 = vector.broadcast %13 : vector<1x128xf32> to vector<256x128xf32>
      %15 = arith.addf %12, %14 : vector<256x128xf32>
      %cst_14 = arith.constant 0.000000e+00 : f32
      %16 = vector.broadcast %cst_14 : f32 to vector<256x128xf32>
      %17 = arith.maximumf %15, %16 : vector<256x128xf32>
      %c0_15 = arith.constant 0 : index
      %c0_16 = arith.constant 0 : index
      %18 = vector.load %arg6[%c0_15, %c0_16] : memref<256x128xf32, #tpu.memory_space<vmem>>, vector<256x128xf32>
      tpu.vector_store %arg6[%c0_15, %c0_16], %17 {strides = array<i32>} : memref<256x128xf32, #tpu.memory_space<vmem>>, vector<256x128xf32>,
    } else {
    }
    return
  }
  func.func @transform_0(%arg0: i32, %arg1: i32, %arg2: i32) -> (i32, i32) {
    %c0_i32 = arith.constant 0 : i32
    return %arg0, %arg2 : i32, i32
  }
  func.func @transform_1(%arg0: i32, %arg1: i32, %arg2: i32) -> (i32, i32) {
    %c0_i32 = arith.constant 0 : i32
    return %arg2, %arg1 : i32, i32
  }
  func.func @transform_2(%arg0: i32, %arg1: i32, %arg2: i32) -> (i32, i32) {
    %c0_i32 = arith.constant 0 : i32
    %c0_i32_0 = arith.constant 0 : i32
    return %c0_i32, %arg1 : i32, i32
  }
  func.func @transform_3(%arg0: i32, %arg1: i32, %arg2: i32) -> (i32, i32) {
    %c0_i32 = arith.constant 0 : i32
    return %arg0, %arg1 : i32, i32
  }
}

module attributes {stable_mosaic.version = 11 : i64} {
  func.func @matmul_bias_kernel(%arg0: i32, %arg1: i32, %arg2: i32, %arg3: memref<112x512xbf16, #tpu.memory_space<vmem>>, %arg4: memref<512x128xbf16, #tpu.memory_space<vmem>>, %arg5: memref<1x128xf32, #tpu.memory_space<vmem>>, %arg6: memref<112x128xf32, #tpu.memory_space<vmem>>, %arg7: memref<112x128xf32, #tpu.memory_space<vmem>>) attributes {dimension_semantics = [#tpu.dimension_semantics<parallel>, #tpu.dimension_semantics<parallel>, #tpu.dimension_semantics<arbitrary>], iteration_bounds = array<i64: 1, 1, 1>, scalar_prefetch = 0 : i64, scratch_operands = 1 : i64, tpu.core_type = #tpu.core_type<tc>, window_params = [{transform_indices = @transform_0, window_bounds = array<i64: 112, 512>}, {transform_indices = @transform_1, window_bounds = array<i64: 512, 128>}, {transform_indices = @transform_2, window_bounds = array<i64: 1, 128>}, {transform_indices = @transform_3, window_bounds = array<i64: 112, 128>}]} {
    %c0_i32 = arith.constant 0 : i32
    %0 = arith.cmpi eq, %arg2, %c0_i32 : i32
    %1 = arith.extui %0 : i1 to i32
    %c0_i32_0 = arith.constant 0 : i32
    %2 = arith.cmpi ne, %1, %c0_i32_0 : i32
    scf.if %2 {
      %cst_10 = arith.constant 0.000000e+00 : f32
      %12 = vector.broadcast %cst_10 : f32 to vector<112x128xf32>
      %c0_11 = arith.constant 0 : index
      %c0_12 = arith.constant 0 : index
      %13 = vector.load %arg7[%c0_11, %c0_12] : memref<112x128xf32, #tpu.memory_space<vmem>>, vector<112x128xf32>
      tpu.vector_store %arg7[%c0_11, %c0_12], %12 {strides = array<i32>} : memref<112x128xf32, #tpu.memory_space<vmem>>, vector<112x128xf32>,
    } else {
    }
    %c0 = arith.constant 0 : index
    %c0_1 = arith.constant 0 : index
    %3 = vector.load %arg7[%c0, %c0_1] : memref<112x128xf32, #tpu.memory_space<vmem>>, vector<112x128xf32>
    %c0_2 = arith.constant 0 : index
    %c0_3 = arith.constant 0 : index
    %4 = vector.load %arg3[%c0_2, %c0_3] : memref<112x512xbf16, #tpu.memory_space<vmem>>, vector<112x512xbf16>
    %c0_4 = arith.constant 0 : index
    %c0_5 = arith.constant 0 : index
    %5 = vector.load %arg4[%c0_4, %c0_5] : memref<512x128xbf16, #tpu.memory_space<vmem>>, vector<512x128xbf16>
    %cst = arith.constant dense<0.000000e+00> : vector<112x128xf32>
    %6 = tpu.matmul %4, %5, %cst {dimension_numbers = #tpu.dot_dimension_numbers<[1], [0], [0], [1], [0, 0, 1, 1], [], []>} : vector<112x512xbf16>, vector<512x128xbf16>, vector<112x128xf32> -> vector<112x128xf32>
    %7 = arith.addf %3, %6 : vector<112x128xf32>
    %c0_6 = arith.constant 0 : index
    %c0_7 = arith.constant 0 : index
    %8 = vector.load %arg7[%c0_6, %c0_7] : memref<112x128xf32, #tpu.memory_space<vmem>>, vector<112x128xf32>
    tpu.vector_store %arg7[%c0_6, %c0_7], %7 {strides = array<i32>} : memref<112x128xf32, #tpu.memory_space<vmem>>, vector<112x128xf32>,
    %c0_i32_8 = arith.constant 0 : i32
    %9 = arith.cmpi eq, %arg2, %c0_i32_8 : i32
    %10 = arith.extui %9 : i1 to i32
    %c0_i32_9 = arith.constant 0 : i32
    %11 = arith.cmpi ne, %10, %c0_i32_9 : i32
    scf.if %11 {
      %c0_10 = arith.constant 0 : index
      %c0_11 = arith.constant 0 : index
      %12 = vector.load %arg7[%c0_10, %c0_11] : memref<112x128xf32, #tpu.memory_space<vmem>>, vector<112x128xf32>
      %c0_12 = arith.constant 0 : index
      %c0_13 = arith.constant 0 : index
      %13 = vector.load %arg5[%c0_12, %c0_13] : memref<1x128xf32, #tpu.memory_space<vmem>>, vector<1x128xf32>
      %14 = vector.broadcast %13 : vector<1x128xf32> to vector<112x128xf32>
      %15 = arith.addf %12, %14 : vector<112x128xf32>
      %cst_14 = arith.constant 0.000000e+00 : f32
      %16 = vector.broadcast %cst_14 : f32 to vector<112x128xf32>
      %17 = arith.maximumf %15, %16 : vector<112x128xf32>
      %c0_15 = arith.constant 0 : index
      %c0_16 = arith.constant 0 : index
      %18 = vector.load %arg6[%c0_15, %c0_16] : memref<112x128xf32, #tpu.memory_space<vmem>>, vector<112x128xf32>
      tpu.vector_store %arg6[%c0_15, %c0_16], %17 {strides = array<i32>} : memref<112x128xf32, #tpu.memory_space<vmem>>, vector<112x128xf32>,
    } else {
    }
    return
  }
  func.func @transform_0(%arg0: i32, %arg1: i32, %arg2: i32) -> (i32, i32) {
    %c0_i32 = arith.constant 0 : i32
    return %arg0, %arg2 : i32, i32
  }
  func.func @transform_1(%arg0: i32, %arg1: i32, %arg2: i32) -> (i32, i32) {
    %c0_i32 = arith.constant 0 : i32
    return %arg2, %arg1 : i32, i32
  }
  func.func @transform_2(%arg0: i32, %arg1: i32, %arg2: i32) -> (i32, i32) {
    %c0_i32 = arith.constant 0 : i32
    %c0_i32_0 = arith.constant 0 : i32
    return %c0_i32, %arg1 : i32, i32
  }
  func.func @transform_3(%arg0: i32, %arg1: i32, %arg2: i32) -> (i32, i32) {
    %c0_i32 = arith.constant 0 : i32
    return %arg0, %arg1 : i32, i32
  }
}

module attributes {stable_mosaic.version = 11 : i64} {
  func.func @matmul_bias_kernel(%arg0: i32, %arg1: i32, %arg2: i32, %arg3: memref<32x384xbf16, #tpu.memory_space<vmem>>, %arg4: memref<384x128xbf16, #tpu.memory_space<vmem>>, %arg5: memref<1x128xf32, #tpu.memory_space<vmem>>, %arg6: memref<32x128xf32, #tpu.memory_space<vmem>>, %arg7: memref<32x128xf32, #tpu.memory_space<vmem>>) attributes {dimension_semantics = [#tpu.dimension_semantics<parallel>, #tpu.dimension_semantics<parallel>, #tpu.dimension_semantics<arbitrary>], iteration_bounds = array<i64: 1, 1, 1>, scalar_prefetch = 0 : i64, scratch_operands = 1 : i64, tpu.core_type = #tpu.core_type<tc>, window_params = [{transform_indices = @transform_0, window_bounds = array<i64: 32, 384>}, {transform_indices = @transform_1, window_bounds = array<i64: 384, 128>}, {transform_indices = @transform_2, window_bounds = array<i64: 1, 128>}, {transform_indices = @transform_3, window_bounds = array<i64: 32, 128>}]} {
    %c0_i32 = arith.constant 0 : i32
    %0 = arith.cmpi eq, %arg2, %c0_i32 : i32
    %1 = arith.extui %0 : i1 to i32
    %c0_i32_0 = arith.constant 0 : i32
    %2 = arith.cmpi ne, %1, %c0_i32_0 : i32
    scf.if %2 {
      %cst_10 = arith.constant 0.000000e+00 : f32
      %12 = vector.broadcast %cst_10 : f32 to vector<32x128xf32>
      %c0_11 = arith.constant 0 : index
      %c0_12 = arith.constant 0 : index
      %13 = vector.load %arg7[%c0_11, %c0_12] : memref<32x128xf32, #tpu.memory_space<vmem>>, vector<32x128xf32>
      tpu.vector_store %arg7[%c0_11, %c0_12], %12 {strides = array<i32>} : memref<32x128xf32, #tpu.memory_space<vmem>>, vector<32x128xf32>,
    } else {
    }
    %c0 = arith.constant 0 : index
    %c0_1 = arith.constant 0 : index
    %3 = vector.load %arg7[%c0, %c0_1] : memref<32x128xf32, #tpu.memory_space<vmem>>, vector<32x128xf32>
    %c0_2 = arith.constant 0 : index
    %c0_3 = arith.constant 0 : index
    %4 = vector.load %arg3[%c0_2, %c0_3] : memref<32x384xbf16, #tpu.memory_space<vmem>>, vector<32x384xbf16>
    %c0_4 = arith.constant 0 : index
    %c0_5 = arith.constant 0 : index
    %5 = vector.load %arg4[%c0_4, %c0_5] : memref<384x128xbf16, #tpu.memory_space<vmem>>, vector<384x128xbf16>
    %cst = arith.constant dense<0.000000e+00> : vector<32x128xf32>
    %6 = tpu.matmul %4, %5, %cst {dimension_numbers = #tpu.dot_dimension_numbers<[1], [0], [0], [1], [0, 0, 1, 1], [], []>} : vector<32x384xbf16>, vector<384x128xbf16>, vector<32x128xf32> -> vector<32x128xf32>
    %7 = arith.addf %3, %6 : vector<32x128xf32>
    %c0_6 = arith.constant 0 : index
    %c0_7 = arith.constant 0 : index
    %8 = vector.load %arg7[%c0_6, %c0_7] : memref<32x128xf32, #tpu.memory_space<vmem>>, vector<32x128xf32>
    tpu.vector_store %arg7[%c0_6, %c0_7], %7 {strides = array<i32>} : memref<32x128xf32, #tpu.memory_space<vmem>>, vector<32x128xf32>,
    %c0_i32_8 = arith.constant 0 : i32
    %9 = arith.cmpi eq, %arg2, %c0_i32_8 : i32
    %10 = arith.extui %9 : i1 to i32
    %c0_i32_9 = arith.constant 0 : i32
    %11 = arith.cmpi ne, %10, %c0_i32_9 : i32
    scf.if %11 {
      %c0_10 = arith.constant 0 : index
      %c0_11 = arith.constant 0 : index
      %12 = vector.load %arg7[%c0_10, %c0_11] : memref<32x128xf32, #tpu.memory_space<vmem>>, vector<32x128xf32>
      %c0_12 = arith.constant 0 : index
      %c0_13 = arith.constant 0 : index
      %13 = vector.load %arg5[%c0_12, %c0_13] : memref<1x128xf32, #tpu.memory_space<vmem>>, vector<1x128xf32>
      %14 = vector.broadcast %13 : vector<1x128xf32> to vector<32x128xf32>
      %15 = arith.addf %12, %14 : vector<32x128xf32>
      %cst_14 = arith.constant 0.000000e+00 : f32
      %16 = vector.broadcast %cst_14 : f32 to vector<32x128xf32>
      %17 = arith.maximumf %15, %16 : vector<32x128xf32>
      %c0_15 = arith.constant 0 : index
      %c0_16 = arith.constant 0 : index
      %18 = vector.load %arg6[%c0_15, %c0_16] : memref<32x128xf32, #tpu.memory_space<vmem>>, vector<32x128xf32>
      tpu.vector_store %arg6[%c0_15, %c0_16], %17 {strides = array<i32>} : memref<32x128xf32, #tpu.memory_space<vmem>>, vector<32x128xf32>,
    } else {
    }
    return
  }
  func.func @transform_0(%arg0: i32, %arg1: i32, %arg2: i32) -> (i32, i32) {
    %c0_i32 = arith.constant 0 : i32
    return %arg0, %arg2 : i32, i32
  }
  func.func @transform_1(%arg0: i32, %arg1: i32, %arg2: i32) -> (i32, i32) {
    %c0_i32 = arith.constant 0 : i32
    return %arg2, %arg1 : i32, i32
  }
  func.func @transform_2(%arg0: i32, %arg1: i32, %arg2: i32) -> (i32, i32) {
    %c0_i32 = arith.constant 0 : i32
    %c0_i32_0 = arith.constant 0 : i32
    return %c0_i32, %arg1 : i32, i32
  }
  func.func @transform_3(%arg0: i32, %arg1: i32, %arg2: i32) -> (i32, i32) {
    %c0_i32 = arith.constant 0 : i32
    return %arg0, %arg1 : i32, i32
  }
}

module attributes {stable_mosaic.version = 11 : i64} {
  func.func @matmul_bias_kernel(%arg0: i32, %arg1: i32, %arg2: i32, %arg3: memref<32x512xbf16, #tpu.memory_space<vmem>>, %arg4: memref<512x128xbf16, #tpu.memory_space<vmem>>, %arg5: memref<1x128xf32, #tpu.memory_space<vmem>>, %arg6: memref<32x128xf32, #tpu.memory_space<vmem>>, %arg7: memref<32x128xf32, #tpu.memory_space<vmem>>) attributes {dimension_semantics = [#tpu.dimension_semantics<parallel>, #tpu.dimension_semantics<parallel>, #tpu.dimension_semantics<arbitrary>], iteration_bounds = array<i64: 1, 1, 1>, scalar_prefetch = 0 : i64, scratch_operands = 1 : i64, tpu.core_type = #tpu.core_type<tc>, window_params = [{transform_indices = @transform_0, window_bounds = array<i64: 32, 512>}, {transform_indices = @transform_1, window_bounds = array<i64: 512, 128>}, {transform_indices = @transform_2, window_bounds = array<i64: 1, 128>}, {transform_indices = @transform_3, window_bounds = array<i64: 32, 128>}]} {
    %c0_i32 = arith.constant 0 : i32
    %0 = arith.cmpi eq, %arg2, %c0_i32 : i32
    %1 = arith.extui %0 : i1 to i32
    %c0_i32_0 = arith.constant 0 : i32
    %2 = arith.cmpi ne, %1, %c0_i32_0 : i32
    scf.if %2 {
      %cst_10 = arith.constant 0.000000e+00 : f32
      %12 = vector.broadcast %cst_10 : f32 to vector<32x128xf32>
      %c0_11 = arith.constant 0 : index
      %c0_12 = arith.constant 0 : index
      %13 = vector.load %arg7[%c0_11, %c0_12] : memref<32x128xf32, #tpu.memory_space<vmem>>, vector<32x128xf32>
      tpu.vector_store %arg7[%c0_11, %c0_12], %12 {strides = array<i32>} : memref<32x128xf32, #tpu.memory_space<vmem>>, vector<32x128xf32>,
    } else {
    }
    %c0 = arith.constant 0 : index
    %c0_1 = arith.constant 0 : index
    %3 = vector.load %arg7[%c0, %c0_1] : memref<32x128xf32, #tpu.memory_space<vmem>>, vector<32x128xf32>
    %c0_2 = arith.constant 0 : index
    %c0_3 = arith.constant 0 : index
    %4 = vector.load %arg3[%c0_2, %c0_3] : memref<32x512xbf16, #tpu.memory_space<vmem>>, vector<32x512xbf16>
    %c0_4 = arith.constant 0 : index
    %c0_5 = arith.constant 0 : index
    %5 = vector.load %arg4[%c0_4, %c0_5] : memref<512x128xbf16, #tpu.memory_space<vmem>>, vector<512x128xbf16>
    %cst = arith.constant dense<0.000000e+00> : vector<32x128xf32>
    %6 = tpu.matmul %4, %5, %cst {dimension_numbers = #tpu.dot_dimension_numbers<[1], [0], [0], [1], [0, 0, 1, 1], [], []>} : vector<32x512xbf16>, vector<512x128xbf16>, vector<32x128xf32> -> vector<32x128xf32>
    %7 = arith.addf %3, %6 : vector<32x128xf32>
    %c0_6 = arith.constant 0 : index
    %c0_7 = arith.constant 0 : index
    %8 = vector.load %arg7[%c0_6, %c0_7] : memref<32x128xf32, #tpu.memory_space<vmem>>, vector<32x128xf32>
    tpu.vector_store %arg7[%c0_6, %c0_7], %7 {strides = array<i32>} : memref<32x128xf32, #tpu.memory_space<vmem>>, vector<32x128xf32>,
    %c0_i32_8 = arith.constant 0 : i32
    %9 = arith.cmpi eq, %arg2, %c0_i32_8 : i32
    %10 = arith.extui %9 : i1 to i32
    %c0_i32_9 = arith.constant 0 : i32
    %11 = arith.cmpi ne, %10, %c0_i32_9 : i32
    scf.if %11 {
      %c0_10 = arith.constant 0 : index
      %c0_11 = arith.constant 0 : index
      %12 = vector.load %arg7[%c0_10, %c0_11] : memref<32x128xf32, #tpu.memory_space<vmem>>, vector<32x128xf32>
      %c0_12 = arith.constant 0 : index
      %c0_13 = arith.constant 0 : index
      %13 = vector.load %arg5[%c0_12, %c0_13] : memref<1x128xf32, #tpu.memory_space<vmem>>, vector<1x128xf32>
      %14 = vector.broadcast %13 : vector<1x128xf32> to vector<32x128xf32>
      %15 = arith.addf %12, %14 : vector<32x128xf32>
      %cst_14 = arith.constant 0.000000e+00 : f32
      %16 = vector.broadcast %cst_14 : f32 to vector<32x128xf32>
      %17 = arith.maximumf %15, %16 : vector<32x128xf32>
      %c0_15 = arith.constant 0 : index
      %c0_16 = arith.constant 0 : index
      %18 = vector.load %arg6[%c0_15, %c0_16] : memref<32x128xf32, #tpu.memory_space<vmem>>, vector<32x128xf32>
      tpu.vector_store %arg6[%c0_15, %c0_16], %17 {strides = array<i32>} : memref<32x128xf32, #tpu.memory_space<vmem>>, vector<32x128xf32>,
    } else {
    }
    return
  }
  func.func @transform_0(%arg0: i32, %arg1: i32, %arg2: i32) -> (i32, i32) {
    %c0_i32 = arith.constant 0 : i32
    return %arg0, %arg2 : i32, i32
  }
  func.func @transform_1(%arg0: i32, %arg1: i32, %arg2: i32) -> (i32, i32) {
    %c0_i32 = arith.constant 0 : i32
    return %arg2, %arg1 : i32, i32
  }
  func.func @transform_2(%arg0: i32, %arg1: i32, %arg2: i32) -> (i32, i32) {
    %c0_i32 = arith.constant 0 : i32
    %c0_i32_0 = arith.constant 0 : i32
    return %c0_i32, %arg1 : i32, i32
  }
  func.func @transform_3(%arg0: i32, %arg1: i32, %arg2: i32) -> (i32, i32) {
    %c0_i32 = arith.constant 0 : i32
    return %arg0, %arg1 : i32, i32
  }
}

module attributes {stable_mosaic.version = 11 : i64} {
  func.func @matmul_bias_kernel(%arg0: i32, %arg1: i32, %arg2: i32, %arg3: memref<32x384xbf16, #tpu.memory_space<vmem>>, %arg4: memref<384x128xbf16, #tpu.memory_space<vmem>>, %arg5: memref<1x128xf32, #tpu.memory_space<vmem>>, %arg6: memref<32x128xf32, #tpu.memory_space<vmem>>, %arg7: memref<32x128xf32, #tpu.memory_space<vmem>>) attributes {dimension_semantics = [#tpu.dimension_semantics<parallel>, #tpu.dimension_semantics<parallel>, #tpu.dimension_semantics<arbitrary>], iteration_bounds = array<i64: 1, 1, 1>, scalar_prefetch = 0 : i64, scratch_operands = 1 : i64, tpu.core_type = #tpu.core_type<tc>, window_params = [{transform_indices = @transform_0, window_bounds = array<i64: 32, 384>}, {transform_indices = @transform_1, window_bounds = array<i64: 384, 128>}, {transform_indices = @transform_2, window_bounds = array<i64: 1, 128>}, {transform_indices = @transform_3, window_bounds = array<i64: 32, 128>}]} {
    %c0_i32 = arith.constant 0 : i32
    %0 = arith.cmpi eq, %arg2, %c0_i32 : i32
    %1 = arith.extui %0 : i1 to i32
    %c0_i32_0 = arith.constant 0 : i32
    %2 = arith.cmpi ne, %1, %c0_i32_0 : i32
    scf.if %2 {
      %cst_10 = arith.constant 0.000000e+00 : f32
      %12 = vector.broadcast %cst_10 : f32 to vector<32x128xf32>
      %c0_11 = arith.constant 0 : index
      %c0_12 = arith.constant 0 : index
      %13 = vector.load %arg7[%c0_11, %c0_12] : memref<32x128xf32, #tpu.memory_space<vmem>>, vector<32x128xf32>
      tpu.vector_store %arg7[%c0_11, %c0_12], %12 {strides = array<i32>} : memref<32x128xf32, #tpu.memory_space<vmem>>, vector<32x128xf32>,
    } else {
    }
    %c0 = arith.constant 0 : index
    %c0_1 = arith.constant 0 : index
    %3 = vector.load %arg7[%c0, %c0_1] : memref<32x128xf32, #tpu.memory_space<vmem>>, vector<32x128xf32>
    %c0_2 = arith.constant 0 : index
    %c0_3 = arith.constant 0 : index
    %4 = vector.load %arg3[%c0_2, %c0_3] : memref<32x384xbf16, #tpu.memory_space<vmem>>, vector<32x384xbf16>
    %c0_4 = arith.constant 0 : index
    %c0_5 = arith.constant 0 : index
    %5 = vector.load %arg4[%c0_4, %c0_5] : memref<384x128xbf16, #tpu.memory_space<vmem>>, vector<384x128xbf16>
    %cst = arith.constant dense<0.000000e+00> : vector<32x128xf32>
    %6 = tpu.matmul %4, %5, %cst {dimension_numbers = #tpu.dot_dimension_numbers<[1], [0], [0], [1], [0, 0, 1, 1], [], []>} : vector<32x384xbf16>, vector<384x128xbf16>, vector<32x128xf32> -> vector<32x128xf32>
    %7 = arith.addf %3, %6 : vector<32x128xf32>
    %c0_6 = arith.constant 0 : index
    %c0_7 = arith.constant 0 : index
    %8 = vector.load %arg7[%c0_6, %c0_7] : memref<32x128xf32, #tpu.memory_space<vmem>>, vector<32x128xf32>
    tpu.vector_store %arg7[%c0_6, %c0_7], %7 {strides = array<i32>} : memref<32x128xf32, #tpu.memory_space<vmem>>, vector<32x128xf32>,
    %c0_i32_8 = arith.constant 0 : i32
    %9 = arith.cmpi eq, %arg2, %c0_i32_8 : i32
    %10 = arith.extui %9 : i1 to i32
    %c0_i32_9 = arith.constant 0 : i32
    %11 = arith.cmpi ne, %10, %c0_i32_9 : i32
    scf.if %11 {
      %c0_10 = arith.constant 0 : index
      %c0_11 = arith.constant 0 : index
      %12 = vector.load %arg7[%c0_10, %c0_11] : memref<32x128xf32, #tpu.memory_space<vmem>>, vector<32x128xf32>
      %c0_12 = arith.constant 0 : index
      %c0_13 = arith.constant 0 : index
      %13 = vector.load %arg5[%c0_12, %c0_13] : memref<1x128xf32, #tpu.memory_space<vmem>>, vector<1x128xf32>
      %14 = vector.broadcast %13 : vector<1x128xf32> to vector<32x128xf32>
      %15 = arith.addf %12, %14 : vector<32x128xf32>
      %c0_14 = arith.constant 0 : index
      %c0_15 = arith.constant 0 : index
      %16 = vector.load %arg6[%c0_14, %c0_15] : memref<32x128xf32, #tpu.memory_space<vmem>>, vector<32x128xf32>
      tpu.vector_store %arg6[%c0_14, %c0_15], %15 {strides = array<i32>} : memref<32x128xf32, #tpu.memory_space<vmem>>, vector<32x128xf32>,
    } else {
    }
    return
  }
  func.func @transform_0(%arg0: i32, %arg1: i32, %arg2: i32) -> (i32, i32) {
    %c0_i32 = arith.constant 0 : i32
    return %arg0, %arg2 : i32, i32
  }
  func.func @transform_1(%arg0: i32, %arg1: i32, %arg2: i32) -> (i32, i32) {
    %c0_i32 = arith.constant 0 : i32
    return %arg2, %arg1 : i32, i32
  }
  func.func @transform_2(%arg0: i32, %arg1: i32, %arg2: i32) -> (i32, i32) {
    %c0_i32 = arith.constant 0 : i32
    %c0_i32_0 = arith.constant 0 : i32
    return %c0_i32, %arg1 : i32, i32
  }
  func.func @transform_3(%arg0: i32, %arg1: i32, %arg2: i32) -> (i32, i32) {
    %c0_i32 = arith.constant 0 : i32
    return %arg0, %arg1 : i32, i32
  }
}

module attributes {stable_mosaic.version = 11 : i64} {
  func.func @matmul_bias_kernel(%arg0: i32, %arg1: i32, %arg2: i32, %arg3: memref<16x384xbf16, #tpu.memory_space<vmem>>, %arg4: memref<384x256xbf16, #tpu.memory_space<vmem>>, %arg5: memref<1x256xf32, #tpu.memory_space<vmem>>, %arg6: memref<16x256xf32, #tpu.memory_space<vmem>>, %arg7: memref<16x256xf32, #tpu.memory_space<vmem>>) attributes {dimension_semantics = [#tpu.dimension_semantics<parallel>, #tpu.dimension_semantics<parallel>, #tpu.dimension_semantics<arbitrary>], iteration_bounds = array<i64: 1, 1, 1>, scalar_prefetch = 0 : i64, scratch_operands = 1 : i64, tpu.core_type = #tpu.core_type<tc>, window_params = [{transform_indices = @transform_0, window_bounds = array<i64: 16, 384>}, {transform_indices = @transform_1, window_bounds = array<i64: 384, 256>}, {transform_indices = @transform_2, window_bounds = array<i64: 1, 256>}, {transform_indices = @transform_3, window_bounds = array<i64: 16, 256>}]} {
    %c0_i32 = arith.constant 0 : i32
    %0 = arith.cmpi eq, %arg2, %c0_i32 : i32
    %1 = arith.extui %0 : i1 to i32
    %c0_i32_0 = arith.constant 0 : i32
    %2 = arith.cmpi ne, %1, %c0_i32_0 : i32
    scf.if %2 {
      %cst_10 = arith.constant 0.000000e+00 : f32
      %12 = vector.broadcast %cst_10 : f32 to vector<16x256xf32>
      %c0_11 = arith.constant 0 : index
      %c0_12 = arith.constant 0 : index
      %13 = vector.load %arg7[%c0_11, %c0_12] : memref<16x256xf32, #tpu.memory_space<vmem>>, vector<16x256xf32>
      tpu.vector_store %arg7[%c0_11, %c0_12], %12 {strides = array<i32>} : memref<16x256xf32, #tpu.memory_space<vmem>>, vector<16x256xf32>,
    } else {
    }
    %c0 = arith.constant 0 : index
    %c0_1 = arith.constant 0 : index
    %3 = vector.load %arg7[%c0, %c0_1] : memref<16x256xf32, #tpu.memory_space<vmem>>, vector<16x256xf32>
    %c0_2 = arith.constant 0 : index
    %c0_3 = arith.constant 0 : index
    %4 = vector.load %arg3[%c0_2, %c0_3] : memref<16x384xbf16, #tpu.memory_space<vmem>>, vector<16x384xbf16>
    %c0_4 = arith.constant 0 : index
    %c0_5 = arith.constant 0 : index
    %5 = vector.load %arg4[%c0_4, %c0_5] : memref<384x256xbf16, #tpu.memory_space<vmem>>, vector<384x256xbf16>
    %cst = arith.constant dense<0.000000e+00> : vector<16x256xf32>
    %6 = tpu.matmul %4, %5, %cst {dimension_numbers = #tpu.dot_dimension_numbers<[1], [0], [0], [1], [0, 0, 1, 1], [], []>} : vector<16x384xbf16>, vector<384x256xbf16>, vector<16x256xf32> -> vector<16x256xf32>
    %7 = arith.addf %3, %6 : vector<16x256xf32>
    %c0_6 = arith.constant 0 : index
    %c0_7 = arith.constant 0 : index
    %8 = vector.load %arg7[%c0_6, %c0_7] : memref<16x256xf32, #tpu.memory_space<vmem>>, vector<16x256xf32>
    tpu.vector_store %arg7[%c0_6, %c0_7], %7 {strides = array<i32>} : memref<16x256xf32, #tpu.memory_space<vmem>>, vector<16x256xf32>,
    %c0_i32_8 = arith.constant 0 : i32
    %9 = arith.cmpi eq, %arg2, %c0_i32_8 : i32
    %10 = arith.extui %9 : i1 to i32
    %c0_i32_9 = arith.constant 0 : i32
    %11 = arith.cmpi ne, %10, %c0_i32_9 : i32
    scf.if %11 {
      %c0_10 = arith.constant 0 : index
      %c0_11 = arith.constant 0 : index
      %12 = vector.load %arg7[%c0_10, %c0_11] : memref<16x256xf32, #tpu.memory_space<vmem>>, vector<16x256xf32>
      %c0_12 = arith.constant 0 : index
      %c0_13 = arith.constant 0 : index
      %13 = vector.load %arg5[%c0_12, %c0_13] : memref<1x256xf32, #tpu.memory_space<vmem>>, vector<1x256xf32>
      %14 = vector.broadcast %13 : vector<1x256xf32> to vector<16x256xf32>
      %15 = arith.addf %12, %14 : vector<16x256xf32>
      %cst_14 = arith.constant 0.000000e+00 : f32
      %16 = vector.broadcast %cst_14 : f32 to vector<16x256xf32>
      %17 = arith.maximumf %15, %16 : vector<16x256xf32>
      %c0_15 = arith.constant 0 : index
      %c0_16 = arith.constant 0 : index
      %18 = vector.load %arg6[%c0_15, %c0_16] : memref<16x256xf32, #tpu.memory_space<vmem>>, vector<16x256xf32>
      tpu.vector_store %arg6[%c0_15, %c0_16], %17 {strides = array<i32>} : memref<16x256xf32, #tpu.memory_space<vmem>>, vector<16x256xf32>,
    } else {
    }
    return
  }
  func.func @transform_0(%arg0: i32, %arg1: i32, %arg2: i32) -> (i32, i32) {
    %c0_i32 = arith.constant 0 : i32
    return %arg0, %arg2 : i32, i32
  }
  func.func @transform_1(%arg0: i32, %arg1: i32, %arg2: i32) -> (i32, i32) {
    %c0_i32 = arith.constant 0 : i32
    return %arg2, %arg1 : i32, i32
  }
  func.func @transform_2(%arg0: i32, %arg1: i32, %arg2: i32) -> (i32, i32) {
    %c0_i32 = arith.constant 0 : i32
    %c0_i32_0 = arith.constant 0 : i32
    return %c0_i32, %arg1 : i32, i32
  }
  func.func @transform_3(%arg0: i32, %arg1: i32, %arg2: i32) -> (i32, i32) {
    %c0_i32 = arith.constant 0 : i32
    return %arg0, %arg1 : i32, i32
  }
}

</mosaic_0001>

<llo_original>
// kernel: phasenet_forward.6
$region0: #{phasenet_forward.6}
  #allocation0 [shape = 'u32[]', space=smem, size = 0x4, offset = 0x4, fixed_abs, tag = 'smem constant byte address 0x4 - core index']
  #allocation1 [shape = 'u32[72,128]{1,0:T(1,128)}', space=vmem, size = 0x9000, scoped, tag = 'internal scratch']
  #allocation2 [shape = 'f32[256,128]{1,0:T(8,128)}', space=vmem, size = 0x20000, scoped, tag = 'scratch operand']
  %s0 = inlined_call_operand.vmem [shape: bf16[512,384], index: 0, kind: input, shape index: {}]
  %s1 = inlined_call_operand.vmem [shape: bf16[384,128], index: 1, kind: input, shape index: {}]
  %s2 = inlined_call_operand.vmem [shape: f32[1,128], index: 2, kind: input, shape index: {}]
  %s3 = inlined_call_operand.vmem [shape: f32[512,128], index: 3, kind: output, shape index: {}]
  %s4 = sld [smem:[#allocation0]]
  $region53: #{phasenet_forward.6} parent=0
    _
  %s6 = ssub.s32 1, %s4
  %s7 = scalar_select 0, %s6, %s4
  loop: start=0, step=1, limit=4
  $region2: #{phasenet_forward.6} parent=0 // loop_pre_header
    _
  $region3: #{phasenet_forward.6} parent=0 // loop_header
    %s9 = sphi 0, %s13
    %p10 = scmp.ge.s32.totalorder %s9, 4
    %s16 = sphi 0, %s35
    %s17 = sphi 0, %s31
    %s18 = sphi 0, %s27
    %s19 = sphi 0, %s16
    %s20 = sphi 0, %s17
    %s21 = sphi 0, %s18
    %s22 = sphi 0, %s19
    %s23 = sphi 0, %s20
    %s24 = sphi 0, %s21
    %s40 = sphi 0, %s42
    %s43 = sphi 0, %s40
    %s44 = sphi 0, %s43
    %s60 = sphi 0, %s44
    %s68 = sphi 0, %s70
    %s71 = sphi 0, %s68
    %s72 = sphi 0, %s71
    %s88 = sphi 0, %s72
    %s94 = sphi 0, %s96
    %s97 = sphi 0, %s94
    %s98 = sphi 0, %s97
    %s114 = sphi 0, %s98
    %s122 = sphi 0, %s124
    %s125 = sphi 0, %s122
    %s126 = sphi 0, %s125
    %s142 = sphi 0, %s126
  $region4: #{phasenet_forward.6} parent=0 // loop_header_branch
    %12 = sbr.rel (%p10) target = $region8
  $region5: #{phasenet_forward.6} parent=0 // loop_body
    %s14 = ssub.s32 %s9, 1
    %s15 = ssub.s32 %s9, 2
    %s25 = sadd.s32 1, %s18
    %p26 = scmp.ge.s32.totalorder %s25, 1
    %s27 = scalar_select %p26, 0, %s25
    %s28 = sadd.s32 1, %s17
    %s29 = scalar_select %p26, %s28, %s17
    %p30 = scmp.ge.s32.totalorder %s29, 1
    %s31 = scalar_select %p30, 0, %s29
    %s32 = sadd.s32 1, %s16
    %s33 = scalar_select %p30, %s32, %s16
    %p34 = scmp.ge.s32.totalorder %s33, 2
    %s35 = scalar_select %p34, 0, %s33
    %s36 = ssub.s32 %s16, %s35
    %s37 = ssub.s32 %s18, %s27
    %s38 = sor.u32 %s36, %s37
    %p39 = scmp.eq.s32.totalorder %s38, 0
    %s41 = sadd.s32 %s40, 1
    %s42 = scalar_select %p39, %s40, %s41
    %p45 = pneg %p39
    %p46 = scmp.eq.s32.totalorder %s9, 1
    %p47 = por %p45, %p46
    %p48 = scmp.ne.s32.totalorder %s40, %s43
    %p49 = scmp.eq.s32.totalorder %s9, 0
    %p50 = por %p48, %p49
    %p51 = scmp.ne.s32.totalorder %s40, %s43
    %p52 = scmp.eq.s32.totalorder %s14, 1
    %p53 = por %p51, %p52
    %p54 = scmp.ne.s32.totalorder %s43, %s44
    %p55 = scmp.eq.s32.totalorder %s14, 0
    %p56 = por %p54, %p55
    %p57 = scmp.ne.s32.totalorder %s43, %s44
    %p58 = scmp.eq.s32.totalorder %s15, 1
    %p59 = por %p57, %p58
    %p61 = scmp.ne.s32.totalorder %s44, %s60
    %p62 = scmp.eq.s32.totalorder %s15, 0
    %p63 = por %p61, %p62
    %s64 = ssub.s32 %s18, %s27
    %s65 = ssub.s32 %s17, %s31
    %s66 = sor.u32 %s64, %s65
    %p67 = scmp.eq.s32.totalorder %s66, 0
    %s69 = sadd.s32 %s68, 1
    %s70 = scalar_select %p67, %s68, %s69
    %p73 = pneg %p67
    %p74 = scmp.eq.s32.totalorder %s9, 1
    %p75 = por %p73, %p74
    %p76 = scmp.ne.s32.totalorder %s68, %s71
    %p77 = scmp.eq.s32.totalorder %s9, 0
    %p78 = por %p76, %p77
    %p79 = scmp.ne.s32.totalorder %s68, %s71
    %p80 = scmp.eq.s32.totalorder %s14, 1
    %p81 = por %p79, %p80
    %p82 = scmp.ne.s32.totalorder %s71, %s72
    %p83 = scmp.eq.s32.totalorder %s14, 0
    %p84 = por %p82, %p83
    %p85 = scmp.ne.s32.totalorder %s71, %s72
    %p86 = scmp.eq.s32.totalorder %s15, 1
    %p87 = por %p85, %p86
    %p89 = scmp.ne.s32.totalorder %s72, %s88
    %p90 = scmp.eq.s32.totalorder %s15, 0
    %p91 = por %p89, %p90
    %s92 = ssub.s32 %s17, %s31
    %p93 = scmp.eq.s32.totalorder %s92, 0
    %s95 = sadd.s32 %s94, 1
    %s96 = scalar_select %p93, %s94, %s95
    %p99 = pneg %p93
    %p100 = scmp.eq.s32.totalorder %s9, 1
    %p101 = por %p99, %p100
    %p102 = scmp.ne.s32.totalorder %s94, %s97
    %p103 = scmp.eq.s32.totalorder %s9, 0
    %p104 = por %p102, %p103
    %p105 = scmp.ne.s32.totalorder %s94, %s97
    %p106 = scmp.eq.s32.totalorder %s14, 1
    %p107 = por %p105, %p106
    %p108 = scmp.ne.s32.totalorder %s97, %s98
    %p109 = scmp.eq.s32.totalorder %s14, 0
    %p110 = por %p108, %p109
    %p111 = scmp.ne.s32.totalorder %s97, %s98
    %p112 = scmp.eq.s32.totalorder %s15, 1
    %p113 = por %p111, %p112
    %p115 = scmp.ne.s32.totalorder %s98, %s114
    %p116 = scmp.eq.s32.totalorder %s15, 0
    %p117 = por %p115, %p116
    %s118 = ssub.s32 %s16, %s35
    %s119 = ssub.s32 %s17, %s31
    %s120 = sor.u32 %s118, %s119
    %p121 = scmp.eq.s32.totalorder %s120, 0
    %s123 = sadd.s32 %s122, 1
    %s124 = scalar_select %p121, %s122, %s123
    %p127 = pneg %p121
    %p128 = scmp.eq.s32.totalorder %s9, 1
    %p129 = por %p127, %p128
    %p130 = scmp.ne.s32.totalorder %s122, %s125
    %p131 = scmp.eq.s32.totalorder %s9, 0
    %p132 = por %p130, %p131
    %p133 = scmp.ne.s32.totalorder %s122, %s125
    %p134 = scmp.eq.s32.totalorder %s14, 1
    %p135 = por %p133, %p134
    %p136 = scmp.ne.s32.totalorder %s125, %s126
    %p137 = scmp.eq.s32.totalorder %s14, 0
    %p138 = por %p136, %p137
    %p139 = scmp.ne.s32.totalorder %s125, %s126
    %p140 = scmp.eq.s32.totalorder %s15, 1
    %p141 = por %p139, %p140
    %p143 = scmp.ne.s32.totalorder %s126, %s142
    %p144 = scmp.eq.s32.totalorder %s15, 0
    %p145 = por %p143, %p144
    %p146 = scmp.le.s32.totalorder 1, %s9
    %p147 = scmp.lt.s32.totalorder %s9, 3
    %p148 = pnand %p146, %p147
    %p149 = pneg %p148
    // Predicated region
    $region9: #{phasenet_forward.6} parent=5 // pred_check
      _
    $region10: #{phasenet_forward.6} parent=5 // pred_check_branch
      %151 = sbr.rel (%p148) target = $region12
    $region11: #{phasenet_forward.6} parent=5 // pred_region
      %s152 = ssub.s32 %s9, 1
      // Predicated region
      $region13: #{phasenet_forward.6} parent=11 // pred_check
        %p153 = pneg %p84
      $region14: #{phasenet_forward.6} parent=11 // pred_check_branch
        %155 = sbr.rel (%p153) target = $region16
      $region15: #{phasenet_forward.6} parent=11 // pred_region
        %s156 = smul.u32 48, %s21
        %p157 = scmp.lt.s32.totalorder %s156, 47
        %s158 = scalar_select %p157, %s156, 47
        %p159 = scmp.lt.s32.totalorder %s20, 0
        %s160 = scalar_select %p159, %s20, 0
        %s161 = sadd.s32 %s160, %s158
        %s162 = smul.addr %s161, 4
        %s163 = scalar_lea.vmem %s1, %s162
        %s164 = smul.u32 48, %s21
      $region16: #{phasenet_forward.6} parent=11 // pred_fallthru
        _
      // Predicated region
      $region17: #{phasenet_forward.6} parent=11 // pred_check
        %p165 = pneg %p110
      $region18: #{phasenet_forward.6} parent=11 // pred_check_branch
        %167 = sbr.rel (%p165) target = $region20
      $region19: #{phasenet_forward.6} parent=11 // pred_region
        %p168 = scmp.lt.s32.totalorder %s20, 0
        %s169 = scalar_select %p168, %s20, 0
        %s170 = scalar_lea.vmem %s2, %s169
      $region20: #{phasenet_forward.6} parent=11 // pred_fallthru
        _
    $region12: #{phasenet_forward.6} parent=5 // pred_fallthru
      _
    %p171 = scmp.lt.s32.totalorder %s9, 2
    // Predicated region
    $region21: #{phasenet_forward.6} parent=5 // pred_check
      %p172 = pneg %p171
    $region22: #{phasenet_forward.6} parent=5 // pred_check_branch
      %174 = sbr.rel (%p172) target = $region24
    $region23: #{phasenet_forward.6} parent=5 // pred_region
      // Predicated region
      $region25: #{phasenet_forward.6} parent=23 // pred_check
        %p175 = pneg %p50
      $region26: #{phasenet_forward.6} parent=23 // pred_check_branch
        %177 = sbr.rel (%p175) target = $region28
      $region27: #{phasenet_forward.6} parent=23 // pred_region
        %s178 = smul.u32 32, %s16
        %s179 = smul.u32 3, %s18
        %p180 = scmp.lt.s32.totalorder %s178, 63
        %s181 = scalar_select %p180, %s178, 63
        %p182 = scmp.lt.s32.totalorder %s179, 2
        %s183 = scalar_select %p182, %s179, 2
        %s184 = smul.addr %s181, 3
        %s185 = sadd.s32 %s183, %s184
        %s186 = smul.addr %s185, 4
        %s187 = scalar_lea.vmem %s0, %s186
        %s188 = smul.u32 32, %s16
        %s189 = smul.u32 3, %s18
      $region28: #{phasenet_forward.6} parent=23 // pred_fallthru
        _
    $region24: #{phasenet_forward.6} parent=5 // pred_fallthru
      _
    %p190 = scmp.le.s32.totalorder 1, %s9
    %p191 = scmp.lt.s32.totalorder %s9, 3
    %p192 = pnand %p190, %p191
    %p193 = pneg %p192
    // Predicated region
    $region29: #{phasenet_forward.6} parent=5 // pred_check
      _
    $region30: #{phasenet_forward.6} parent=5 // pred_check_branch
      %195 = sbr.rel (%p192) target = $region32
    $region31: #{phasenet_forward.6} parent=5 // pred_region
      %s196 = ssub.s32 %s9, 1
      %s197 = smul.u32 32, %s19
      %s198 = smul.u32 3, %s21
      %p199 = scmp.lt.s32.totalorder %s197, 63
      %s200 = scalar_select %p199, %s197, 63
      %p201 = scmp.lt.s32.totalorder %s198, 2
      %s202 = scalar_select %p201, %s198, 2
      %s203 = smul.addr %s200, 3
      %s204 = sadd.s32 %s202, %s203
      %s205 = smul.addr %s204, 4
      %s206 = scalar_lea.vmem %s0, %s205
      %p207 = pneg %p56
      %p208 = pneg %p53
      %s209 = smul.u32 48, %s21
      %p210 = scmp.lt.s32.totalorder %s209, 47
      %s211 = scalar_select %p210, %s209, 47
      %p212 = scmp.lt.s32.totalorder %s20, 0
      %s213 = scalar_select %p212, %s20, 0
      %s214 = sadd.s32 %s213, %s211
      %s215 = smul.addr %s214, 4
      %s216 = scalar_lea.vmem %s1, %s215
      %p217 = pneg %p84
      %p218 = pneg %p81
      %p219 = scmp.lt.s32.totalorder %s20, 0
      %s220 = scalar_select %p219, %s20, 0
      %s221 = scalar_lea.vmem %s2, %s220
      %p222 = pneg %p110
      %p223 = pneg %p107
      %p224 = pneg %p138
      %p225 = pneg %p135
      %s226 = smul.u32 32, %s19
      %p227 = scmp.lt.s32.totalorder %s226, 63
      %s228 = scalar_select %p227, %s226, 63
      %p229 = scmp.lt.s32.totalorder %s20, 0
      %s230 = scalar_select %p229, %s20, 0
      %s231 = sadd.s32 %s230, %s228
      %s232 = smul.addr %s231, 8
      %s233 = scalar_lea.vmem %s3, %s232
      %s234 = smul.u32 32, %s19
      %s235 = smul.u32 3, %s21
      %p236 = scmp.lt.s32.totalorder %s234, 63
      %s237 = scalar_select %p236, %s234, 63
      %p238 = scmp.lt.s32.totalorder %s235, 2
      %s239 = scalar_select %p238, %s235, 2
      %s240 = smul.addr %s237, 3
      %s241 = sadd.s32 %s239, %s240
      %s242 = smul.addr %s241, 4
      %s243 = scalar_lea.vmem %s0, %s242
      %s244 = smul.u32 32, %s19
      %s245 = smul.u32 3, %s21
      %s246 = smul.u32 48, %s21
      %p247 = scmp.lt.s32.totalorder %s246, 47
      %s248 = scalar_select %p247, %s246, 47
      %p249 = scmp.lt.s32.totalorder %s20, 0
      %s250 = scalar_select %p249, %s20, 0
      %s251 = sadd.s32 %s250, %s248
      %s252 = smul.addr %s251, 4
      %s253 = scalar_lea.vmem %s1, %s252
      %s254 = smul.u32 48, %s21
      %p255 = scmp.lt.s32.totalorder %s20, 0
      %s256 = scalar_select %p255, %s20, 0
      %s257 = scalar_lea.vmem %s2, %s256
      %s258 = smul.u32 32, %s19
      %p259 = scmp.lt.s32.totalorder %s258, 63
      %s260 = scalar_select %p259, %s258, 63
      %p261 = scmp.lt.s32.totalorder %s20, 0
      %s262 = scalar_select %p261, %s20, 0
      %s263 = sadd.s32 %s262, %s260
      %s264 = smul.addr %s263, 8
      %s265 = scalar_lea.vmem %s3, %s264
      %s266 = smul.u32 32, %s19
      %p267 = scmp.eq.s32.totalorder %s21, 0
      // Predicated region
      $region33: #{phasenet_forward.6} parent=31 // pred_check
        %p268 = pneg %p267
      $region34: #{phasenet_forward.6} parent=31 // pred_check_branch
        %270 = sbr.rel (%p268) target = $region36
      $region35: #{phasenet_forward.6} parent=31 // pred_region
        %271 = vst [vmem:[#allocation2] sm:$0xff] 0.0
        %272 = vst [vmem:[#allocation2 + $0x8] sm:$0xff] 0.0
        %273 = vst [vmem:[#allocation2 + $0x10] sm:$0xff] 0.0
        %274 = vst [vmem:[#allocation2 + $0x18] sm:$0xff] 0.0
        %275 = vst [vmem:[#allocation2 + $0x20] sm:$0xff] 0.0
        %276 = vst [vmem:[#allocation2 + $0x28] sm:$0xff] 0.0
        %277 = vst [vmem:[#allocation2 + $0x30] sm:$0xff] 0.0
        %278 = vst [vmem:[#allocation2 + $0x38] sm:$0xff] 0.0
        %279 = vst [vmem:[#allocation2 + $0x40] sm:$0xff] 0.0
        %280 = vst [vmem:[#allocation2 + $0x48] sm:$0xff] 0.0
        %281 = vst [vmem:[#allocation2 + $0x50] sm:$0xff] 0.0
        %282 = vst [vmem:[#allocation2 + $0x58] sm:$0xff] 0.0
        %283 = vst [vmem:[#allocation2 + $0x60] sm:$0xff] 0.0
        %284 = vst [vmem:[#allocation2 + $0x68] sm:$0xff] 0.0
        %285 = vst [vmem:[#allocation2 + $0x70] sm:$0xff] 0.0
        %286 = vst [vmem:[#allocation2 + $0x78] sm:$0xff] 0.0
        %287 = vst [vmem:[#allocation2 + $0x80] sm:$0xff] 0.0
        %288 = vst [vmem:[#allocation2 + $0x88] sm:$0xff] 0.0
        %289 = vst [vmem:[#allocation2 + $0x90] sm:$0xff] 0.0
        %290 = vst [vmem:[#allocation2 + $0x98] sm:$0xff] 0.0
        %291 = vst [vmem:[#allocation2 + $0xa0] sm:$0xff] 0.0
        %292 = vst [vmem:[#allocation2 + $0xa8] sm:$0xff] 0.0
        %293 = vst [vmem:[#allocation2 + $0xb0] sm:$0xff] 0.0
        %294 = vst [vmem:[#allocation2 + $0xb8] sm:$0xff] 0.0
        %295 = vst [vmem:[#allocation2 + $0xc0] sm:$0xff] 0.0
        %296 = vst [vmem:[#allocation2 + $0xc8] sm:$0xff] 0.0
        %297 = vst [vmem:[#allocation2 + $0xd0] sm:$0xff] 0.0
        %298 = vst [vmem:[#allocation2 + $0xd8] sm:$0xff] 0.0
        %299 = vst [vmem:[#allocation2 + $0xe0] sm:$0xff] 0.0
        %300 = vst [vmem:[#allocation2 + $0xe8] sm:$0xff] 0.0
        %301 = vst [vmem:[#allocation2 + $0xf0] sm:$0xff] 0.0
        %302 = vst [vmem:[#allocation2 + $0xf8] sm:$0xff] 0.0
      $region36: #{phasenet_forward.6} parent=31 // pred_fallthru
        _
      %v303 = vld [vmem:[#allocation2] sm:$0xff]
      %v304 = vld [vmem:[#allocation2 + $0x8] sm:$0xff]
      %v305 = vld [vmem:[#allocation2 + $0x10] sm:$0xff]
      %v306 = vld [vmem:[#allocation2 + $0x18] sm:$0xff]
      %v307 = vld [vmem:[#allocation2 + $0x20] sm:$0xff]
      %v308 = vld [vmem:[#allocation2 + $0x28] sm:$0xff]
      %v309 = vld [vmem:[#allocation2 + $0x30] sm:$0xff]
      %v310 = vld [vmem:[#allocation2 + $0x38] sm:$0xff]
      %v311 = vld [vmem:[#allocation2 + $0x40] sm:$0xff]
      %v312 = vld [vmem:[#allocation2 + $0x48] sm:$0xff]
      %v313 = vld [vmem:[#allocation2 + $0x50] sm:$0xff]
      %v314 = vld [vmem:[#allocation2 + $0x58] sm:$0xff]
      %v315 = vld [vmem:[#allocation2 + $0x60] sm:$0xff]
      %v316 = vld [vmem:[#allocation2 + $0x68] sm:$0xff]
      %v317 = vld [vmem:[#allocation2 + $0x70] sm:$0xff]
      %v318 = vld [vmem:[#allocation2 + $0x78] sm:$0xff]
      %v319 = vld [vmem:[#allocation2 + $0x80] sm:$0xff]
      %v320 = vld [vmem:[#allocation2 + $0x88] sm:$0xff]
      %v321 = vld [vmem:[#allocation2 + $0x90] sm:$0xff]
      %v322 = vld [vmem:[#allocation2 + $0x98] sm:$0xff]
      %v323 = vld [vmem:[#allocation2 + $0xa0] sm:$0xff]
      %v324 = vld [vmem:[#allocation2 + $0xa8] sm:$0xff]
      %v325 = vld [vmem:[#allocation2 + $0xb0] sm:$0xff]
      %v326 = vld [vmem:[#allocation2 + $0xb8] sm:$0xff]
      %v327 = vld [vmem:[#allocation2 + $0xc0] sm:$0xff]
      %v328 = vld [vmem:[#allocation2 + $0xc8] sm:$0xff]
      %v329 = vld [vmem:[#allocation2 + $0xd0] sm:$0xff]
      %v330 = vld [vmem:[#allocation2 + $0xd8] sm:$0xff]
      %v331 = vld [vmem:[#allocation2 + $0xe0] sm:$0xff]
      %v332 = vld [vmem:[#allocation2 + $0xe8] sm:$0xff]
      %v333 = vld [vmem:[#allocation2 + $0xf0] sm:$0xff]
      %v334 = vld [vmem:[#allocation2 + $0xf8] sm:$0xff]
      %v335 = vld [vmem:[%s243] sm:$0xff]
      %v336 = vld [vmem:[%s243 + $0x8] sm:$0xf]
      %v337 = vld [vmem:[%s243 + $0xc] sm:$0xff]
      %v338 = vld [vmem:[%s243 + $0x14] sm:$0xf]
      %v339 = vld [vmem:[%s243 + $0x18] sm:$0xff]
      %v340 = vld [vmem:[%s243 + $0x20] sm:$0xf]
      %v341 = vld [vmem:[%s243 + $0x24] sm:$0xff]
      %v342 = vld [vmem:[%s243 + $0x2c] sm:$0xf]
      %v343 = vld [vmem:[%s243 + $0x30] sm:$0xff]
      %v344 = vld [vmem:[%s243 + $0x38] sm:$0xf]
      %v345 = vld [vmem:[%s243 + $0x3c] sm:$0xff]
      %v346 = vld [vmem:[%s243 + $0x44] sm:$0xf]
      %v347 = vld [vmem:[%s243 + $0x48] sm:$0xff]
      %v348 = vld [vmem:[%s243 + $0x50] sm:$0xf]
      %v349 = vld [vmem:[%s243 + $0x54] sm:$0xff]
      %v350 = vld [vmem:[%s243 + $0x5c] sm:$0xf]
      %v351 = vld [vmem:[%s243 + $0x60] sm:$0xff]
      %v352 = vld [vmem:[%s243 + $0x68] sm:$0xf]
      %v353 = vld [vmem:[%s243 + $0x6c] sm:$0xff]
      %v354 = vld [vmem:[%s243 + $0x74] sm:$0xf]
      %v355 = vld [vmem:[%s243 + $0x78] sm:$0xff]
      %v356 = vld [vmem:[%s243 + $0x80] sm:$0xf]
      %v357 = vld [vmem:[%s243 + $0x84] sm:$0xff]
      %v358 = vld [vmem:[%s243 + $0x8c] sm:$0xf]
      %v359 = vld [vmem:[%s243 + $0x90] sm:$0xff]
      %v360 = vld [vmem:[%s243 + $0x98] sm:$0xf]
      %v361 = vld [vmem:[%s243 + $0x9c] sm:$0xff]
      %v362 = vld [vmem:[%s243 + $0xa4] sm:$0xf]
      %v363 = vld [vmem:[%s243 + $0xa8] sm:$0xff]
      %v364 = vld [vmem:[%s243 + $0xb0] sm:$0xf]
      %v365 = vld [vmem:[%s243 + $0xb4] sm:$0xff]
      %v366 = vld [vmem:[%s243 + $0xbc] sm:$0xf]
      %v367 = vld [vmem:[%s243 + $0xc0] sm:$0xff]
      %v368 = vld [vmem:[%s243 + $0xc8] sm:$0xf]
      %v369 = vld [vmem:[%s243 + $0xcc] sm:$0xff]
      %v370 = vld [vmem:[%s243 + $0xd4] sm:$0xf]
      %v371 = vld [vmem:[%s243 + $0xd8] sm:$0xff]
      %v372 = vld [vmem:[%s243 + $0xe0] sm:$0xf]
      %v373 = vld [vmem:[%s243 + $0xe4] sm:$0xff]
      %v374 = vld [vmem:[%s243 + $0xec] sm:$0xf]
      %v375 = vld [vmem:[%s243 + $0xf0] sm:$0xff]
      %v376 = vld [vmem:[%s243 + $0xf8] sm:$0xf]
      %v377 = vld [vmem:[%s243 + $0xfc] sm:$0xff]
      %v378 = vld [vmem:[%s243 + $0x104] sm:$0xf]
      %v379 = vld [vmem:[%s243 + $0x108] sm:$0xff]
      %v380 = vld [vmem:[%s243 + $0x110] sm:$0xf]
      %v381 = vld [vmem:[%s243 + $0x114] sm:$0xff]
      %v382 = vld [vmem:[%s243 + $0x11c] sm:$0xf]
      %v383 = vld [vmem:[%s243 + $0x120] sm:$0xff]
      %v384 = vld [vmem:[%s243 + $0x128] sm:$0xf]
      %v385 = vld [vmem:[%s243 + $0x12c] sm:$0xff]
      %v386 = vld [vmem:[%s243 + $0x134] sm:$0xf]
      %v387 = vld [vmem:[%s243 + $0x138] sm:$0xff]
      %v388 = vld [vmem:[%s243 + $0x140] sm:$0xf]
      %v389 = vld [vmem:[%s243 + $0x144] sm:$0xff]
      %v390 = vld [vmem:[%s243 + $0x14c] sm:$0xf]
      %v391 = vld [vmem:[%s243 + $0x150] sm:$0xff]
      %v392 = vld [vmem:[%s243 + $0x158] sm:$0xf]
      %v393 = vld [vmem:[%s243 + $0x15c] sm:$0xff]
      %v394 = vld [vmem:[%s243 + $0x164] sm:$0xf]
      %v395 = vld [vmem:[%s243 + $0x168] sm:$0xff]
      %v396 = vld [vmem:[%s243 + $0x170] sm:$0xf]
      %v397 = vld [vmem:[%s243 + $0x174] sm:$0xff]
      %v398 = vld [vmem:[%s243 + $0x17c] sm:$0xf]
      %v399 = vld [vmem:[%s253] sm:$0xf]
      %v400 = vld [vmem:[%s253 + $0x4] sm:$0xf]
      %v401 = vld [vmem:[%s253 + $0x8] sm:$0xf]
      %v402 = vld [vmem:[%s253 + $0xc] sm:$0xf]
      %v403 = vld [vmem:[%s253 + $0x10] sm:$0xf]
      %v404 = vld [vmem:[%s253 + $0x14] sm:$0xf]
      %v405 = vld [vmem:[%s253 + $0x18] sm:$0xf]
      %v406 = vld [vmem:[%s253 + $0x1c] sm:$0xf]
      %v407 = vld [vmem:[%s253 + $0x20] sm:$0xf]
      %v408 = vld [vmem:[%s253 + $0x24] sm:$0xf]
      %v409 = vld [vmem:[%s253 + $0x28] sm:$0xf]
      %v410 = vld [vmem:[%s253 + $0x2c] sm:$0xf]
      %v411 = vld [vmem:[%s253 + $0x30] sm:$0xf]
      %v412 = vld [vmem:[%s253 + $0x34] sm:$0xf]
      %v413 = vld [vmem:[%s253 + $0x38] sm:$0xf]
      %v414 = vld [vmem:[%s253 + $0x3c] sm:$0xf]
      %v415 = vld [vmem:[%s253 + $0x40] sm:$0xf]
      %v416 = vld [vmem:[%s253 + $0x44] sm:$0xf]
      %v417 = vld [vmem:[%s253 + $0x48] sm:$0xf]
      %v418 = vld [vmem:[%s253 + $0x4c] sm:$0xf]
      %v419 = vld [vmem:[%s253 + $0x50] sm:$0xf]
      %v420 = vld [vmem:[%s253 + $0x54] sm:$0xf]
      %v421 = vld [vmem:[%s253 + $0x58] sm:$0xf]
      %v422 = vld [vmem:[%s253 + $0x5c] sm:$0xf]
      %v423 = vld [vmem:[%s253 + $0x60] sm:$0xf]
      %v424 = vld [vmem:[%s253 + $0x64] sm:$0xf]
      %v425 = vld [vmem:[%s253 + $0x68] sm:$0xf]
      %v426 = vld [vmem:[%s253 + $0x6c] sm:$0xf]
      %v427 = vld [vmem:[%s253 + $0x70] sm:$0xf]
      %v428 = vld [vmem:[%s253 + $0x74] sm:$0xf]
      %v429 = vld [vmem:[%s253 + $0x78] sm:$0xf]
      %v430 = vld [vmem:[%s253 + $0x7c] sm:$0xf]
      %v431 = vld [vmem:[%s253 + $0x80] sm:$0xf]
      %v432 = vld [vmem:[%s253 + $0x84] sm:$0xf]
      %v433 = vld [vmem:[%s253 + $0x88] sm:$0xf]
      %v434 = vld [vmem:[%s253 + $0x8c] sm:$0xf]
      %v435 = vld [vmem:[%s253 + $0x90] sm:$0xf]
      %v436 = vld [vmem:[%s253 + $0x94] sm:$0xf]
      %v437 = vld [vmem:[%s253 + $0x98] sm:$0xf]
      %v438 = vld [vmem:[%s253 + $0x9c] sm:$0xf]
      %v439 = vld [vmem:[%s253 + $0xa0] sm:$0xf]
      %v440 = vld [vmem:[%s253 + $0xa4] sm:$0xf]
      %v441 = vld [vmem:[%s253 + $0xa8] sm:$0xf]
      %v442 = vld [vmem:[%s253 + $0xac] sm:$0xf]
      %v443 = vld [vmem:[%s253 + $0xb0] sm:$0xf]
      %v444 = vld [vmem:[%s253 + $0xb4] sm:$0xf]
      %v445 = vld [vmem:[%s253 + $0xb8] sm:$0xf]
      %v446 = vld [vmem:[%s253 + $0xbc] sm:$0xf]
      %v511 = vunpack.c.l.b16 %v335
      %v512 = vunpack.c.h.b16 %v335
      %v513 = vunpack.c.l.b16 %v336
      %v514 = vunpack.c.l.b16 %v337
      %v515 = vunpack.c.h.b16 %v337
      %v516 = vunpack.c.l.b16 %v338
      %v517 = vunpack.c.l.b16 %v339
      %v518 = vunpack.c.h.b16 %v339
      %v519 = vunpack.c.l.b16 %v340
      %v520 = vunpack.c.l.b16 %v341
      %v521 = vunpack.c.h.b16 %v341
      %v522 = vunpack.c.l.b16 %v342
      %v523 = vunpack.c.l.b16 %v343
      %v524 = vunpack.c.h.b16 %v343
      %v525 = vunpack.c.l.b16 %v344
      %v526 = vunpack.c.l.b16 %v345
      %v527 = vunpack.c.h.b16 %v345
      %v528 = vunpack.c.l.b16 %v346
      %v529 = vunpack.c.l.b16 %v347
      %v530 = vunpack.c.h.b16 %v347
      %v531 = vunpack.c.l.b16 %v348
      %v532 = vunpack.c.l.b16 %v349
      %v533 = vunpack.c.h.b16 %v349
      %v534 = vunpack.c.l.b16 %v350
      %v535 = vunpack.c.l.b16 %v351
      %v536 = vunpack.c.h.b16 %v351
      %v537 = vunpack.c.l.b16 %v352
      %v538 = vunpack.c.l.b16 %v353
      %v539 = vunpack.c.h.b16 %v353
      %v540 = vunpack.c.l.b16 %v354
      %v541 = vunpack.c.l.b16 %v355
      %v542 = vunpack.c.h.b16 %v355
      %v543 = vunpack.c.l.b16 %v356
      %v544 = vunpack.c.l.b16 %v357
      %v545 = vunpack.c.h.b16 %v357
      %v546 = vunpack.c.l.b16 %v358
      %v547 = vunpack.c.l.b16 %v359
      %v548 = vunpack.c.h.b16 %v359
      %v549 = vunpack.c.l.b16 %v360
      %v550 = vunpack.c.l.b16 %v361
      %v551 = vunpack.c.h.b16 %v361
      %v552 = vunpack.c.l.b16 %v362
      %v553 = vunpack.c.l.b16 %v363
      %v554 = vunpack.c.h.b16 %v363
      %v555 = vunpack.c.l.b16 %v364
      %v556 = vunpack.c.l.b16 %v365
      %v557 = vunpack.c.h.b16 %v365
      %v558 = vunpack.c.l.b16 %v366
      %v559 = vunpack.c.l.b16 %v367
      %v560 = vunpack.c.h.b16 %v367
      %v561 = vunpack.c.l.b16 %v368
      %v562 = vunpack.c.l.b16 %v369
      %v563 = vunpack.c.h.b16 %v369
      %v564 = vunpack.c.l.b16 %v370
      %v565 = vunpack.c.l.b16 %v371
      %v566 = vunpack.c.h.b16 %v371
      %v567 = vunpack.c.l.b16 %v372
      %v568 = vunpack.c.l.b16 %v373
      %v569 = vunpack.c.h.b16 %v373
      %v570 = vunpack.c.l.b16 %v374
      %v571 = vunpack.c.l.b16 %v375
      %v572 = vunpack.c.h.b16 %v375
      %v573 = vunpack.c.l.b16 %v376
      %v574 = vunpack.c.l.b16 %v377
      %v575 = vunpack.c.h.b16 %v377
      %v576 = vunpack.c.l.b16 %v378
      %v577 = vunpack.c.l.b16 %v379
      %v578 = vunpack.c.h.b16 %v379
      %v579 = vunpack.c.l.b16 %v380
      %v580 = vunpack.c.l.b16 %v381
      %v581 = vunpack.c.h.b16 %v381
      %v582 = vunpack.c.l.b16 %v382
      %v583 = vunpack.c.l.b16 %v383
      %v584 = vunpack.c.h.b16 %v383
      %v585 = vunpack.c.l.b16 %v384
      %v586 = vunpack.c.l.b16 %v385
      %v587 = vunpack.c.h.b16 %v385
      %v588 = vunpack.c.l.b16 %v386
      %v589 = vunpack.c.l.b16 %v387
      %v590 = vunpack.c.h.b16 %v387
      %v591 = vunpack.c.l.b16 %v388
      %v592 = vunpack.c.l.b16 %v389
      %v593 = vunpack.c.h.b16 %v389
      %v594 = vunpack.c.l.b16 %v390
      %v595 = vunpack.c.l.b16 %v391
      %v596 = vunpack.c.h.b16 %v391
      %v597 = vunpack.c.l.b16 %v392
      %v598 = vunpack.c.l.b16 %v393
      %v599 = vunpack.c.h.b16 %v393
      %v600 = vunpack.c.l.b16 %v394
      %v601 = vunpack.c.l.b16 %v395
      %v602 = vunpack.c.h.b16 %v395
      %v603 = vunpack.c.l.b16 %v396
      %v604 = vunpack.c.l.b16 %v397
      %v605 = vunpack.c.h.b16 %v397
      %v606 = vunpack.c.l.b16 %v398
      %v607 = vpack.c.b16 %v514, %v511
      %v608 = vpack.c.b16 %v515, %v512
      %v609 = vpack.c.b16 %v516, %v513
      %v610 = vpack.c.b16 %v520, %v517
      %v611 = vpack.c.b16 %v521, %v518
      %v612 = vpack.c.b16 %v522, %v519
      %v613 = vpack.c.b16 %v526, %v523
      %v614 = vpack.c.b16 %v527, %v524
      %v615 = vpack.c.b16 %v528, %v525
      %v616 = vpack.c.b16 %v532, %v529
      %v617 = vpack.c.b16 %v533, %v530
      %v618 = vpack.c.b16 %v534, %v531
      %v619 = vpack.c.b16 %v538, %v535
      %v620 = vpack.c.b16 %v539, %v536
      %v621 = vpack.c.b16 %v540, %v537
      %v622 = vpack.c.b16 %v544, %v541
      %v623 = vpack.c.b16 %v545, %v542
      %v624 = vpack.c.b16 %v546, %v543
      %v625 = vpack.c.b16 %v550, %v547
      %v626 = vpack.c.b16 %v551, %v548
      %v627 = vpack.c.b16 %v552, %v549
      %v628 = vpack.c.b16 %v556, %v553
      %v629 = vpack.c.b16 %v557, %v554
      %v630 = vpack.c.b16 %v558, %v555
      %v631 = vpack.c.b16 %v562, %v559
      %v632 = vpack.c.b16 %v563, %v560
      %v633 = vpack.c.b16 %v564, %v561
      %v634 = vpack.c.b16 %v568, %v565
      %v635 = vpack.c.b16 %v569, %v566
      %v636 = vpack.c.b16 %v570, %v567
      %v637 = vpack.c.b16 %v574, %v571
      %v638 = vpack.c.b16 %v575, %v572
      %v639 = vpack.c.b16 %v576, %v573
      %v640 = vpack.c.b16 %v580, %v577
      %v641 = vpack.c.b16 %v581, %v578
      %v642 = vpack.c.b16 %v582, %v579
      %v643 = vpack.c.b16 %v586, %v583
      %v644 = vpack.c.b16 %v587, %v584
      %v645 = vpack.c.b16 %v588, %v585
      %v646 = vpack.c.b16 %v592, %v589
      %v647 = vpack.c.b16 %v593, %v590
      %v648 = vpack.c.b16 %v594, %v591
      %v649 = vpack.c.b16 %v598, %v595
      %v650 = vpack.c.b16 %v599, %v596
      %v651 = vpack.c.b16 %v600, %v597
      %v652 = vpack.c.b16 %v604, %v601
      %v653 = vpack.c.b16 %v605, %v602
      %v654 = vpack.c.b16 %v606, %v603
      %v751 = vunpack.c.l.b16 %v399
      %v752 = vunpack.c.l.b16 %v400
      %v753 = vunpack.c.l.b16 %v401
      %v754 = vunpack.c.l.b16 %v402
      %v755 = vunpack.c.l.b16 %v403
      %v756 = vunpack.c.l.b16 %v404
      %v757 = vunpack.c.l.b16 %v405
      %v758 = vunpack.c.l.b16 %v406
      %v759 = vunpack.c.l.b16 %v407
      %v760 = vunpack.c.l.b16 %v408
      %v761 = vunpack.c.l.b16 %v409
      %v762 = vunpack.c.l.b16 %v410
      %v763 = vunpack.c.l.b16 %v411
      %v764 = vunpack.c.l.b16 %v412
      %v765 = vunpack.c.l.b16 %v413
      %v766 = vunpack.c.l.b16 %v414
      %v767 = vunpack.c.l.b16 %v415
      %v768 = vunpack.c.l.b16 %v416
      %v769 = vunpack.c.l.b16 %v417
      %v770 = vunpack.c.l.b16 %v418
      %v771 = vunpack.c.l.b16 %v419
      %v772 = vunpack.c.l.b16 %v420
      %v773 = vunpack.c.l.b16 %v421
      %v774 = vunpack.c.l.b16 %v422
      %v775 = vunpack.c.l.b16 %v423
      %v776 = vunpack.c.l.b16 %v424
      %v777 = vunpack.c.l.b16 %v425
      %v778 = vunpack.c.l.b16 %v426
      %v779 = vunpack.c.l.b16 %v427
      %v780 = vunpack.c.l.b16 %v428
      %v781 = vunpack.c.l.b16 %v429
      %v782 = vunpack.c.l.b16 %v430
      %v783 = vunpack.c.l.b16 %v431
      %v784 = vunpack.c.l.b16 %v432
      %v785 = vunpack.c.l.b16 %v433
      %v786 = vunpack.c.l.b16 %v434
      %v787 = vunpack.c.l.b16 %v435
      %v788 = vunpack.c.l.b16 %v436
      %v789 = vunpack.c.l.b16 %v437
      %v790 = vunpack.c.l.b16 %v438
      %v791 = vunpack.c.l.b16 %v439
      %v792 = vunpack.c.l.b16 %v440
      %v793 = vunpack.c.l.b16 %v441
      %v794 = vunpack.c.l.b16 %v442
      %v795 = vunpack.c.l.b16 %v443
      %v796 = vunpack.c.l.b16 %v444
      %v797 = vunpack.c.l.b16 %v445
      %v798 = vunpack.c.l.b16 %v446
      %v799 = vpack.c.b16 %v752, %v751
      %v800 = vpack.c.b16 %v754, %v753
      %v801 = vpack.c.b16 %v756, %v755
      %v802 = vpack.c.b16 %v758, %v757
      %v803 = vpack.c.b16 %v760, %v759
      %v804 = vpack.c.b16 %v762, %v761
      %v805 = vpack.c.b16 %v764, %v763
      %v806 = vpack.c.b16 %v766, %v765
      %v807 = vpack.c.b16 %v768, %v767
      %v808 = vpack.c.b16 %v770, %v769
      %v809 = vpack.c.b16 %v772, %v771
      %v810 = vpack.c.b16 %v774, %v773
      %v811 = vpack.c.b16 %v776, %v775
      %v812 = vpack.c.b16 %v778, %v777
      %v813 = vpack.c.b16 %v780, %v779
      %v814 = vpack.c.b16 %v782, %v781
      %v815 = vpack.c.b16 %v784, %v783
      %v816 = vpack.c.b16 %v786, %v785
      %v817 = vpack.c.b16 %v788, %v787
      %v818 = vpack.c.b16 %v790, %v789
      %v819 = vpack.c.b16 %v792, %v791
      %v820 = vpack.c.b16 %v794, %v793
      %v821 = vpack.c.b16 %v796, %v795
      %v822 = vpack.c.b16 %v798, %v797
      %847 = vmatpush.bf16.msra.mxu0 %v806
      %848 = vmatpush.bf16.msra.mxu0 %v805
      %849 = vmatpush.bf16.msra.mxu0 %v804
      %850 = vmatpush.bf16.msra.mxu0 %v803
      %851 = vmatpush.bf16.msra.mxu0 %v802
      %852 = vmatpush.bf16.msra.mxu0 %v801
      %853 = vmatpush.bf16.msra.mxu0 %v800
      %854 = vmatpush.bf16.msra.mxu0 %v799
      %855 = vmatmul.bf16.gmra.mxu0 %v607
      %v856 = vpop.f32.mrf.mxu0
      %v857 = vadd.f32 0.0, %v856
      %v858 = vpop.f32.mrf.mxu0
      %v859 = vadd.f32 0.0, %v858
      %860 = vmatmul.bf16.gmra.mxu0 %v610
      %v861 = vpop.f32.mrf.mxu0
      %v862 = vadd.f32 0.0, %v861
      %v863 = vpop.f32.mrf.mxu0
      %v864 = vadd.f32 0.0, %v863
      %865 = vmatmul.bf16.gmra.mxu0 %v613
      %v866 = vpop.f32.mrf.mxu0
      %v867 = vadd.f32 0.0, %v866
      %v868 = vpop.f32.mrf.mxu0
      %v869 = vadd.f32 0.0, %v868
      %870 = vmatmul.bf16.gmra.mxu0 %v616
      %v871 = vpop.f32.mrf.mxu0
      %v872 = vadd.f32 0.0, %v871
      %v873 = vpop.f32.mrf.mxu0
      %v874 = vadd.f32 0.0, %v873
      %875 = vmatmul.bf16.gmra.mxu0 %v619
      %v876 = vpop.f32.mrf.mxu0
      %v877 = vadd.f32 0.0, %v876
      %v878 = vpop.f32.mrf.mxu0
      %v879 = vadd.f32 0.0, %v878
      %880 = vmatmul.bf16.gmra.mxu0 %v622
      %v881 = vpop.f32.mrf.mxu0
      %v882 = vadd.f32 0.0, %v881
      %v883 = vpop.f32.mrf.mxu0
      %v884 = vadd.f32 0.0, %v883
      %885 = vmatmul.bf16.gmra.mxu0 %v625
      %v886 = vpop.f32.mrf.mxu0
      %v887 = vadd.f32 0.0, %v886
      %v888 = vpop.f32.mrf.mxu0
      %v889 = vadd.f32 0.0, %v888
      %890 = vmatmul.bf16.gmra.mxu0 %v628
      %v891 = vpop.f32.mrf.mxu0
      %v892 = vadd.f32 0.0, %v891
      %v893 = vpop.f32.mrf.mxu0
      %v894 = vadd.f32 0.0, %v893
      %895 = vmatmul.bf16.gmra.mxu0 %v631
      %v896 = vpop.f32.mrf.mxu0
      %v897 = vadd.f32 0.0, %v896
      %v898 = vpop.f32.mrf.mxu0
      %v899 = vadd.f32 0.0, %v898
      %900 = vmatmul.bf16.gmra.mxu0 %v634
      %v901 = vpop.f32.mrf.mxu0
      %v902 = vadd.f32 0.0, %v901
      %v903 = vpop.f32.mrf.mxu0
      %v904 = vadd.f32 0.0, %v903
      %905 = vmatmul.bf16.gmra.mxu0 %v637
      %v906 = vpop.f32.mrf.mxu0
      %v907 = vadd.f32 0.0, %v906
      %v908 = vpop.f32.mrf.mxu0
      %v909 = vadd.f32 0.0, %v908
      %910 = vmatmul.bf16.gmra.mxu0 %v640
      %v911 = vpop.f32.mrf.mxu0
      %v912 = vadd.f32 0.0, %v911
      %v913 = vpop.f32.mrf.mxu0
      %v914 = vadd.f32 0.0, %v913
      %915 = vmatmul.bf16.gmra.mxu0 %v643
      %v916 = vpop.f32.mrf.mxu0
      %v917 = vadd.f32 0.0, %v916
      %v918 = vpop.f32.mrf.mxu0
      %v919 = vadd.f32 0.0, %v918
      %920 = vmatmul.bf16.gmra.mxu0 %v646
      %v921 = vpop.f32.mrf.mxu0
      %v922 = vadd.f32 0.0, %v921
      %v923 = vpop.f32.mrf.mxu0
      %v924 = vadd.f32 0.0, %v923
      %925 = vmatmul.bf16.gmra.mxu0 %v649
      %v926 = vpop.f32.mrf.mxu0
      %v927 = vadd.f32 0.0, %v926
      %v928 = vpop.f32.mrf.mxu0
      %v929 = vadd.f32 0.0, %v928
      %930 = vmatmul.bf16.gmra.mxu0 %v652
      %v931 = vpop.f32.mrf.mxu0
      %v932 = vadd.f32 0.0, %v931
      %v933 = vpop.f32.mrf.mxu0
      %v934 = vadd.f32 0.0, %v933
      %935 = vdwg.mxu0
      %936 = vmatpush.bf16.msra.mxu0 %v814
      %937 = vmatpush.bf16.msra.mxu0 %v813
      %938 = vmatpush.bf16.msra.mxu0 %v812
      %939 = vmatpush.bf16.msra.mxu0 %v811
      %940 = vmatpush.bf16.msra.mxu0 %v810
      %941 = vmatpush.bf16.msra.mxu0 %v809
      %942 = vmatpush.bf16.msra.mxu0 %v808
      %943 = vmatpush.bf16.msra.mxu0 %v807
      %944 = vmatmul.bf16.gmra.mxu0 %v608
      %v945 = vpop.f32.mrf.mxu0
      %v946 = vadd.f32 %v857, %v945
      %v947 = vpop.f32.mrf.mxu0
      %v948 = vadd.f32 %v859, %v947
      %949 = vmatmul.bf16.gmra.mxu0 %v611
      %v950 = vpop.f32.mrf.mxu0
      %v951 = vadd.f32 %v862, %v950
      %v952 = vpop.f32.mrf.mxu0
      %v953 = vadd.f32 %v864, %v952
      %954 = vmatmul.bf16.gmra.mxu0 %v614
      %v955 = vpop.f32.mrf.mxu0
      %v956 = vadd.f32 %v867, %v955
      %v957 = vpop.f32.mrf.mxu0
      %v958 = vadd.f32 %v869, %v957
      %959 = vmatmul.bf16.gmra.mxu0 %v617
      %v960 = vpop.f32.mrf.mxu0
      %v961 = vadd.f32 %v872, %v960
      %v962 = vpop.f32.mrf.mxu0
      %v963 = vadd.f32 %v874, %v962
      %964 = vmatmul.bf16.gmra.mxu0 %v620
      %v965 = vpop.f32.mrf.mxu0
      %v966 = vadd.f32 %v877, %v965
      %v967 = vpop.f32.mrf.mxu0
      %v968 = vadd.f32 %v879, %v967
      %969 = vmatmul.bf16.gmra.mxu0 %v623
      %v970 = vpop.f32.mrf.mxu0
      %v971 = vadd.f32 %v882, %v970
      %v972 = vpop.f32.mrf.mxu0
      %v973 = vadd.f32 %v884, %v972
      %974 = vmatmul.bf16.gmra.mxu0 %v626
      %v975 = vpop.f32.mrf.mxu0
      %v976 = vadd.f32 %v887, %v975
      %v977 = vpop.f32.mrf.mxu0
      %v978 = vadd.f32 %v889, %v977
      %979 = vmatmul.bf16.gmra.mxu0 %v629
      %v980 = vpop.f32.mrf.mxu0
      %v981 = vadd.f32 %v892, %v980
      %v982 = vpop.f32.mrf.mxu0
      %v983 = vadd.f32 %v894, %v982
      %984 = vmatmul.bf16.gmra.mxu0 %v632
      %v985 = vpop.f32.mrf.mxu0
      %v986 = vadd.f32 %v897, %v985
      %v987 = vpop.f32.mrf.mxu0
      %v988 = vadd.f32 %v899, %v987
      %989 = vmatmul.bf16.gmra.mxu0 %v635
      %v990 = vpop.f32.mrf.mxu0
      %v991 = vadd.f32 %v902, %v990
      %v992 = vpop.f32.mrf.mxu0
      %v993 = vadd.f32 %v904, %v992
      %994 = vmatmul.bf16.gmra.mxu0 %v638
      %v995 = vpop.f32.mrf.mxu0
      %v996 = vadd.f32 %v907, %v995
      %v997 = vpop.f32.mrf.mxu0
      %v998 = vadd.f32 %v909, %v997
      %999 = vmatmul.bf16.gmra.mxu0 %v641
      %v1000 = vpop.f32.mrf.mxu0
      %v1001 = vadd.f32 %v912, %v1000
      %v1002 = vpop.f32.mrf.mxu0
      %v1003 = vadd.f32 %v914, %v1002
      %1004 = vmatmul.bf16.gmra.mxu0 %v644
      %v1005 = vpop.f32.mrf.mxu0
      %v1006 = vadd.f32 %v917, %v1005
      %v1007 = vpop.f32.mrf.mxu0
      %v1008 = vadd.f32 %v919, %v1007
      %1009 = vmatmul.bf16.gmra.mxu0 %v647
      %v1010 = vpop.f32.mrf.mxu0
      %v1011 = vadd.f32 %v922, %v1010
      %v1012 = vpop.f32.mrf.mxu0
      %v1013 = vadd.f32 %v924, %v1012
      %1014 = vmatmul.bf16.gmra.mxu0 %v650
      %v1015 = vpop.f32.mrf.mxu0
      %v1016 = vadd.f32 %v927, %v1015
      %v1017 = vpop.f32.mrf.mxu0
      %v1018 = vadd.f32 %v929, %v1017
      %1019 = vmatmul.bf16.gmra.mxu0 %v653
      %v1020 = vpop.f32.mrf.mxu0
      %v1021 = vadd.f32 %v932, %v1020
      %v1022 = vpop.f32.mrf.mxu0
      %v1023 = vadd.f32 %v934, %v1022
      %1024 = vdwg.mxu0
      %1025 = vmatpush.bf16.msra.mxu0 %v822
      %1026 = vmatpush.bf16.msra.mxu0 %v821
      %1027 = vmatpush.bf16.msra.mxu0 %v820
      %1028 = vmatpush.bf16.msra.mxu0 %v819
      %1029 = vmatpush.bf16.msra.mxu0 %v818
      %1030 = vmatpush.bf16.msra.mxu0 %v817
      %1031 = vmatpush.bf16.msra.mxu0 %v816
      %1032 = vmatpush.bf16.msra.mxu0 %v815
      %1033 = vmatmul.bf16.gmra.mxu0 %v609
      %v1034 = vpop.f32.mrf.mxu0
      %v1035 = vadd.f32 %v946, %v1034
      %v1036 = vpop.f32.mrf.mxu0
      %v1037 = vadd.f32 %v948, %v1036
      %1038 = vmatmul.bf16.gmra.mxu0 %v612
      %v1039 = vpop.f32.mrf.mxu0
      %v1040 = vadd.f32 %v951, %v1039
      %v1041 = vpop.f32.mrf.mxu0
      %v1042 = vadd.f32 %v953, %v1041
      %1043 = vmatmul.bf16.gmra.mxu0 %v615
      %v1044 = vpop.f32.mrf.mxu0
      %v1045 = vadd.f32 %v956, %v1044
      %v1046 = vpop.f32.mrf.mxu0
      %v1047 = vadd.f32 %v958, %v1046
      %1048 = vmatmul.bf16.gmra.mxu0 %v618
      %v1049 = vpop.f32.mrf.mxu0
      %v1050 = vadd.f32 %v961, %v1049
      %v1051 = vpop.f32.mrf.mxu0
      %v1052 = vadd.f32 %v963, %v1051
      %1053 = vmatmul.bf16.gmra.mxu0 %v621
      %v1054 = vpop.f32.mrf.mxu0
      %v1055 = vadd.f32 %v966, %v1054
      %v1056 = vpop.f32.mrf.mxu0
      %v1057 = vadd.f32 %v968, %v1056
      %1058 = vmatmul.bf16.gmra.mxu0 %v624
      %v1059 = vpop.f32.mrf.mxu0
      %v1060 = vadd.f32 %v971, %v1059
      %v1061 = vpop.f32.mrf.mxu0
      %v1062 = vadd.f32 %v973, %v1061
      %1063 = vmatmul.bf16.gmra.mxu0 %v627
      %v1064 = vpop.f32.mrf.mxu0
      %v1065 = vadd.f32 %v976, %v1064
      %v1066 = vpop.f32.mrf.mxu0
      %v1067 = vadd.f32 %v978, %v1066
      %1068 = vmatmul.bf16.gmra.mxu0 %v630
      %v1069 = vpop.f32.mrf.mxu0
      %v1070 = vadd.f32 %v981, %v1069
      %v1071 = vpop.f32.mrf.mxu0
      %v1072 = vadd.f32 %v983, %v1071
      %1073 = vmatmul.bf16.gmra.mxu0 %v633
      %v1074 = vpop.f32.mrf.mxu0
      %v1075 = vadd.f32 %v986, %v1074
      %v1076 = vpop.f32.mrf.mxu0
      %v1077 = vadd.f32 %v988, %v1076
      %1078 = vmatmul.bf16.gmra.mxu0 %v636
      %v1079 = vpop.f32.mrf.mxu0
      %v1080 = vadd.f32 %v991, %v1079
      %v1081 = vpop.f32.mrf.mxu0
      %v1082 = vadd.f32 %v993, %v1081
      %1083 = vmatmul.bf16.gmra.mxu0 %v639
      %v1084 = vpop.f32.mrf.mxu0
      %v1085 = vadd.f32 %v996, %v1084
      %v1086 = vpop.f32.mrf.mxu0
      %v1087 = vadd.f32 %v998, %v1086
      %1088 = vmatmul.bf16.gmra.mxu0 %v642
      %v1089 = vpop.f32.mrf.mxu0
      %v1090 = vadd.f32 %v1001, %v1089
      %v1091 = vpop.f32.mrf.mxu0
      %v1092 = vadd.f32 %v1003, %v1091
      %1093 = vmatmul.bf16.gmra.mxu0 %v645
      %v1094 = vpop.f32.mrf.mxu0
      %v1095 = vadd.f32 %v1006, %v1094
      %v1096 = vpop.f32.mrf.mxu0
      %v1097 = vadd.f32 %v1008, %v1096
      %1098 = vmatmul.bf16.gmra.mxu0 %v648
      %v1099 = vpop.f32.mrf.mxu0
      %v1100 = vadd.f32 %v1011, %v1099
      %v1101 = vpop.f32.mrf.mxu0
      %v1102 = vadd.f32 %v1013, %v1101
      %1103 = vmatmul.bf16.gmra.mxu0 %v651
      %v1104 = vpop.f32.mrf.mxu0
      %v1105 = vadd.f32 %v1016, %v1104
      %v1106 = vpop.f32.mrf.mxu0
      %v1107 = vadd.f32 %v1018, %v1106
      %1108 = vmatmul.bf16.gmra.mxu0 %v654
      %v1109 = vpop.f32.mrf.mxu0
      %v1110 = vadd.f32 %v1021, %v1109
      %v1111 = vpop.f32.mrf.mxu0
      %v1112 = vadd.f32 %v1023, %v1111
      %1113 = vdwg.mxu0
      %v1114 = vadd.f32 %v303, %v1035
      %v1115 = vadd.f32 %v304, %v1037
      %v1116 = vadd.f32 %v305, %v1040
      %v1117 = vadd.f32 %v306, %v1042
      %v1118 = vadd.f32 %v307, %v1045
      %v1119 = vadd.f32 %v308, %v1047
      %v1120 = vadd.f32 %v309, %v1050
      %v1121 = vadd.f32 %v310, %v1052
      %v1122 = vadd.f32 %v311, %v1055
      %v1123 = vadd.f32 %v312, %v1057
      %v1124 = vadd.f32 %v313, %v1060
      %v1125 = vadd.f32 %v314, %v1062
      %v1126 = vadd.f32 %v315, %v1065
      %v1127 = vadd.f32 %v316, %v1067
      %v1128 = vadd.f32 %v317, %v1070
      %v1129 = vadd.f32 %v318, %v1072
      %v1130 = vadd.f32 %v319, %v1075
      %v1131 = vadd.f32 %v320, %v1077
      %v1132 = vadd.f32 %v321, %v1080
      %v1133 = vadd.f32 %v322, %v1082
      %v1134 = vadd.f32 %v323, %v1085
      %v1135 = vadd.f32 %v324, %v1087
      %v1136 = vadd.f32 %v325, %v1090
      %v1137 = vadd.f32 %v326, %v1092
      %v1138 = vadd.f32 %v327, %v1095
      %v1139 = vadd.f32 %v328, %v1097
      %v1140 = vadd.f32 %v329, %v1100
      %v1141 = vadd.f32 %v330, %v1102
      %v1142 = vadd.f32 %v331, %v1105
      %v1143 = vadd.f32 %v332, %v1107
      %v1144 = vadd.f32 %v333, %v1110
      %v1145 = vadd.f32 %v334, %v1112
      %1146 = vst [vmem:[#allocation2] sm:$0xff] %v1114
      %1147 = vst [vmem:[#allocation2 + $0x8] sm:$0xff] %v1115
      %1148 = vst [vmem:[#allocation2 + $0x10] sm:$0xff] %v1116
      %1149 = vst [vmem:[#allocation2 + $0x18] sm:$0xff] %v1117
      %1150 = vst [vmem:[#allocation2 + $0x20] sm:$0xff] %v1118
      %1151 = vst [vmem:[#allocation2 + $0x28] sm:$0xff] %v1119
      %1152 = vst [vmem:[#allocation2 + $0x30] sm:$0xff] %v1120
      %1153 = vst [vmem:[#allocation2 + $0x38] sm:$0xff] %v1121
      %1154 = vst [vmem:[#allocation2 + $0x40] sm:$0xff] %v1122
      %1155 = vst [vmem:[#allocation2 + $0x48] sm:$0xff] %v1123
      %1156 = vst [vmem:[#allocation2 + $0x50] sm:$0xff] %v1124
      %1157 = vst [vmem:[#allocation2 + $0x58] sm:$0xff] %v1125
      %1158 = vst [vmem:[#allocation2 + $0x60] sm:$0xff] %v1126
      %1159 = vst [vmem:[#allocation2 + $0x68] sm:$0xff] %v1127
      %1160 = vst [vmem:[#allocation2 + $0x70] sm:$0xff] %v1128
      %1161 = vst [vmem:[#allocation2 + $0x78] sm:$0xff] %v1129
      %1162 = vst [vmem:[#allocation2 + $0x80] sm:$0xff] %v1130
      %1163 = vst [vmem:[#allocation2 + $0x88] sm:$0xff] %v1131
      %1164 = vst [vmem:[#allocation2 + $0x90] sm:$0xff] %v1132
      %1165 = vst [vmem:[#allocation2 + $0x98] sm:$0xff] %v1133
      %1166 = vst [vmem:[#allocation2 + $0xa0] sm:$0xff] %v1134
      %1167 = vst [vmem:[#allocation2 + $0xa8] sm:$0xff] %v1135
      %1168 = vst [vmem:[#allocation2 + $0xb0] sm:$0xff] %v1136
      %1169 = vst [vmem:[#allocation2 + $0xb8] sm:$0xff] %v1137
      %1170 = vst [vmem:[#allocation2 + $0xc0] sm:$0xff] %v1138
      %1171 = vst [vmem:[#allocation2 + $0xc8] sm:$0xff] %v1139
      %1172 = vst [vmem:[#allocation2 + $0xd0] sm:$0xff] %v1140
      %1173 = vst [vmem:[#allocation2 + $0xd8] sm:$0xff] %v1141
      %1174 = vst [vmem:[#allocation2 + $0xe0] sm:$0xff] %v1142
      %1175 = vst [vmem:[#allocation2 + $0xe8] sm:$0xff] %v1143
      %1176 = vst [vmem:[#allocation2 + $0xf0] sm:$0xff] %v1144
      %1177 = vst [vmem:[#allocation2 + $0xf8] sm:$0xff] %v1145
      // Predicated region
      $region37: #{phasenet_forward.6} parent=31 // pred_check
        %p1178 = pneg %p267
      $region38: #{phasenet_forward.6} parent=31 // pred_check_branch
        %1180 = sbr.rel (%p1178) target = $region40
      $region39: #{phasenet_forward.6} parent=31 // pred_region
        %v1181 = vld [vmem:[#allocation2] sm:$0xff]
        %v1182 = vld [vmem:[#allocation2 + $0x8] sm:$0xff]
        %v1183 = vld [vmem:[#allocation2 + $0x10] sm:$0xff]
        %v1184 = vld [vmem:[#allocation2 + $0x18] sm:$0xff]
        %v1185 = vld [vmem:[#allocation2 + $0x20] sm:$0xff]
        %v1186 = vld [vmem:[#allocation2 + $0x28] sm:$0xff]
        %v1187 = vld [vmem:[#allocation2 + $0x30] sm:$0xff]
        %v1188 = vld [vmem:[#allocation2 + $0x38] sm:$0xff]
        %v1189 = vld [vmem:[#allocation2 + $0x40] sm:$0xff]
        %v1190 = vld [vmem:[#allocation2 + $0x48] sm:$0xff]
        %v1191 = vld [vmem:[#allocation2 + $0x50] sm:$0xff]
        %v1192 = vld [vmem:[#allocation2 + $0x58] sm:$0xff]
        %v1193 = vld [vmem:[#allocation2 + $0x60] sm:$0xff]
        %v1194 = vld [vmem:[#allocation2 + $0x68] sm:$0xff]
        %v1195 = vld [vmem:[#allocation2 + $0x70] sm:$0xff]
        %v1196 = vld [vmem:[#allocation2 + $0x78] sm:$0xff]
        %v1197 = vld [vmem:[#allocation2 + $0x80] sm:$0xff]
        %v1198 = vld [vmem:[#allocation2 + $0x88] sm:$0xff]
        %v1199 = vld [vmem:[#allocation2 + $0x90] sm:$0xff]
        %v1200 = vld [vmem:[#allocation2 + $0x98] sm:$0xff]
        %v1201 = vld [vmem:[#allocation2 + $0xa0] sm:$0xff]
        %v1202 = vld [vmem:[#allocation2 + $0xa8] sm:$0xff]
        %v1203 = vld [vmem:[#allocation2 + $0xb0] sm:$0xff]
        %v1204 = vld [vmem:[#allocation2 + $0xb8] sm:$0xff]
        %v1205 = vld [vmem:[#allocation2 + $0xc0] sm:$0xff]
        %v1206 = vld [vmem:[#allocation2 + $0xc8] sm:$0xff]
        %v1207 = vld [vmem:[#allocation2 + $0xd0] sm:$0xff]
        %v1208 = vld [vmem:[#allocation2 + $0xd8] sm:$0xff]
        %v1209 = vld [vmem:[#allocation2 + $0xe0] sm:$0xff]
        %v1210 = vld [vmem:[#allocation2 + $0xe8] sm:$0xff]
        %v1211 = vld [vmem:[#allocation2 + $0xf0] sm:$0xff]
        %v1212 = vld [vmem:[#allocation2 + $0xf8] sm:$0xff]
        %v1213 = vld [vmem:[%s257] sm:$0x1]
        %v1215 = vperm.slane %v1213, 0
        %v1217 = vadd.f32 %v1181, %v1215
        %v1218 = vadd.f32 %v1182, %v1215
        %v1219 = vadd.f32 %v1183, %v1215
        %v1220 = vadd.f32 %v1184, %v1215
        %v1221 = vadd.f32 %v1185, %v1215
        %v1222 = vadd.f32 %v1186, %v1215
        %v1223 = vadd.f32 %v1187, %v1215
        %v1224 = vadd.f32 %v1188, %v1215
        %v1225 = vadd.f32 %v1189, %v1215
        %v1226 = vadd.f32 %v1190, %v1215
        %v1227 = vadd.f32 %v1191, %v1215
        %v1228 = vadd.f32 %v1192, %v1215
        %v1229 = vadd.f32 %v1193, %v1215
        %v1230 = vadd.f32 %v1194, %v1215
        %v1231 = vadd.f32 %v1195, %v1215
        %v1232 = vadd.f32 %v1196, %v1215
        %v1233 = vadd.f32 %v1197, %v1215
        %v1234 = vadd.f32 %v1198, %v1215
        %v1235 = vadd.f32 %v1199, %v1215
        %v1236 = vadd.f32 %v1200, %v1215
        %v1237 = vadd.f32 %v1201, %v1215
        %v1238 = vadd.f32 %v1202, %v1215
        %v1239 = vadd.f32 %v1203, %v1215
        %v1240 = vadd.f32 %v1204, %v1215
        %v1241 = vadd.f32 %v1205, %v1215
        %v1242 = vadd.f32 %v1206, %v1215
        %v1243 = vadd.f32 %v1207, %v1215
        %v1244 = vadd.f32 %v1208, %v1215
        %v1245 = vadd.f32 %v1209, %v1215
        %v1246 = vadd.f32 %v1210, %v1215
        %v1247 = vadd.f32 %v1211, %v1215
        %v1248 = vadd.f32 %v1212, %v1215
        %v1249 = vmax.f32 %v1217, 0.0
        %v1250 = vmax.f32 %v1218, 0.0
        %v1251 = vmax.f32 %v1219, 0.0
        %v1252 = vmax.f32 %v1220, 0.0
        %v1253 = vmax.f32 %v1221, 0.0
        %v1254 = vmax.f32 %v1222, 0.0
        %v1255 = vmax.f32 %v1223, 0.0
        %v1256 = vmax.f32 %v1224, 0.0
        %v1257 = vmax.f32 %v1225, 0.0
        %v1258 = vmax.f32 %v1226, 0.0
        %v1259 = vmax.f32 %v1227, 0.0
        %v1260 = vmax.f32 %v1228, 0.0
        %v1261 = vmax.f32 %v1229, 0.0
        %v1262 = vmax.f32 %v1230, 0.0
        %v1263 = vmax.f32 %v1231, 0.0
        %v1264 = vmax.f32 %v1232, 0.0
        %v1265 = vmax.f32 %v1233, 0.0
        %v1266 = vmax.f32 %v1234, 0.0
        %v1267 = vmax.f32 %v1235, 0.0
        %v1268 = vmax.f32 %v1236, 0.0
        %v1269 = vmax.f32 %v1237, 0.0
        %v1270 = vmax.f32 %v1238, 0.0
        %v1271 = vmax.f32 %v1239, 0.0
        %v1272 = vmax.f32 %v1240, 0.0
        %v1273 = vmax.f32 %v1241, 0.0
        %v1274 = vmax.f32 %v1242, 0.0
        %v1275 = vmax.f32 %v1243, 0.0
        %v1276 = vmax.f32 %v1244, 0.0
        %v1277 = vmax.f32 %v1245, 0.0
        %v1278 = vmax.f32 %v1246, 0.0
        %v1279 = vmax.f32 %v1247, 0.0
        %v1280 = vmax.f32 %v1248, 0.0
        %1281 = vst [vmem:[%s265] sm:$0xff] %v1249
        %1282 = vst [vmem:[%s265 + $0x8] sm:$0xff] %v1250
        %1283 = vst [vmem:[%s265 + $0x10] sm:$0xff] %v1251
        %1284 = vst [vmem:[%s265 + $0x18] sm:$0xff] %v1252
        %1285 = vst [vmem:[%s265 + $0x20] sm:$0xff] %v1253
        %1286 = vst [vmem:[%s265 + $0x28] sm:$0xff] %v1254
        %1287 = vst [vmem:[%s265 + $0x30] sm:$0xff] %v1255
        %1288 = vst [vmem:[%s265 + $0x38] sm:$0xff] %v1256
        %1289 = vst [vmem:[%s265 + $0x40] sm:$0xff] %v1257
        %1290 = vst [vmem:[%s265 + $0x48] sm:$0xff] %v1258
        %1291 = vst [vmem:[%s265 + $0x50] sm:$0xff] %v1259
        %1292 = vst [vmem:[%s265 + $0x58] sm:$0xff] %v1260
        %1293 = vst [vmem:[%s265 + $0x60] sm:$0xff] %v1261
        %1294 = vst [vmem:[%s265 + $0x68] sm:$0xff] %v1262
        %1295 = vst [vmem:[%s265 + $0x70] sm:$0xff] %v1263
        %1296 = vst [vmem:[%s265 + $0x78] sm:$0xff] %v1264
        %1297 = vst [vmem:[%s265 + $0x80] sm:$0xff] %v1265
        %1298 = vst [vmem:[%s265 + $0x88] sm:$0xff] %v1266
        %1299 = vst [vmem:[%s265 + $0x90] sm:$0xff] %v1267
        %1300 = vst [vmem:[%s265 + $0x98] sm:$0xff] %v1268
        %1301 = vst [vmem:[%s265 + $0xa0] sm:$0xff] %v1269
        %1302 = vst [vmem:[%s265 + $0xa8] sm:$0xff] %v1270
        %1303 = vst [vmem:[%s265 + $0xb0] sm:$0xff] %v1271
        %1304 = vst [vmem:[%s265 + $0xb8] sm:$0xff] %v1272
        %1305 = vst [vmem:[%s265 + $0xc0] sm:$0xff] %v1273
        %1306 = vst [vmem:[%s265 + $0xc8] sm:$0xff] %v1274
        %1307 = vst [vmem:[%s265 + $0xd0] sm:$0xff] %v1275
        %1308 = vst [vmem:[%s265 + $0xd8] sm:$0xff] %v1276
        %1309 = vst [vmem:[%s265 + $0xe0] sm:$0xff] %v1277
        %1310 = vst [vmem:[%s265 + $0xe8] sm:$0xff] %v1278
        %1311 = vst [vmem:[%s265 + $0xf0] sm:$0xff] %v1279
        %1312 = vst [vmem:[%s265 + $0xf8] sm:$0xff] %v1280
      $region40: #{phasenet_forward.6} parent=31 // pred_fallthru
        _
      %s1313 = smul.u32 32, %s19
      %p1314 = scmp.lt.s32.totalorder %s1313, 63
      %s1315 = scalar_select %p1314, %s1313, 63
      %p1316 = scmp.lt.s32.totalorder %s20, 0
      %s1317 = scalar_select %p1316, %s20, 0
      %s1318 = sadd.s32 %s1317, %s1315
      %s1319 = smul.addr %s1318, 8
      %s1320 = scalar_lea.vmem %s3, %s1319
      // Predicated region
      $region41: #{phasenet_forward.6} parent=31 // pred_check
        %p1321 = pneg %p135
      $region42: #{phasenet_forward.6} parent=31 // pred_check_branch
        %1323 = sbr.rel (%p1321) target = $region44
      $region43: #{phasenet_forward.6} parent=31 // pred_region
        %s1324 = smul.u32 32, %s19
      $region44: #{phasenet_forward.6} parent=31 // pred_fallthru
        _
    $region32: #{phasenet_forward.6} parent=5 // pred_fallthru
      _
    %p1325 = scmp.le.s32.totalorder 2, %s9
    // Predicated region
    $region45: #{phasenet_forward.6} parent=5 // pred_check
      %p1326 = pneg %p1325
    $region46: #{phasenet_forward.6} parent=5 // pred_check_branch
      %1328 = sbr.rel (%p1326) target = $region48
    $region47: #{phasenet_forward.6} parent=5 // pred_region
      %s1329 = ssub.s32 %s9, 2
      // Predicated region
      $region49: #{phasenet_forward.6} parent=47 // pred_check
        %p1330 = pneg %p141
      $region50: #{phasenet_forward.6} parent=47 // pred_check_branch
        %1332 = sbr.rel (%p1330) target = $region52
      $region51: #{phasenet_forward.6} parent=47 // pred_region
        %s1333 = smul.u32 32, %s22
        %p1334 = scmp.lt.s32.totalorder %s1333, 63
        %s1335 = scalar_select %p1334, %s1333, 63
        %p1336 = scmp.lt.s32.totalorder %s23, 0
        %s1337 = scalar_select %p1336, %s23, 0
        %s1338 = sadd.s32 %s1337, %s1335
        %s1339 = smul.addr %s1338, 8
        %s1340 = scalar_lea.vmem %s3, %s1339
      $region52: #{phasenet_forward.6} parent=47 // pred_fallthru
        _
    $region48: #{phasenet_forward.6} parent=5 // pred_fallthru
      _
  $region6: #{phasenet_forward.6} parent=0 // loop_footer
    %s13 = sadd.s32 1, %s9
  $region7: #{phasenet_forward.6} parent=0 // loop_footer_branch
    %8 = sbr.rel target = $region3
  $region8: #{phasenet_forward.6} parent=0 // loop_exit
    _

// kernel: phasenet_forward.7
$region0: #{phasenet_forward.7}
  #allocation0 [shape = 'u32[]', space=smem, size = 0x4, offset = 0x4, fixed_abs, tag = 'smem constant byte address 0x4 - core index']
  #allocation1 [shape = 'u32[72,128]{1,0:T(1,128)}', space=vmem, size = 0x9000, scoped, tag = 'internal scratch']
  #allocation2 [shape = 'f32[112,128]{1,0:T(8,128)}', space=vmem, size = 0xe000, scoped, tag = 'scratch operand']
  %s0 = inlined_call_operand.vmem [shape: bf16[112,512], index: 0, kind: input, shape index: {}]
  %s1 = inlined_call_operand.vmem [shape: bf16[512,128], index: 1, kind: input, shape index: {}]
  %s2 = inlined_call_operand.vmem [shape: f32[1,128], index: 2, kind: input, shape index: {}]
  %s3 = inlined_call_operand.vmem [shape: f32[112,128], index: 3, kind: output, shape index: {}]
  %s4 = sld [smem:[#allocation0]]
  $region30: #{phasenet_forward.7} parent=0
    _
  %s6 = ssub.s32 1, %s4
  %s7 = scalar_select 0, %s6, %s4
  // Predicated region
  $region2: #{phasenet_forward.7} parent=0 // pred_check
    _
  $region3: #{phasenet_forward.7} parent=0 // pred_check_branch
    %9 = sbr.rel (0) target = $region5
  $region4: #{phasenet_forward.7} parent=0 // pred_region
    _
  $region5: #{phasenet_forward.7} parent=0 // pred_fallthru
    _
  // Predicated region
  $region6: #{phasenet_forward.7} parent=0 // pred_check
    _
  $region7: #{phasenet_forward.7} parent=0 // pred_check_branch
    %11 = sbr.rel (0) target = $region9
  $region8: #{phasenet_forward.7} parent=0 // pred_region
    _
  $region9: #{phasenet_forward.7} parent=0 // pred_fallthru
    _
  // Predicated region
  $region10: #{phasenet_forward.7} parent=0 // pred_check
    _
  $region11: #{phasenet_forward.7} parent=0 // pred_check_branch
    %13 = sbr.rel (0) target = $region13
  $region12: #{phasenet_forward.7} parent=0 // pred_region
    _
  $region13: #{phasenet_forward.7} parent=0 // pred_fallthru
    _
  %p14 = scmp.eq.s32.totalorder 0, 0
  // Predicated region
  $region14: #{phasenet_forward.7} parent=0 // pred_check
    %p15 = pneg %p14
  $region15: #{phasenet_forward.7} parent=0 // pred_check_branch
    %17 = sbr.rel (%p15) target = $region17
  $region16: #{phasenet_forward.7} parent=0 // pred_region
    %18 = vst [vmem:[#allocation2] sm:$0xff] 0.0
    %19 = vst [vmem:[#allocation2 + $0x8] sm:$0xff] 0.0
    %20 = vst [vmem:[#allocation2 + $0x10] sm:$0xff] 0.0
    %21 = vst [vmem:[#allocation2 + $0x18] sm:$0xff] 0.0
    %22 = vst [vmem:[#allocation2 + $0x20] sm:$0xff] 0.0
    %23 = vst [vmem:[#allocation2 + $0x28] sm:$0xff] 0.0
    %24 = vst [vmem:[#allocation2 + $0x30] sm:$0xff] 0.0
    %25 = vst [vmem:[#allocation2 + $0x38] sm:$0xff] 0.0
    %26 = vst [vmem:[#allocation2 + $0x40] sm:$0xff] 0.0
    %27 = vst [vmem:[#allocation2 + $0x48] sm:$0xff] 0.0
    %28 = vst [vmem:[#allocation2 + $0x50] sm:$0xff] 0.0
    %29 = vst [vmem:[#allocation2 + $0x58] sm:$0xff] 0.0
    %30 = vst [vmem:[#allocation2 + $0x60] sm:$0xff] 0.0
    %31 = vst [vmem:[#allocation2 + $0x68] sm:$0xff] 0.0
  $region17: #{phasenet_forward.7} parent=0 // pred_fallthru
    _
  %v32 = vld [vmem:[#allocation2] sm:$0xff]
  %v33 = vld [vmem:[#allocation2 + $0x8] sm:$0xff]
  %v34 = vld [vmem:[#allocation2 + $0x10] sm:$0xff]
  %v35 = vld [vmem:[#allocation2 + $0x18] sm:$0xff]
  %v36 = vld [vmem:[#allocation2 + $0x20] sm:$0xff]
  %v37 = vld [vmem:[#allocation2 + $0x28] sm:$0xff]
  %v38 = vld [vmem:[#allocation2 + $0x30] sm:$0xff]
  %v39 = vld [vmem:[#allocation2 + $0x38] sm:$0xff]
  %v40 = vld [vmem:[#allocation2 + $0x40] sm:$0xff]
  %v41 = vld [vmem:[#allocation2 + $0x48] sm:$0xff]
  %v42 = vld [vmem:[#allocation2 + $0x50] sm:$0xff]
  %v43 = vld [vmem:[#allocation2 + $0x58] sm:$0xff]
  %v44 = vld [vmem:[#allocation2 + $0x60] sm:$0xff]
  %v45 = vld [vmem:[#allocation2 + $0x68] sm:$0xff]
  %v46 = vld [vmem:[%s0] sm:$0xff]
  %v47 = vld [vmem:[%s0 + $0x8] sm:$0xff]
  %v48 = vld [vmem:[%s0 + $0x10] sm:$0xff]
  %v49 = vld [vmem:[%s0 + $0x18] sm:$0xff]
  %v50 = vld [vmem:[%s0 + $0x20] sm:$0xff]
  %v51 = vld [vmem:[%s0 + $0x28] sm:$0xff]
  %v52 = vld [vmem:[%s0 + $0x30] sm:$0xff]
  %v53 = vld [vmem:[%s0 + $0x38] sm:$0xff]
  %v54 = vld [vmem:[%s0 + $0x40] sm:$0xff]
  %v55 = vld [vmem:[%s0 + $0x48] sm:$0xff]
  %v56 = vld [vmem:[%s0 + $0x50] sm:$0xff]
  %v57 = vld [vmem:[%s0 + $0x58] sm:$0xff]
  %v58 = vld [vmem:[%s0 + $0x60] sm:$0xff]
  %v59 = vld [vmem:[%s0 + $0x68] sm:$0xff]
  %v60 = vld [vmem:[%s0 + $0x70] sm:$0xff]
  %v61 = vld [vmem:[%s0 + $0x78] sm:$0xff]
  %v62 = vld [vmem:[%s0 + $0x80] sm:$0xff]
  %v63 = vld [vmem:[%s0 + $0x88] sm:$0xff]
  %v64 = vld [vmem:[%s0 + $0x90] sm:$0xff]
  %v65 = vld [vmem:[%s0 + $0x98] sm:$0xff]
  %v66 = vld [vmem:[%s0 + $0xa0] sm:$0xff]
  %v67 = vld [vmem:[%s0 + $0xa8] sm:$0xff]
  %v68 = vld [vmem:[%s0 + $0xb0] sm:$0xff]
  %v69 = vld [vmem:[%s0 + $0xb8] sm:$0xff]
  %v70 = vld [vmem:[%s0 + $0xc0] sm:$0xff]
  %v71 = vld [vmem:[%s0 + $0xc8] sm:$0xff]
  %v72 = vld [vmem:[%s0 + $0xd0] sm:$0xff]
  %v73 = vld [vmem:[%s0 + $0xd8] sm:$0xff]
  %v74 = vld [vmem:[%s1] sm:$0xf]
  %v75 = vld [vmem:[%s1 + $0x4] sm:$0xf]
  %v76 = vld [vmem:[%s1 + $0x8] sm:$0xf]
  %v77 = vld [vmem:[%s1 + $0xc] sm:$0xf]
  %v78 = vld [vmem:[%s1 + $0x10] sm:$0xf]
  %v79 = vld [vmem:[%s1 + $0x14] sm:$0xf]
  %v80 = vld [vmem:[%s1 + $0x18] sm:$0xf]
  %v81 = vld [vmem:[%s1 + $0x1c] sm:$0xf]
  %v82 = vld [vmem:[%s1 + $0x20] sm:$0xf]
  %v83 = vld [vmem:[%s1 + $0x24] sm:$0xf]
  %v84 = vld [vmem:[%s1 + $0x28] sm:$0xf]
  %v85 = vld [vmem:[%s1 + $0x2c] sm:$0xf]
  %v86 = vld [vmem:[%s1 + $0x30] sm:$0xf]
  %v87 = vld [vmem:[%s1 + $0x34] sm:$0xf]
  %v88 = vld [vmem:[%s1 + $0x38] sm:$0xf]
  %v89 = vld [vmem:[%s1 + $0x3c] sm:$0xf]
  %v90 = vld [vmem:[%s1 + $0x40] sm:$0xf]
  %v91 = vld [vmem:[%s1 + $0x44] sm:$0xf]
  %v92 = vld [vmem:[%s1 + $0x48] sm:$0xf]
  %v93 = vld [vmem:[%s1 + $0x4c] sm:$0xf]
  %v94 = vld [vmem:[%s1 + $0x50] sm:$0xf]
  %v95 = vld [vmem:[%s1 + $0x54] sm:$0xf]
  %v96 = vld [vmem:[%s1 + $0x58] sm:$0xf]
  %v97 = vld [vmem:[%s1 + $0x5c] sm:$0xf]
  %v98 = vld [vmem:[%s1 + $0x60] sm:$0xf]
  %v99 = vld [vmem:[%s1 + $0x64] sm:$0xf]
  %v100 = vld [vmem:[%s1 + $0x68] sm:$0xf]
  %v101 = vld [vmem:[%s1 + $0x6c] sm:$0xf]
  %v102 = vld [vmem:[%s1 + $0x70] sm:$0xf]
  %v103 = vld [vmem:[%s1 + $0x74] sm:$0xf]
  %v104 = vld [vmem:[%s1 + $0x78] sm:$0xf]
  %v105 = vld [vmem:[%s1 + $0x7c] sm:$0xf]
  %v106 = vld [vmem:[%s1 + $0x80] sm:$0xf]
  %v107 = vld [vmem:[%s1 + $0x84] sm:$0xf]
  %v108 = vld [vmem:[%s1 + $0x88] sm:$0xf]
  %v109 = vld [vmem:[%s1 + $0x8c] sm:$0xf]
  %v110 = vld [vmem:[%s1 + $0x90] sm:$0xf]
  %v111 = vld [vmem:[%s1 + $0x94] sm:$0xf]
  %v112 = vld [vmem:[%s1 + $0x98] sm:$0xf]
  %v113 = vld [vmem:[%s1 + $0x9c] sm:$0xf]
  %v114 = vld [vmem:[%s1 + $0xa0] sm:$0xf]
  %v115 = vld [vmem:[%s1 + $0xa4] sm:$0xf]
  %v116 = vld [vmem:[%s1 + $0xa8] sm:$0xf]
  %v117 = vld [vmem:[%s1 + $0xac] sm:$0xf]
  %v118 = vld [vmem:[%s1 + $0xb0] sm:$0xf]
  %v119 = vld [vmem:[%s1 + $0xb4] sm:$0xf]
  %v120 = vld [vmem:[%s1 + $0xb8] sm:$0xf]
  %v121 = vld [vmem:[%s1 + $0xbc] sm:$0xf]
  %v122 = vld [vmem:[%s1 + $0xc0] sm:$0xf]
  %v123 = vld [vmem:[%s1 + $0xc4] sm:$0xf]
  %v124 = vld [vmem:[%s1 + $0xc8] sm:$0xf]
  %v125 = vld [vmem:[%s1 + $0xcc] sm:$0xf]
  %v126 = vld [vmem:[%s1 + $0xd0] sm:$0xf]
  %v127 = vld [vmem:[%s1 + $0xd4] sm:$0xf]
  %v128 = vld [vmem:[%s1 + $0xd8] sm:$0xf]
  %v129 = vld [vmem:[%s1 + $0xdc] sm:$0xf]
  %v130 = vld [vmem:[%s1 + $0xe0] sm:$0xf]
  %v131 = vld [vmem:[%s1 + $0xe4] sm:$0xf]
  %v132 = vld [vmem:[%s1 + $0xe8] sm:$0xf]
  %v133 = vld [vmem:[%s1 + $0xec] sm:$0xf]
  %v134 = vld [vmem:[%s1 + $0xf0] sm:$0xf]
  %v135 = vld [vmem:[%s1 + $0xf4] sm:$0xf]
  %v136 = vld [vmem:[%s1 + $0xf8] sm:$0xf]
  %v137 = vld [vmem:[%s1 + $0xfc] sm:$0xf]
  %v166 = vunpack.c.l.b16 %v46
  %v167 = vunpack.c.h.b16 %v46
  %v168 = vunpack.c.l.b16 %v47
  %v169 = vunpack.c.h.b16 %v47
  %v170 = vunpack.c.l.b16 %v48
  %v171 = vunpack.c.h.b16 %v48
  %v172 = vunpack.c.l.b16 %v49
  %v173 = vunpack.c.h.b16 %v49
  %v174 = vunpack.c.l.b16 %v50
  %v175 = vunpack.c.h.b16 %v50
  %v176 = vunpack.c.l.b16 %v51
  %v177 = vunpack.c.h.b16 %v51
  %v178 = vunpack.c.l.b16 %v52
  %v179 = vunpack.c.h.b16 %v52
  %v180 = vunpack.c.l.b16 %v53
  %v181 = vunpack.c.h.b16 %v53
  %v182 = vunpack.c.l.b16 %v54
  %v183 = vunpack.c.h.b16 %v54
  %v184 = vunpack.c.l.b16 %v55
  %v185 = vunpack.c.h.b16 %v55
  %v186 = vunpack.c.l.b16 %v56
  %v187 = vunpack.c.h.b16 %v56
  %v188 = vunpack.c.l.b16 %v57
  %v189 = vunpack.c.h.b16 %v57
  %v190 = vunpack.c.l.b16 %v58
  %v191 = vunpack.c.h.b16 %v58
  %v192 = vunpack.c.l.b16 %v59
  %v193 = vunpack.c.h.b16 %v59
  %v194 = vunpack.c.l.b16 %v60
  %v195 = vunpack.c.h.b16 %v60
  %v196 = vunpack.c.l.b16 %v61
  %v197 = vunpack.c.h.b16 %v61
  %v198 = vunpack.c.l.b16 %v62
  %v199 = vunpack.c.h.b16 %v62
  %v200 = vunpack.c.l.b16 %v63
  %v201 = vunpack.c.h.b16 %v63
  %v202 = vunpack.c.l.b16 %v64
  %v203 = vunpack.c.h.b16 %v64
  %v204 = vunpack.c.l.b16 %v65
  %v205 = vunpack.c.h.b16 %v65
  %v206 = vunpack.c.l.b16 %v66
  %v207 = vunpack.c.h.b16 %v66
  %v208 = vunpack.c.l.b16 %v67
  %v209 = vunpack.c.h.b16 %v67
  %v210 = vunpack.c.l.b16 %v68
  %v211 = vunpack.c.h.b16 %v68
  %v212 = vunpack.c.l.b16 %v69
  %v213 = vunpack.c.h.b16 %v69
  %v214 = vunpack.c.l.b16 %v70
  %v215 = vunpack.c.h.b16 %v70
  %v216 = vunpack.c.l.b16 %v71
  %v217 = vunpack.c.h.b16 %v71
  %v218 = vunpack.c.l.b16 %v72
  %v219 = vunpack.c.h.b16 %v72
  %v220 = vunpack.c.l.b16 %v73
  %v221 = vunpack.c.h.b16 %v73
  %v222 = vpack.c.b16 %v170, %v166
  %v223 = vpack.c.b16 %v171, %v167
  %v224 = vpack.c.b16 %v172, %v168
  %v225 = vpack.c.b16 %v173, %v169
  %v226 = vpack.c.b16 %v178, %v174
  %v227 = vpack.c.b16 %v179, %v175
  %v228 = vpack.c.b16 %v180, %v176
  %v229 = vpack.c.b16 %v181, %v177
  %v230 = vpack.c.b16 %v186, %v182
  %v231 = vpack.c.b16 %v187, %v183
  %v232 = vpack.c.b16 %v188, %v184
  %v233 = vpack.c.b16 %v189, %v185
  %v234 = vpack.c.b16 %v194, %v190
  %v235 = vpack.c.b16 %v195, %v191
  %v236 = vpack.c.b16 %v196, %v192
  %v237 = vpack.c.b16 %v197, %v193
  %v238 = vpack.c.b16 %v202, %v198
  %v239 = vpack.c.b16 %v203, %v199
  %v240 = vpack.c.b16 %v204, %v200
  %v241 = vpack.c.b16 %v205, %v201
  %v242 = vpack.c.b16 %v210, %v206
  %v243 = vpack.c.b16 %v211, %v207
  %v244 = vpack.c.b16 %v212, %v208
  %v245 = vpack.c.b16 %v213, %v209
  %v246 = vpack.c.b16 %v218, %v214
  %v247 = vpack.c.b16 %v219, %v215
  %v248 = vpack.c.b16 %v220, %v216
  %v249 = vpack.c.b16 %v221, %v217
  %v342 = vunpack.c.l.b16 %v74
  %v343 = vunpack.c.l.b16 %v75
  %v344 = vunpack.c.l.b16 %v76
  %v345 = vunpack.c.l.b16 %v77
  %v346 = vunpack.c.l.b16 %v78
  %v347 = vunpack.c.l.b16 %v79
  %v348 = vunpack.c.l.b16 %v80
  %v349 = vunpack.c.l.b16 %v81
  %v350 = vunpack.c.l.b16 %v82
  %v351 = vunpack.c.l.b16 %v83
  %v352 = vunpack.c.l.b16 %v84
  %v353 = vunpack.c.l.b16 %v85
  %v354 = vunpack.c.l.b16 %v86
  %v355 = vunpack.c.l.b16 %v87
  %v356 = vunpack.c.l.b16 %v88
  %v357 = vunpack.c.l.b16 %v89
  %v358 = vunpack.c.l.b16 %v90
  %v359 = vunpack.c.l.b16 %v91
  %v360 = vunpack.c.l.b16 %v92
  %v361 = vunpack.c.l.b16 %v93
  %v362 = vunpack.c.l.b16 %v94
  %v363 = vunpack.c.l.b16 %v95
  %v364 = vunpack.c.l.b16 %v96
  %v365 = vunpack.c.l.b16 %v97
  %v366 = vunpack.c.l.b16 %v98
  %v367 = vunpack.c.l.b16 %v99
  %v368 = vunpack.c.l.b16 %v100
  %v369 = vunpack.c.l.b16 %v101
  %v370 = vunpack.c.l.b16 %v102
  %v371 = vunpack.c.l.b16 %v103
  %v372 = vunpack.c.l.b16 %v104
  %v373 = vunpack.c.l.b16 %v105
  %v374 = vunpack.c.l.b16 %v106
  %v375 = vunpack.c.l.b16 %v107
  %v376 = vunpack.c.l.b16 %v108
  %v377 = vunpack.c.l.b16 %v109
  %v378 = vunpack.c.l.b16 %v110
  %v379 = vunpack.c.l.b16 %v111
  %v380 = vunpack.c.l.b16 %v112
  %v381 = vunpack.c.l.b16 %v113
  %v382 = vunpack.c.l.b16 %v114
  %v383 = vunpack.c.l.b16 %v115
  %v384 = vunpack.c.l.b16 %v116
  %v385 = vunpack.c.l.b16 %v117
  %v386 = vunpack.c.l.b16 %v118
  %v387 = vunpack.c.l.b16 %v119
  %v388 = vunpack.c.l.b16 %v120
  %v389 = vunpack.c.l.b16 %v121
  %v390 = vunpack.c.l.b16 %v122
  %v391 = vunpack.c.l.b16 %v123
  %v392 = vunpack.c.l.b16 %v124
  %v393 = vunpack.c.l.b16 %v125
  %v394 = vunpack.c.l.b16 %v126
  %v395 = vunpack.c.l.b16 %v127
  %v396 = vunpack.c.l.b16 %v128
  %v397 = vunpack.c.l.b16 %v129
  %v398 = vunpack.c.l.b16 %v130
  %v399 = vunpack.c.l.b16 %v131
  %v400 = vunpack.c.l.b16 %v132
  %v401 = vunpack.c.l.b16 %v133
  %v402 = vunpack.c.l.b16 %v134
  %v403 = vunpack.c.l.b16 %v135
  %v404 = vunpack.c.l.b16 %v136
  %v405 = vunpack.c.l.b16 %v137
  %v406 = vpack.c.b16 %v343, %v342
  %v407 = vpack.c.b16 %v345, %v344
  %v408 = vpack.c.b16 %v347, %v346
  %v409 = vpack.c.b16 %v349, %v348
  %v410 = vpack.c.b16 %v351, %v350
  %v411 = vpack.c.b16 %v353, %v352
  %v412 = vpack.c.b16 %v355, %v354
  %v413 = vpack.c.b16 %v357, %v356
  %v414 = vpack.c.b16 %v359, %v358
  %v415 = vpack.c.b16 %v361, %v360
  %v416 = vpack.c.b16 %v363, %v362
  %v417 = vpack.c.b16 %v365, %v364
  %v418 = vpack.c.b16 %v367, %v366
  %v419 = vpack.c.b16 %v369, %v368
  %v420 = vpack.c.b16 %v371, %v370
  %v421 = vpack.c.b16 %v373, %v372
  %v422 = vpack.c.b16 %v375, %v374
  %v423 = vpack.c.b16 %v377, %v376
  %v424 = vpack.c.b16 %v379, %v378
  %v425 = vpack.c.b16 %v381, %v380
  %v426 = vpack.c.b16 %v383, %v382
  %v427 = vpack.c.b16 %v385, %v384
  %v428 = vpack.c.b16 %v387, %v386
  %v429 = vpack.c.b16 %v389, %v388
  %v430 = vpack.c.b16 %v391, %v390
  %v431 = vpack.c.b16 %v393, %v392
  %v432 = vpack.c.b16 %v395, %v394
  %v433 = vpack.c.b16 %v397, %v396
  %v434 = vpack.c.b16 %v399, %v398
  %v435 = vpack.c.b16 %v401, %v400
  %v436 = vpack.c.b16 %v403, %v402
  %v437 = vpack.c.b16 %v405, %v404
  %470 = vmatpush.bf16.msra.mxu0 %v413
  %471 = vmatpush.bf16.msra.mxu0 %v412
  %472 = vmatpush.bf16.msra.mxu0 %v411
  %473 = vmatpush.bf16.msra.mxu0 %v410
  %474 = vmatpush.bf16.msra.mxu0 %v409
  %475 = vmatpush.bf16.msra.mxu0 %v408
  %476 = vmatpush.bf16.msra.mxu0 %v407
  %477 = vmatpush.bf16.msra.mxu0 %v406
  %478 = vmatmul.bf16.gmra.mxu0 %v222
  %v479 = vpop.f32.mrf.mxu0
  %v480 = vadd.f32 0.0, %v479
  %v481 = vpop.f32.mrf.mxu0
  %v482 = vadd.f32 0.0, %v481
  %483 = vmatmul.bf16.gmra.mxu0 %v226
  %v484 = vpop.f32.mrf.mxu0
  %v485 = vadd.f32 0.0, %v484
  %v486 = vpop.f32.mrf.mxu0
  %v487 = vadd.f32 0.0, %v486
  %488 = vmatmul.bf16.gmra.mxu0 %v230
  %v489 = vpop.f32.mrf.mxu0
  %v490 = vadd.f32 0.0, %v489
  %v491 = vpop.f32.mrf.mxu0
  %v492 = vadd.f32 0.0, %v491
  %493 = vmatmul.bf16.gmra.mxu0 %v234
  %v494 = vpop.f32.mrf.mxu0
  %v495 = vadd.f32 0.0, %v494
  %v496 = vpop.f32.mrf.mxu0
  %v497 = vadd.f32 0.0, %v496
  %498 = vmatmul.bf16.gmra.mxu0 %v238
  %v499 = vpop.f32.mrf.mxu0
  %v500 = vadd.f32 0.0, %v499
  %v501 = vpop.f32.mrf.mxu0
  %v502 = vadd.f32 0.0, %v501
  %503 = vmatmul.bf16.gmra.mxu0 %v242
  %v504 = vpop.f32.mrf.mxu0
  %v505 = vadd.f32 0.0, %v504
  %v506 = vpop.f32.mrf.mxu0
  %v507 = vadd.f32 0.0, %v506
  %508 = vmatmul.bf16.gmra.mxu0 %v246
  %v509 = vpop.f32.mrf.mxu0
  %v510 = vadd.f32 0.0, %v509
  %v511 = vpop.f32.mrf.mxu0
  %v512 = vadd.f32 0.0, %v511
  %513 = vdwg.mxu0
  %514 = vmatpush.bf16.msra.mxu0 %v421
  %515 = vmatpush.bf16.msra.mxu0 %v420
  %516 = vmatpush.bf16.msra.mxu0 %v419
  %517 = vmatpush.bf16.msra.mxu0 %v418
  %518 = vmatpush.bf16.msra.mxu0 %v417
  %519 = vmatpush.bf16.msra.mxu0 %v416
  %520 = vmatpush.bf16.msra.mxu0 %v415
  %521 = vmatpush.bf16.msra.mxu0 %v414
  %522 = vmatmul.bf16.gmra.mxu0 %v223
  %v523 = vpop.f32.mrf.mxu0
  %v524 = vadd.f32 %v480, %v523
  %v525 = vpop.f32.mrf.mxu0
  %v526 = vadd.f32 %v482, %v525
  %527 = vmatmul.bf16.gmra.mxu0 %v227
  %v528 = vpop.f32.mrf.mxu0
  %v529 = vadd.f32 %v485, %v528
  %v530 = vpop.f32.mrf.mxu0
  %v531 = vadd.f32 %v487, %v530
  %532 = vmatmul.bf16.gmra.mxu0 %v231
  %v533 = vpop.f32.mrf.mxu0
  %v534 = vadd.f32 %v490, %v533
  %v535 = vpop.f32.mrf.mxu0
  %v536 = vadd.f32 %v492, %v535
  %537 = vmatmul.bf16.gmra.mxu0 %v235
  %v538 = vpop.f32.mrf.mxu0
  %v539 = vadd.f32 %v495, %v538
  %v540 = vpop.f32.mrf.mxu0
  %v541 = vadd.f32 %v497, %v540
  %542 = vmatmul.bf16.gmra.mxu0 %v239
  %v543 = vpop.f32.mrf.mxu0
  %v544 = vadd.f32 %v500, %v543
  %v545 = vpop.f32.mrf.mxu0
  %v546 = vadd.f32 %v502, %v545
  %547 = vmatmul.bf16.gmra.mxu0 %v243
  %v548 = vpop.f32.mrf.mxu0
  %v549 = vadd.f32 %v505, %v548
  %v550 = vpop.f32.mrf.mxu0
  %v551 = vadd.f32 %v507, %v550
  %552 = vmatmul.bf16.gmra.mxu0 %v247
  %v553 = vpop.f32.mrf.mxu0
  %v554 = vadd.f32 %v510, %v553
  %v555 = vpop.f32.mrf.mxu0
  %v556 = vadd.f32 %v512, %v555
  %557 = vdwg.mxu0
  %558 = vmatpush.bf16.msra.mxu0 %v429
  %559 = vmatpush.bf16.msra.mxu0 %v428
  %560 = vmatpush.bf16.msra.mxu0 %v427
  %561 = vmatpush.bf16.msra.mxu0 %v426
  %562 = vmatpush.bf16.msra.mxu0 %v425
  %563 = vmatpush.bf16.msra.mxu0 %v424
  %564 = vmatpush.bf16.msra.mxu0 %v423
  %565 = vmatpush.bf16.msra.mxu0 %v422
  %566 = vmatmul.bf16.gmra.mxu0 %v224
  %v567 = vpop.f32.mrf.mxu0
  %v568 = vadd.f32 %v524, %v567
  %v569 = vpop.f32.mrf.mxu0
  %v570 = vadd.f32 %v526, %v569
  %571 = vmatmul.bf16.gmra.mxu0 %v228
  %v572 = vpop.f32.mrf.mxu0
  %v573 = vadd.f32 %v529, %v572
  %v574 = vpop.f32.mrf.mxu0
  %v575 = vadd.f32 %v531, %v574
  %576 = vmatmul.bf16.gmra.mxu0 %v232
  %v577 = vpop.f32.mrf.mxu0
  %v578 = vadd.f32 %v534, %v577
  %v579 = vpop.f32.mrf.mxu0
  %v580 = vadd.f32 %v536, %v579
  %581 = vmatmul.bf16.gmra.mxu0 %v236
  %v582 = vpop.f32.mrf.mxu0
  %v583 = vadd.f32 %v539, %v582
  %v584 = vpop.f32.mrf.mxu0
  %v585 = vadd.f32 %v541, %v584
  %586 = vmatmul.bf16.gmra.mxu0 %v240
  %v587 = vpop.f32.mrf.mxu0
  %v588 = vadd.f32 %v544, %v587
  %v589 = vpop.f32.mrf.mxu0
  %v590 = vadd.f32 %v546, %v589
  %591 = vmatmul.bf16.gmra.mxu0 %v244
  %v592 = vpop.f32.mrf.mxu0
  %v593 = vadd.f32 %v549, %v592
  %v594 = vpop.f32.mrf.mxu0
  %v595 = vadd.f32 %v551, %v594
  %596 = vmatmul.bf16.gmra.mxu0 %v248
  %v597 = vpop.f32.mrf.mxu0
  %v598 = vadd.f32 %v554, %v597
  %v599 = vpop.f32.mrf.mxu0
  %v600 = vadd.f32 %v556, %v599
  %601 = vdwg.mxu0
  %602 = vmatpush.bf16.msra.mxu0 %v437
  %603 = vmatpush.bf16.msra.mxu0 %v436
  %604 = vmatpush.bf16.msra.mxu0 %v435
  %605 = vmatpush.bf16.msra.mxu0 %v434
  %606 = vmatpush.bf16.msra.mxu0 %v433
  %607 = vmatpush.bf16.msra.mxu0 %v432
  %608 = vmatpush.bf16.msra.mxu0 %v431
  %609 = vmatpush.bf16.msra.mxu0 %v430
  %610 = vmatmul.bf16.gmra.mxu0 %v225
  %v611 = vpop.f32.mrf.mxu0
  %v612 = vadd.f32 %v568, %v611
  %v613 = vpop.f32.mrf.mxu0
  %v614 = vadd.f32 %v570, %v613
  %615 = vmatmul.bf16.gmra.mxu0 %v229
  %v616 = vpop.f32.mrf.mxu0
  %v617 = vadd.f32 %v573, %v616
  %v618 = vpop.f32.mrf.mxu0
  %v619 = vadd.f32 %v575, %v618
  %620 = vmatmul.bf16.gmra.mxu0 %v233
  %v621 = vpop.f32.mrf.mxu0
  %v622 = vadd.f32 %v578, %v621
  %v623 = vpop.f32.mrf.mxu0
  %v624 = vadd.f32 %v580, %v623
  %625 = vmatmul.bf16.gmra.mxu0 %v237
  %v626 = vpop.f32.mrf.mxu0
  %v627 = vadd.f32 %v583, %v626
  %v628 = vpop.f32.mrf.mxu0
  %v629 = vadd.f32 %v585, %v628
  %630 = vmatmul.bf16.gmra.mxu0 %v241
  %v631 = vpop.f32.mrf.mxu0
  %v632 = vadd.f32 %v588, %v631
  %v633 = vpop.f32.mrf.mxu0
  %v634 = vadd.f32 %v590, %v633
  %635 = vmatmul.bf16.gmra.mxu0 %v245
  %v636 = vpop.f32.mrf.mxu0
  %v637 = vadd.f32 %v593, %v636
  %v638 = vpop.f32.mrf.mxu0
  %v639 = vadd.f32 %v595, %v638
  %640 = vmatmul.bf16.gmra.mxu0 %v249
  %v641 = vpop.f32.mrf.mxu0
  %v642 = vadd.f32 %v598, %v641
  %v643 = vpop.f32.mrf.mxu0
  %v644 = vadd.f32 %v600, %v643
  %645 = vdwg.mxu0
  %v646 = vadd.f32 %v32, %v612
  %v647 = vadd.f32 %v33, %v614
  %v648 = vadd.f32 %v34, %v617
  %v649 = vadd.f32 %v35, %v619
  %v650 = vadd.f32 %v36, %v622
  %v651 = vadd.f32 %v37, %v624
  %v652 = vadd.f32 %v38, %v627
  %v653 = vadd.f32 %v39, %v629
  %v654 = vadd.f32 %v40, %v632
  %v655 = vadd.f32 %v41, %v634
  %v656 = vadd.f32 %v42, %v637
  %v657 = vadd.f32 %v43, %v639
  %v658 = vadd.f32 %v44, %v642
  %v659 = vadd.f32 %v45, %v644
  %660 = vst [vmem:[#allocation2] sm:$0xff] %v646
  %661 = vst [vmem:[#allocation2 + $0x8] sm:$0xff] %v647
  %662 = vst [vmem:[#allocation2 + $0x10] sm:$0xff] %v648
  %663 = vst [vmem:[#allocation2 + $0x18] sm:$0xff] %v649
  %664 = vst [vmem:[#allocation2 + $0x20] sm:$0xff] %v650
  %665 = vst [vmem:[#allocation2 + $0x28] sm:$0xff] %v651
  %666 = vst [vmem:[#allocation2 + $0x30] sm:$0xff] %v652
  %667 = vst [vmem:[#allocation2 + $0x38] sm:$0xff] %v653
  %668 = vst [vmem:[#allocation2 + $0x40] sm:$0xff] %v654
  %669 = vst [vmem:[#allocation2 + $0x48] sm:$0xff] %v655
  %670 = vst [vmem:[#allocation2 + $0x50] sm:$0xff] %v656
  %671 = vst [vmem:[#allocation2 + $0x58] sm:$0xff] %v657
  %672 = vst [vmem:[#allocation2 + $0x60] sm:$0xff] %v658
  %673 = vst [vmem:[#allocation2 + $0x68] sm:$0xff] %v659
  // Predicated region
  $region18: #{phasenet_forward.7} parent=0 // pred_check
    %p674 = pneg %p14
  $region19: #{phasenet_forward.7} parent=0 // pred_check_branch
    %676 = sbr.rel (%p674) target = $region21
  $region20: #{phasenet_forward.7} parent=0 // pred_region
    %v677 = vld [vmem:[#allocation2] sm:$0xff]
    %v678 = vld [vmem:[#allocation2 + $0x8] sm:$0xff]
    %v679 = vld [vmem:[#allocation2 + $0x10] sm:$0xff]
    %v680 = vld [vmem:[#allocation2 + $0x18] sm:$0xff]
    %v681 = vld [vmem:[#allocation2 + $0x20] sm:$0xff]
    %v682 = vld [vmem:[#allocation2 + $0x28] sm:$0xff]
    %v683 = vld [vmem:[#allocation2 + $0x30] sm:$0xff]
    %v684 = vld [vmem:[#allocation2 + $0x38] sm:$0xff]
    %v685 = vld [vmem:[#allocation2 + $0x40] sm:$0xff]
    %v686 = vld [vmem:[#allocation2 + $0x48] sm:$0xff]
    %v687 = vld [vmem:[#allocation2 + $0x50] sm:$0xff]
    %v688 = vld [vmem:[#allocation2 + $0x58] sm:$0xff]
    %v689 = vld [vmem:[#allocation2 + $0x60] sm:$0xff]
    %v690 = vld [vmem:[#allocation2 + $0x68] sm:$0xff]
    %v691 = vld [vmem:[%s2] sm:$0x1]
    %v693 = vperm.slane %v691, 0
    %v695 = vadd.f32 %v677, %v693
    %v696 = vadd.f32 %v678, %v693
    %v697 = vadd.f32 %v679, %v693
    %v698 = vadd.f32 %v680, %v693
    %v699 = vadd.f32 %v681, %v693
    %v700 = vadd.f32 %v682, %v693
    %v701 = vadd.f32 %v683, %v693
    %v702 = vadd.f32 %v684, %v693
    %v703 = vadd.f32 %v685, %v693
    %v704 = vadd.f32 %v686, %v693
    %v705 = vadd.f32 %v687, %v693
    %v706 = vadd.f32 %v688, %v693
    %v707 = vadd.f32 %v689, %v693
    %v708 = vadd.f32 %v690, %v693
    %v709 = vmax.f32 %v695, 0.0
    %v710 = vmax.f32 %v696, 0.0
    %v711 = vmax.f32 %v697, 0.0
    %v712 = vmax.f32 %v698, 0.0
    %v713 = vmax.f32 %v699, 0.0
    %v714 = vmax.f32 %v700, 0.0
    %v715 = vmax.f32 %v701, 0.0
    %v716 = vmax.f32 %v702, 0.0
    %v717 = vmax.f32 %v703, 0.0
    %v718 = vmax.f32 %v704, 0.0
    %v719 = vmax.f32 %v705, 0.0
    %v720 = vmax.f32 %v706, 0.0
    %v721 = vmax.f32 %v707, 0.0
    %v722 = vmax.f32 %v708, 0.0
    %723 = vst [vmem:[%s3] sm:$0xff] %v709
    %724 = vst [vmem:[%s3 + $0x8] sm:$0xff] %v710
    %725 = vst [vmem:[%s3 + $0x10] sm:$0xff] %v711
    %726 = vst [vmem:[%s3 + $0x18] sm:$0xff] %v712
    %727 = vst [vmem:[%s3 + $0x20] sm:$0xff] %v713
    %728 = vst [vmem:[%s3 + $0x28] sm:$0xff] %v714
    %729 = vst [vmem:[%s3 + $0x30] sm:$0xff] %v715
    %730 = vst [vmem:[%s3 + $0x38] sm:$0xff] %v716
    %731 = vst [vmem:[%s3 + $0x40] sm:$0xff] %v717
    %732 = vst [vmem:[%s3 + $0x48] sm:$0xff] %v718
    %733 = vst [vmem:[%s3 + $0x50] sm:$0xff] %v719
    %734 = vst [vmem:[%s3 + $0x58] sm:$0xff] %v720
    %735 = vst [vmem:[%s3 + $0x60] sm:$0xff] %v721
    %736 = vst [vmem:[%s3 + $0x68] sm:$0xff] %v722
  $region21: #{phasenet_forward.7} parent=0 // pred_fallthru
    _
  // Predicated region
  $region22: #{phasenet_forward.7} parent=0 // pred_check
    _
  $region23: #{phasenet_forward.7} parent=0 // pred_check_branch
    %738 = sbr.rel (0) target = $region25
  $region24: #{phasenet_forward.7} parent=0 // pred_region
    _
  $region25: #{phasenet_forward.7} parent=0 // pred_fallthru
    _
  // Predicated region
  $region26: #{phasenet_forward.7} parent=0 // pred_check
    _
  $region27: #{phasenet_forward.7} parent=0 // pred_check_branch
    %740 = sbr.rel (0) target = $region29
  $region28: #{phasenet_forward.7} parent=0 // pred_region
    _
  $region29: #{phasenet_forward.7} parent=0 // pred_fallthru
    _

// kernel: phasenet_forward.8
$region0: #{phasenet_forward.8}
  #allocation0 [shape = 'u32[]', space=smem, size = 0x4, offset = 0x4, fixed_abs, tag = 'smem constant byte address 0x4 - core index']
  #allocation1 [shape = 'u32[72,128]{1,0:T(1,128)}', space=vmem, size = 0x9000, scoped, tag = 'internal scratch']
  #allocation2 [shape = 'f32[32,128]{1,0:T(8,128)}', space=vmem, size = 0x4000, scoped, tag = 'scratch operand']
  %s0 = inlined_call_operand.vmem [shape: bf16[32,384], index: 0, kind: input, shape index: {}]
  %s1 = inlined_call_operand.vmem [shape: bf16[384,128], index: 1, kind: input, shape index: {}]
  %s2 = inlined_call_operand.vmem [shape: f32[1,128], index: 2, kind: input, shape index: {}]
  %s3 = inlined_call_operand.vmem [shape: f32[32,128], index: 3, kind: output, shape index: {}]
  %s4 = sld [smem:[#allocation0]]
  $region30: #{phasenet_forward.8} parent=0
    _
  %s6 = ssub.s32 1, %s4
  %s7 = scalar_select 0, %s6, %s4
  // Predicated region
  $region2: #{phasenet_forward.8} parent=0 // pred_check
    _
  $region3: #{phasenet_forward.8} parent=0 // pred_check_branch
    %9 = sbr.rel (0) target = $region5
  $region4: #{phasenet_forward.8} parent=0 // pred_region
    _
  $region5: #{phasenet_forward.8} parent=0 // pred_fallthru
    _
  // Predicated region
  $region6: #{phasenet_forward.8} parent=0 // pred_check
    _
  $region7: #{phasenet_forward.8} parent=0 // pred_check_branch
    %11 = sbr.rel (0) target = $region9
  $region8: #{phasenet_forward.8} parent=0 // pred_region
    _
  $region9: #{phasenet_forward.8} parent=0 // pred_fallthru
    _
  // Predicated region
  $region10: #{phasenet_forward.8} parent=0 // pred_check
    _
  $region11: #{phasenet_forward.8} parent=0 // pred_check_branch
    %13 = sbr.rel (0) target = $region13
  $region12: #{phasenet_forward.8} parent=0 // pred_region
    _
  $region13: #{phasenet_forward.8} parent=0 // pred_fallthru
    _
  %p14 = scmp.eq.s32.totalorder 0, 0
  // Predicated region
  $region14: #{phasenet_forward.8} parent=0 // pred_check
    %p15 = pneg %p14
  $region15: #{phasenet_forward.8} parent=0 // pred_check_branch
    %17 = sbr.rel (%p15) target = $region17
  $region16: #{phasenet_forward.8} parent=0 // pred_region
    %18 = vst [vmem:[#allocation2] sm:$0xff] 0.0
    %19 = vst [vmem:[#allocation2 + $0x8] sm:$0xff] 0.0
    %20 = vst [vmem:[#allocation2 + $0x10] sm:$0xff] 0.0
    %21 = vst [vmem:[#allocation2 + $0x18] sm:$0xff] 0.0
  $region17: #{phasenet_forward.8} parent=0 // pred_fallthru
    _
  %v22 = vld [vmem:[#allocation2] sm:$0xff]
  %v23 = vld [vmem:[#allocation2 + $0x8] sm:$0xff]
  %v24 = vld [vmem:[#allocation2 + $0x10] sm:$0xff]
  %v25 = vld [vmem:[#allocation2 + $0x18] sm:$0xff]
  %v26 = vld [vmem:[%s0] sm:$0xff]
  %v27 = vld [vmem:[%s0 + $0x8] sm:$0xf]
  %v28 = vld [vmem:[%s0 + $0xc] sm:$0xff]
  %v29 = vld [vmem:[%s0 + $0x14] sm:$0xf]
  %v30 = vld [vmem:[%s0 + $0x18] sm:$0xff]
  %v31 = vld [vmem:[%s0 + $0x20] sm:$0xf]
  %v32 = vld [vmem:[%s0 + $0x24] sm:$0xff]
  %v33 = vld [vmem:[%s0 + $0x2c] sm:$0xf]
  %v34 = vld [vmem:[%s1] sm:$0xf]
  %v35 = vld [vmem:[%s1 + $0x4] sm:$0xf]
  %v36 = vld [vmem:[%s1 + $0x8] sm:$0xf]
  %v37 = vld [vmem:[%s1 + $0xc] sm:$0xf]
  %v38 = vld [vmem:[%s1 + $0x10] sm:$0xf]
  %v39 = vld [vmem:[%s1 + $0x14] sm:$0xf]
  %v40 = vld [vmem:[%s1 + $0x18] sm:$0xf]
  %v41 = vld [vmem:[%s1 + $0x1c] sm:$0xf]
  %v42 = vld [vmem:[%s1 + $0x20] sm:$0xf]
  %v43 = vld [vmem:[%s1 + $0x24] sm:$0xf]
  %v44 = vld [vmem:[%s1 + $0x28] sm:$0xf]
  %v45 = vld [vmem:[%s1 + $0x2c] sm:$0xf]
  %v46 = vld [vmem:[%s1 + $0x30] sm:$0xf]
  %v47 = vld [vmem:[%s1 + $0x34] sm:$0xf]
  %v48 = vld [vmem:[%s1 + $0x38] sm:$0xf]
  %v49 = vld [vmem:[%s1 + $0x3c] sm:$0xf]
  %v50 = vld [vmem:[%s1 + $0x40] sm:$0xf]
  %v51 = vld [vmem:[%s1 + $0x44] sm:$0xf]
  %v52 = vld [vmem:[%s1 + $0x48] sm:$0xf]
  %v53 = vld [vmem:[%s1 + $0x4c] sm:$0xf]
  %v54 = vld [vmem:[%s1 + $0x50] sm:$0xf]
  %v55 = vld [vmem:[%s1 + $0x54] sm:$0xf]
  %v56 = vld [vmem:[%s1 + $0x58] sm:$0xf]
  %v57 = vld [vmem:[%s1 + $0x5c] sm:$0xf]
  %v58 = vld [vmem:[%s1 + $0x60] sm:$0xf]
  %v59 = vld [vmem:[%s1 + $0x64] sm:$0xf]
  %v60 = vld [vmem:[%s1 + $0x68] sm:$0xf]
  %v61 = vld [vmem:[%s1 + $0x6c] sm:$0xf]
  %v62 = vld [vmem:[%s1 + $0x70] sm:$0xf]
  %v63 = vld [vmem:[%s1 + $0x74] sm:$0xf]
  %v64 = vld [vmem:[%s1 + $0x78] sm:$0xf]
  %v65 = vld [vmem:[%s1 + $0x7c] sm:$0xf]
  %v66 = vld [vmem:[%s1 + $0x80] sm:$0xf]
  %v67 = vld [vmem:[%s1 + $0x84] sm:$0xf]
  %v68 = vld [vmem:[%s1 + $0x88] sm:$0xf]
  %v69 = vld [vmem:[%s1 + $0x8c] sm:$0xf]
  %v70 = vld [vmem:[%s1 + $0x90] sm:$0xf]
  %v71 = vld [vmem:[%s1 + $0x94] sm:$0xf]
  %v72 = vld [vmem:[%s1 + $0x98] sm:$0xf]
  %v73 = vld [vmem:[%s1 + $0x9c] sm:$0xf]
  %v74 = vld [vmem:[%s1 + $0xa0] sm:$0xf]
  %v75 = vld [vmem:[%s1 + $0xa4] sm:$0xf]
  %v76 = vld [vmem:[%s1 + $0xa8] sm:$0xf]
  %v77 = vld [vmem:[%s1 + $0xac] sm:$0xf]
  %v78 = vld [vmem:[%s1 + $0xb0] sm:$0xf]
  %v79 = vld [vmem:[%s1 + $0xb4] sm:$0xf]
  %v80 = vld [vmem:[%s1 + $0xb8] sm:$0xf]
  %v81 = vld [vmem:[%s1 + $0xbc] sm:$0xf]
  %v90 = vunpack.c.l.b16 %v26
  %v91 = vunpack.c.h.b16 %v26
  %v92 = vunpack.c.l.b16 %v27
  %v93 = vunpack.c.l.b16 %v28
  %v94 = vunpack.c.h.b16 %v28
  %v95 = vunpack.c.l.b16 %v29
  %v96 = vunpack.c.l.b16 %v30
  %v97 = vunpack.c.h.b16 %v30
  %v98 = vunpack.c.l.b16 %v31
  %v99 = vunpack.c.l.b16 %v32
  %v100 = vunpack.c.h.b16 %v32
  %v101 = vunpack.c.l.b16 %v33
  %v102 = vpack.c.b16 %v93, %v90
  %v103 = vpack.c.b16 %v94, %v91
  %v104 = vpack.c.b16 %v95, %v92
  %v105 = vpack.c.b16 %v99, %v96
  %v106 = vpack.c.b16 %v100, %v97
  %v107 = vpack.c.b16 %v101, %v98
  %v162 = vunpack.c.l.b16 %v34
  %v163 = vunpack.c.l.b16 %v35
  %v164 = vunpack.c.l.b16 %v36
  %v165 = vunpack.c.l.b16 %v37
  %v166 = vunpack.c.l.b16 %v38
  %v167 = vunpack.c.l.b16 %v39
  %v168 = vunpack.c.l.b16 %v40
  %v169 = vunpack.c.l.b16 %v41
  %v170 = vunpack.c.l.b16 %v42
  %v171 = vunpack.c.l.b16 %v43
  %v172 = vunpack.c.l.b16 %v44
  %v173 = vunpack.c.l.b16 %v45
  %v174 = vunpack.c.l.b16 %v46
  %v175 = vunpack.c.l.b16 %v47
  %v176 = vunpack.c.l.b16 %v48
  %v177 = vunpack.c.l.b16 %v49
  %v178 = vunpack.c.l.b16 %v50
  %v179 = vunpack.c.l.b16 %v51
  %v180 = vunpack.c.l.b16 %v52
  %v181 = vunpack.c.l.b16 %v53
  %v182 = vunpack.c.l.b16 %v54
  %v183 = vunpack.c.l.b16 %v55
  %v184 = vunpack.c.l.b16 %v56
  %v185 = vunpack.c.l.b16 %v57
  %v186 = vunpack.c.l.b16 %v58
  %v187 = vunpack.c.l.b16 %v59
  %v188 = vunpack.c.l.b16 %v60
  %v189 = vunpack.c.l.b16 %v61
  %v190 = vunpack.c.l.b16 %v62
  %v191 = vunpack.c.l.b16 %v63
  %v192 = vunpack.c.l.b16 %v64
  %v193 = vunpack.c.l.b16 %v65
  %v194 = vunpack.c.l.b16 %v66
  %v195 = vunpack.c.l.b16 %v67
  %v196 = vunpack.c.l.b16 %v68
  %v197 = vunpack.c.l.b16 %v69
  %v198 = vunpack.c.l.b16 %v70
  %v199 = vunpack.c.l.b16 %v71
  %v200 = vunpack.c.l.b16 %v72
  %v201 = vunpack.c.l.b16 %v73
  %v202 = vunpack.c.l.b16 %v74
  %v203 = vunpack.c.l.b16 %v75
  %v204 = vunpack.c.l.b16 %v76
  %v205 = vunpack.c.l.b16 %v77
  %v206 = vunpack.c.l.b16 %v78
  %v207 = vunpack.c.l.b16 %v79
  %v208 = vunpack.c.l.b16 %v80
  %v209 = vunpack.c.l.b16 %v81
  %v210 = vpack.c.b16 %v163, %v162
  %v211 = vpack.c.b16 %v165, %v164
  %v212 = vpack.c.b16 %v167, %v166
  %v213 = vpack.c.b16 %v169, %v168
  %v214 = vpack.c.b16 %v171, %v170
  %v215 = vpack.c.b16 %v173, %v172
  %v216 = vpack.c.b16 %v175, %v174
  %v217 = vpack.c.b16 %v177, %v176
  %v218 = vpack.c.b16 %v179, %v178
  %v219 = vpack.c.b16 %v181, %v180
  %v220 = vpack.c.b16 %v183, %v182
  %v221 = vpack.c.b16 %v185, %v184
  %v222 = vpack.c.b16 %v187, %v186
  %v223 = vpack.c.b16 %v189, %v188
  %v224 = vpack.c.b16 %v191, %v190
  %v225 = vpack.c.b16 %v193, %v192
  %v226 = vpack.c.b16 %v195, %v194
  %v227 = vpack.c.b16 %v197, %v196
  %v228 = vpack.c.b16 %v199, %v198
  %v229 = vpack.c.b16 %v201, %v200
  %v230 = vpack.c.b16 %v203, %v202
  %v231 = vpack.c.b16 %v205, %v204
  %v232 = vpack.c.b16 %v207, %v206
  %v233 = vpack.c.b16 %v209, %v208
  %258 = vmatpush.bf16.msra.mxu0 %v217
  %259 = vmatpush.bf16.msra.mxu0 %v216
  %260 = vmatpush.bf16.msra.mxu0 %v215
  %261 = vmatpush.bf16.msra.mxu0 %v214
  %262 = vmatpush.bf16.msra.mxu0 %v213
  %263 = vmatpush.bf16.msra.mxu0 %v212
  %264 = vmatpush.bf16.msra.mxu0 %v211
  %265 = vmatpush.bf16.msra.mxu0 %v210
  %266 = vmatmul.bf16.gmra.mxu0 %v102
  %v267 = vpop.f32.mrf.mxu0
  %v268 = vadd.f32 0.0, %v267
  %v269 = vpop.f32.mrf.mxu0
  %v270 = vadd.f32 0.0, %v269
  %271 = vmatmul.bf16.gmra.mxu0 %v105
  %v272 = vpop.f32.mrf.mxu0
  %v273 = vadd.f32 0.0, %v272
  %v274 = vpop.f32.mrf.mxu0
  %v275 = vadd.f32 0.0, %v274
  %276 = vdwg.mxu0
  %277 = vmatpush.bf16.msra.mxu0 %v225
  %278 = vmatpush.bf16.msra.mxu0 %v224
  %279 = vmatpush.bf16.msra.mxu0 %v223
  %280 = vmatpush.bf16.msra.mxu0 %v222
  %281 = vmatpush.bf16.msra.mxu0 %v221
  %282 = vmatpush.bf16.msra.mxu0 %v220
  %283 = vmatpush.bf16.msra.mxu0 %v219
  %284 = vmatpush.bf16.msra.mxu0 %v218
  %285 = vmatmul.bf16.gmra.mxu0 %v103
  %v286 = vpop.f32.mrf.mxu0
  %v287 = vadd.f32 %v268, %v286
  %v288 = vpop.f32.mrf.mxu0
  %v289 = vadd.f32 %v270, %v288
  %290 = vmatmul.bf16.gmra.mxu0 %v106
  %v291 = vpop.f32.mrf.mxu0
  %v292 = vadd.f32 %v273, %v291
  %v293 = vpop.f32.mrf.mxu0
  %v294 = vadd.f32 %v275, %v293
  %295 = vdwg.mxu0
  %296 = vmatpush.bf16.msra.mxu0 %v233
  %297 = vmatpush.bf16.msra.mxu0 %v232
  %298 = vmatpush.bf16.msra.mxu0 %v231
  %299 = vmatpush.bf16.msra.mxu0 %v230
  %300 = vmatpush.bf16.msra.mxu0 %v229
  %301 = vmatpush.bf16.msra.mxu0 %v228
  %302 = vmatpush.bf16.msra.mxu0 %v227
  %303 = vmatpush.bf16.msra.mxu0 %v226
  %304 = vmatmul.bf16.gmra.mxu0 %v104
  %v305 = vpop.f32.mrf.mxu0
  %v306 = vadd.f32 %v287, %v305
  %v307 = vpop.f32.mrf.mxu0
  %v308 = vadd.f32 %v289, %v307
  %309 = vmatmul.bf16.gmra.mxu0 %v107
  %v310 = vpop.f32.mrf.mxu0
  %v311 = vadd.f32 %v292, %v310
  %v312 = vpop.f32.mrf.mxu0
  %v313 = vadd.f32 %v294, %v312
  %314 = vdwg.mxu0
  %v315 = vadd.f32 %v22, %v306
  %v316 = vadd.f32 %v23, %v308
  %v317 = vadd.f32 %v24, %v311
  %v318 = vadd.f32 %v25, %v313
  %319 = vst [vmem:[#allocation2] sm:$0xff] %v315
  %320 = vst [vmem:[#allocation2 + $0x8] sm:$0xff] %v316
  %321 = vst [vmem:[#allocation2 + $0x10] sm:$0xff] %v317
  %322 = vst [vmem:[#allocation2 + $0x18] sm:$0xff] %v318
  // Predicated region
  $region18: #{phasenet_forward.8} parent=0 // pred_check
    %p323 = pneg %p14
  $region19: #{phasenet_forward.8} parent=0 // pred_check_branch
    %325 = sbr.rel (%p323) target = $region21
  $region20: #{phasenet_forward.8} parent=0 // pred_region
    %v326 = vld [vmem:[#allocation2] sm:$0xff]
    %v327 = vld [vmem:[#allocation2 + $0x8] sm:$0xff]
    %v328 = vld [vmem:[#allocation2 + $0x10] sm:$0xff]
    %v329 = vld [vmem:[#allocation2 + $0x18] sm:$0xff]
    %v330 = vld [vmem:[%s2] sm:$0x1]
    %v332 = vperm.slane %v330, 0
    %v334 = vadd.f32 %v326, %v332
    %v335 = vadd.f32 %v327, %v332
    %v336 = vadd.f32 %v328, %v332
    %v337 = vadd.f32 %v329, %v332
    %v338 = vmax.f32 %v334, 0.0
    %v339 = vmax.f32 %v335, 0.0
    %v340 = vmax.f32 %v336, 0.0
    %v341 = vmax.f32 %v337, 0.0
    %342 = vst [vmem:[%s3] sm:$0xff] %v338
    %343 = vst [vmem:[%s3 + $0x8] sm:$0xff] %v339
    %344 = vst [vmem:[%s3 + $0x10] sm:$0xff] %v340
    %345 = vst [vmem:[%s3 + $0x18] sm:$0xff] %v341
  $region21: #{phasenet_forward.8} parent=0 // pred_fallthru
    _
  // Predicated region
  $region22: #{phasenet_forward.8} parent=0 // pred_check
    _
  $region23: #{phasenet_forward.8} parent=0 // pred_check_branch
    %347 = sbr.rel (0) target = $region25
  $region24: #{phasenet_forward.8} parent=0 // pred_region
    _
  $region25: #{phasenet_forward.8} parent=0 // pred_fallthru
    _
  // Predicated region
  $region26: #{phasenet_forward.8} parent=0 // pred_check
    _
  $region27: #{phasenet_forward.8} parent=0 // pred_check_branch
    %349 = sbr.rel (0) target = $region29
  $region28: #{phasenet_forward.8} parent=0 // pred_region
    _
  $region29: #{phasenet_forward.8} parent=0 // pred_fallthru
    _

// kernel: phasenet_forward.9
$region0: #{phasenet_forward.9}
  #allocation0 [shape = 'u32[]', space=smem, size = 0x4, offset = 0x4, fixed_abs, tag = 'smem constant byte address 0x4 - core index']
  #allocation1 [shape = 'u32[72,128]{1,0:T(1,128)}', space=vmem, size = 0x9000, scoped, tag = 'internal scratch']
  #allocation2 [shape = 'f32[32,128]{1,0:T(8,128)}', space=vmem, size = 0x4000, scoped, tag = 'scratch operand']
  %s0 = inlined_call_operand.vmem [shape: bf16[32,512], index: 0, kind: input, shape index: {}]
  %s1 = inlined_call_operand.vmem [shape: bf16[512,128], index: 1, kind: input, shape index: {}]
  %s2 = inlined_call_operand.vmem [shape: f32[1,128], index: 2, kind: input, shape index: {}]
  %s3 = inlined_call_operand.vmem [shape: f32[32,128], index: 3, kind: output, shape index: {}]
  %s4 = sld [smem:[#allocation0]]
  $region30: #{phasenet_forward.9} parent=0
    _
  %s6 = ssub.s32 1, %s4
  %s7 = scalar_select 0, %s6, %s4
  // Predicated region
  $region2: #{phasenet_forward.9} parent=0 // pred_check
    _
  $region3: #{phasenet_forward.9} parent=0 // pred_check_branch
    %9 = sbr.rel (0) target = $region5
  $region4: #{phasenet_forward.9} parent=0 // pred_region
    _
  $region5: #{phasenet_forward.9} parent=0 // pred_fallthru
    _
  // Predicated region
  $region6: #{phasenet_forward.9} parent=0 // pred_check
    _
  $region7: #{phasenet_forward.9} parent=0 // pred_check_branch
    %11 = sbr.rel (0) target = $region9
  $region8: #{phasenet_forward.9} parent=0 // pred_region
    _
  $region9: #{phasenet_forward.9} parent=0 // pred_fallthru
    _
  // Predicated region
  $region10: #{phasenet_forward.9} parent=0 // pred_check
    _
  $region11: #{phasenet_forward.9} parent=0 // pred_check_branch
    %13 = sbr.rel (0) target = $region13
  $region12: #{phasenet_forward.9} parent=0 // pred_region
    _
  $region13: #{phasenet_forward.9} parent=0 // pred_fallthru
    _
  %p14 = scmp.eq.s32.totalorder 0, 0
  // Predicated region
  $region14: #{phasenet_forward.9} parent=0 // pred_check
    %p15 = pneg %p14
  $region15: #{phasenet_forward.9} parent=0 // pred_check_branch
    %17 = sbr.rel (%p15) target = $region17
  $region16: #{phasenet_forward.9} parent=0 // pred_region
    %18 = vst [vmem:[#allocation2] sm:$0xff] 0.0
    %19 = vst [vmem:[#allocation2 + $0x8] sm:$0xff] 0.0
    %20 = vst [vmem:[#allocation2 + $0x10] sm:$0xff] 0.0
    %21 = vst [vmem:[#allocation2 + $0x18] sm:$0xff] 0.0
  $region17: #{phasenet_forward.9} parent=0 // pred_fallthru
    _
  %v22 = vld [vmem:[#allocation2] sm:$0xff]
  %v23 = vld [vmem:[#allocation2 + $0x8] sm:$0xff]
  %v24 = vld [vmem:[#allocation2 + $0x10] sm:$0xff]
  %v25 = vld [vmem:[#allocation2 + $0x18] sm:$0xff]
  %v26 = vld [vmem:[%s0] sm:$0xff]
  %v27 = vld [vmem:[%s0 + $0x8] sm:$0xff]
  %v28 = vld [vmem:[%s0 + $0x10] sm:$0xff]
  %v29 = vld [vmem:[%s0 + $0x18] sm:$0xff]
  %v30 = vld [vmem:[%s0 + $0x20] sm:$0xff]
  %v31 = vld [vmem:[%s0 + $0x28] sm:$0xff]
  %v32 = vld [vmem:[%s0 + $0x30] sm:$0xff]
  %v33 = vld [vmem:[%s0 + $0x38] sm:$0xff]
  %v34 = vld [vmem:[%s1] sm:$0xf]
  %v35 = vld [vmem:[%s1 + $0x4] sm:$0xf]
  %v36 = vld [vmem:[%s1 + $0x8] sm:$0xf]
  %v37 = vld [vmem:[%s1 + $0xc] sm:$0xf]
  %v38 = vld [vmem:[%s1 + $0x10] sm:$0xf]
  %v39 = vld [vmem:[%s1 + $0x14] sm:$0xf]
  %v40 = vld [vmem:[%s1 + $0x18] sm:$0xf]
  %v41 = vld [vmem:[%s1 + $0x1c] sm:$0xf]
  %v42 = vld [vmem:[%s1 + $0x20] sm:$0xf]
  %v43 = vld [vmem:[%s1 + $0x24] sm:$0xf]
  %v44 = vld [vmem:[%s1 + $0x28] sm:$0xf]
  %v45 = vld [vmem:[%s1 + $0x2c] sm:$0xf]
  %v46 = vld [vmem:[%s1 + $0x30] sm:$0xf]
  %v47 = vld [vmem:[%s1 + $0x34] sm:$0xf]
  %v48 = vld [vmem:[%s1 + $0x38] sm:$0xf]
  %v49 = vld [vmem:[%s1 + $0x3c] sm:$0xf]
  %v50 = vld [vmem:[%s1 + $0x40] sm:$0xf]
  %v51 = vld [vmem:[%s1 + $0x44] sm:$0xf]
  %v52 = vld [vmem:[%s1 + $0x48] sm:$0xf]
  %v53 = vld [vmem:[%s1 + $0x4c] sm:$0xf]
  %v54 = vld [vmem:[%s1 + $0x50] sm:$0xf]
  %v55 = vld [vmem:[%s1 + $0x54] sm:$0xf]
  %v56 = vld [vmem:[%s1 + $0x58] sm:$0xf]
  %v57 = vld [vmem:[%s1 + $0x5c] sm:$0xf]
  %v58 = vld [vmem:[%s1 + $0x60] sm:$0xf]
  %v59 = vld [vmem:[%s1 + $0x64] sm:$0xf]
  %v60 = vld [vmem:[%s1 + $0x68] sm:$0xf]
  %v61 = vld [vmem:[%s1 + $0x6c] sm:$0xf]
  %v62 = vld [vmem:[%s1 + $0x70] sm:$0xf]
  %v63 = vld [vmem:[%s1 + $0x74] sm:$0xf]
  %v64 = vld [vmem:[%s1 + $0x78] sm:$0xf]
  %v65 = vld [vmem:[%s1 + $0x7c] sm:$0xf]
  %v66 = vld [vmem:[%s1 + $0x80] sm:$0xf]
  %v67 = vld [vmem:[%s1 + $0x84] sm:$0xf]
  %v68 = vld [vmem:[%s1 + $0x88] sm:$0xf]
  %v69 = vld [vmem:[%s1 + $0x8c] sm:$0xf]
  %v70 = vld [vmem:[%s1 + $0x90] sm:$0xf]
  %v71 = vld [vmem:[%s1 + $0x94] sm:$0xf]
  %v72 = vld [vmem:[%s1 + $0x98] sm:$0xf]
  %v73 = vld [vmem:[%s1 + $0x9c] sm:$0xf]
  %v74 = vld [vmem:[%s1 + $0xa0] sm:$0xf]
  %v75 = vld [vmem:[%s1 + $0xa4] sm:$0xf]
  %v76 = vld [vmem:[%s1 + $0xa8] sm:$0xf]
  %v77 = vld [vmem:[%s1 + $0xac] sm:$0xf]
  %v78 = vld [vmem:[%s1 + $0xb0] sm:$0xf]
  %v79 = vld [vmem:[%s1 + $0xb4] sm:$0xf]
  %v80 = vld [vmem:[%s1 + $0xb8] sm:$0xf]
  %v81 = vld [vmem:[%s1 + $0xbc] sm:$0xf]
  %v82 = vld [vmem:[%s1 + $0xc0] sm:$0xf]
  %v83 = vld [vmem:[%s1 + $0xc4] sm:$0xf]
  %v84 = vld [vmem:[%s1 + $0xc8] sm:$0xf]
  %v85 = vld [vmem:[%s1 + $0xcc] sm:$0xf]
  %v86 = vld [vmem:[%s1 + $0xd0] sm:$0xf]
  %v87 = vld [vmem:[%s1 + $0xd4] sm:$0xf]
  %v88 = vld [vmem:[%s1 + $0xd8] sm:$0xf]
  %v89 = vld [vmem:[%s1 + $0xdc] sm:$0xf]
  %v90 = vld [vmem:[%s1 + $0xe0] sm:$0xf]
  %v91 = vld [vmem:[%s1 + $0xe4] sm:$0xf]
  %v92 = vld [vmem:[%s1 + $0xe8] sm:$0xf]
  %v93 = vld [vmem:[%s1 + $0xec] sm:$0xf]
  %v94 = vld [vmem:[%s1 + $0xf0] sm:$0xf]
  %v95 = vld [vmem:[%s1 + $0xf4] sm:$0xf]
  %v96 = vld [vmem:[%s1 + $0xf8] sm:$0xf]
  %v97 = vld [vmem:[%s1 + $0xfc] sm:$0xf]
  %v106 = vunpack.c.l.b16 %v26
  %v107 = vunpack.c.h.b16 %v26
  %v108 = vunpack.c.l.b16 %v27
  %v109 = vunpack.c.h.b16 %v27
  %v110 = vunpack.c.l.b16 %v28
  %v111 = vunpack.c.h.b16 %v28
  %v112 = vunpack.c.l.b16 %v29
  %v113 = vunpack.c.h.b16 %v29
  %v114 = vunpack.c.l.b16 %v30
  %v115 = vunpack.c.h.b16 %v30
  %v116 = vunpack.c.l.b16 %v31
  %v117 = vunpack.c.h.b16 %v31
  %v118 = vunpack.c.l.b16 %v32
  %v119 = vunpack.c.h.b16 %v32
  %v120 = vunpack.c.l.b16 %v33
  %v121 = vunpack.c.h.b16 %v33
  %v122 = vpack.c.b16 %v110, %v106
  %v123 = vpack.c.b16 %v111, %v107
  %v124 = vpack.c.b16 %v112, %v108
  %v125 = vpack.c.b16 %v113, %v109
  %v126 = vpack.c.b16 %v118, %v114
  %v127 = vpack.c.b16 %v119, %v115
  %v128 = vpack.c.b16 %v120, %v116
  %v129 = vpack.c.b16 %v121, %v117
  %v202 = vunpack.c.l.b16 %v34
  %v203 = vunpack.c.l.b16 %v35
  %v204 = vunpack.c.l.b16 %v36
  %v205 = vunpack.c.l.b16 %v37
  %v206 = vunpack.c.l.b16 %v38
  %v207 = vunpack.c.l.b16 %v39
  %v208 = vunpack.c.l.b16 %v40
  %v209 = vunpack.c.l.b16 %v41
  %v210 = vunpack.c.l.b16 %v42
  %v211 = vunpack.c.l.b16 %v43
  %v212 = vunpack.c.l.b16 %v44
  %v213 = vunpack.c.l.b16 %v45
  %v214 = vunpack.c.l.b16 %v46
  %v215 = vunpack.c.l.b16 %v47
  %v216 = vunpack.c.l.b16 %v48
  %v217 = vunpack.c.l.b16 %v49
  %v218 = vunpack.c.l.b16 %v50
  %v219 = vunpack.c.l.b16 %v51
  %v220 = vunpack.c.l.b16 %v52
  %v221 = vunpack.c.l.b16 %v53
  %v222 = vunpack.c.l.b16 %v54
  %v223 = vunpack.c.l.b16 %v55
  %v224 = vunpack.c.l.b16 %v56
  %v225 = vunpack.c.l.b16 %v57
  %v226 = vunpack.c.l.b16 %v58
  %v227 = vunpack.c.l.b16 %v59
  %v228 = vunpack.c.l.b16 %v60
  %v229 = vunpack.c.l.b16 %v61
  %v230 = vunpack.c.l.b16 %v62
  %v231 = vunpack.c.l.b16 %v63
  %v232 = vunpack.c.l.b16 %v64
  %v233 = vunpack.c.l.b16 %v65
  %v234 = vunpack.c.l.b16 %v66
  %v235 = vunpack.c.l.b16 %v67
  %v236 = vunpack.c.l.b16 %v68
  %v237 = vunpack.c.l.b16 %v69
  %v238 = vunpack.c.l.b16 %v70
  %v239 = vunpack.c.l.b16 %v71
  %v240 = vunpack.c.l.b16 %v72
  %v241 = vunpack.c.l.b16 %v73
  %v242 = vunpack.c.l.b16 %v74
  %v243 = vunpack.c.l.b16 %v75
  %v244 = vunpack.c.l.b16 %v76
  %v245 = vunpack.c.l.b16 %v77
  %v246 = vunpack.c.l.b16 %v78
  %v247 = vunpack.c.l.b16 %v79
  %v248 = vunpack.c.l.b16 %v80
  %v249 = vunpack.c.l.b16 %v81
  %v250 = vunpack.c.l.b16 %v82
  %v251 = vunpack.c.l.b16 %v83
  %v252 = vunpack.c.l.b16 %v84
  %v253 = vunpack.c.l.b16 %v85
  %v254 = vunpack.c.l.b16 %v86
  %v255 = vunpack.c.l.b16 %v87
  %v256 = vunpack.c.l.b16 %v88
  %v257 = vunpack.c.l.b16 %v89
  %v258 = vunpack.c.l.b16 %v90
  %v259 = vunpack.c.l.b16 %v91
  %v260 = vunpack.c.l.b16 %v92
  %v261 = vunpack.c.l.b16 %v93
  %v262 = vunpack.c.l.b16 %v94
  %v263 = vunpack.c.l.b16 %v95
  %v264 = vunpack.c.l.b16 %v96
  %v265 = vunpack.c.l.b16 %v97
  %v266 = vpack.c.b16 %v203, %v202
  %v267 = vpack.c.b16 %v205, %v204
  %v268 = vpack.c.b16 %v207, %v206
  %v269 = vpack.c.b16 %v209, %v208
  %v270 = vpack.c.b16 %v211, %v210
  %v271 = vpack.c.b16 %v213, %v212
  %v272 = vpack.c.b16 %v215, %v214
  %v273 = vpack.c.b16 %v217, %v216
  %v274 = vpack.c.b16 %v219, %v218
  %v275 = vpack.c.b16 %v221, %v220
  %v276 = vpack.c.b16 %v223, %v222
  %v277 = vpack.c.b16 %v225, %v224
  %v278 = vpack.c.b16 %v227, %v226
  %v279 = vpack.c.b16 %v229, %v228
  %v280 = vpack.c.b16 %v231, %v230
  %v281 = vpack.c.b16 %v233, %v232
  %v282 = vpack.c.b16 %v235, %v234
  %v283 = vpack.c.b16 %v237, %v236
  %v284 = vpack.c.b16 %v239, %v238
  %v285 = vpack.c.b16 %v241, %v240
  %v286 = vpack.c.b16 %v243, %v242
  %v287 = vpack.c.b16 %v245, %v244
  %v288 = vpack.c.b16 %v247, %v246
  %v289 = vpack.c.b16 %v249, %v248
  %v290 = vpack.c.b16 %v251, %v250
  %v291 = vpack.c.b16 %v253, %v252
  %v292 = vpack.c.b16 %v255, %v254
  %v293 = vpack.c.b16 %v257, %v256
  %v294 = vpack.c.b16 %v259, %v258
  %v295 = vpack.c.b16 %v261, %v260
  %v296 = vpack.c.b16 %v263, %v262
  %v297 = vpack.c.b16 %v265, %v264
  %330 = vmatpush.bf16.msra.mxu0 %v273
  %331 = vmatpush.bf16.msra.mxu0 %v272
  %332 = vmatpush.bf16.msra.mxu0 %v271
  %333 = vmatpush.bf16.msra.mxu0 %v270
  %334 = vmatpush.bf16.msra.mxu0 %v269
  %335 = vmatpush.bf16.msra.mxu0 %v268
  %336 = vmatpush.bf16.msra.mxu0 %v267
  %337 = vmatpush.bf16.msra.mxu0 %v266
  %338 = vmatmul.bf16.gmra.mxu0 %v122
  %v339 = vpop.f32.mrf.mxu0
  %v340 = vadd.f32 0.0, %v339
  %v341 = vpop.f32.mrf.mxu0
  %v342 = vadd.f32 0.0, %v341
  %343 = vmatmul.bf16.gmra.mxu0 %v126
  %v344 = vpop.f32.mrf.mxu0
  %v345 = vadd.f32 0.0, %v344
  %v346 = vpop.f32.mrf.mxu0
  %v347 = vadd.f32 0.0, %v346
  %348 = vdwg.mxu0
  %349 = vmatpush.bf16.msra.mxu0 %v281
  %350 = vmatpush.bf16.msra.mxu0 %v280
  %351 = vmatpush.bf16.msra.mxu0 %v279
  %352 = vmatpush.bf16.msra.mxu0 %v278
  %353 = vmatpush.bf16.msra.mxu0 %v277
  %354 = vmatpush.bf16.msra.mxu0 %v276
  %355 = vmatpush.bf16.msra.mxu0 %v275
  %356 = vmatpush.bf16.msra.mxu0 %v274
  %357 = vmatmul.bf16.gmra.mxu0 %v123
  %v358 = vpop.f32.mrf.mxu0
  %v359 = vadd.f32 %v340, %v358
  %v360 = vpop.f32.mrf.mxu0
  %v361 = vadd.f32 %v342, %v360
  %362 = vmatmul.bf16.gmra.mxu0 %v127
  %v363 = vpop.f32.mrf.mxu0
  %v364 = vadd.f32 %v345, %v363
  %v365 = vpop.f32.mrf.mxu0
  %v366 = vadd.f32 %v347, %v365
  %367 = vdwg.mxu0
  %368 = vmatpush.bf16.msra.mxu0 %v289
  %369 = vmatpush.bf16.msra.mxu0 %v288
  %370 = vmatpush.bf16.msra.mxu0 %v287
  %371 = vmatpush.bf16.msra.mxu0 %v286
  %372 = vmatpush.bf16.msra.mxu0 %v285
  %373 = vmatpush.bf16.msra.mxu0 %v284
  %374 = vmatpush.bf16.msra.mxu0 %v283
  %375 = vmatpush.bf16.msra.mxu0 %v282
  %376 = vmatmul.bf16.gmra.mxu0 %v124
  %v377 = vpop.f32.mrf.mxu0
  %v378 = vadd.f32 %v359, %v377
  %v379 = vpop.f32.mrf.mxu0
  %v380 = vadd.f32 %v361, %v379
  %381 = vmatmul.bf16.gmra.mxu0 %v128
  %v382 = vpop.f32.mrf.mxu0
  %v383 = vadd.f32 %v364, %v382
  %v384 = vpop.f32.mrf.mxu0
  %v385 = vadd.f32 %v366, %v384
  %386 = vdwg.mxu0
  %387 = vmatpush.bf16.msra.mxu0 %v297
  %388 = vmatpush.bf16.msra.mxu0 %v296
  %389 = vmatpush.bf16.msra.mxu0 %v295
  %390 = vmatpush.bf16.msra.mxu0 %v294
  %391 = vmatpush.bf16.msra.mxu0 %v293
  %392 = vmatpush.bf16.msra.mxu0 %v292
  %393 = vmatpush.bf16.msra.mxu0 %v291
  %394 = vmatpush.bf16.msra.mxu0 %v290
  %395 = vmatmul.bf16.gmra.mxu0 %v125
  %v396 = vpop.f32.mrf.mxu0
  %v397 = vadd.f32 %v378, %v396
  %v398 = vpop.f32.mrf.mxu0
  %v399 = vadd.f32 %v380, %v398
  %400 = vmatmul.bf16.gmra.mxu0 %v129
  %v401 = vpop.f32.mrf.mxu0
  %v402 = vadd.f32 %v383, %v401
  %v403 = vpop.f32.mrf.mxu0
  %v404 = vadd.f32 %v385, %v403
  %405 = vdwg.mxu0
  %v406 = vadd.f32 %v22, %v397
  %v407 = vadd.f32 %v23, %v399
  %v408 = vadd.f32 %v24, %v402
  %v409 = vadd.f32 %v25, %v404
  %410 = vst [vmem:[#allocation2] sm:$0xff] %v406
  %411 = vst [vmem:[#allocation2 + $0x8] sm:$0xff] %v407
  %412 = vst [vmem:[#allocation2 + $0x10] sm:$0xff] %v408
  %413 = vst [vmem:[#allocation2 + $0x18] sm:$0xff] %v409
  // Predicated region
  $region18: #{phasenet_forward.9} parent=0 // pred_check
    %p414 = pneg %p14
  $region19: #{phasenet_forward.9} parent=0 // pred_check_branch
    %416 = sbr.rel (%p414) target = $region21
  $region20: #{phasenet_forward.9} parent=0 // pred_region
    %v417 = vld [vmem:[#allocation2] sm:$0xff]
    %v418 = vld [vmem:[#allocation2 + $0x8] sm:$0xff]
    %v419 = vld [vmem:[#allocation2 + $0x10] sm:$0xff]
    %v420 = vld [vmem:[#allocation2 + $0x18] sm:$0xff]
    %v421 = vld [vmem:[%s2] sm:$0x1]
    %v423 = vperm.slane %v421, 0
    %v425 = vadd.f32 %v417, %v423
    %v426 = vadd.f32 %v418, %v423
    %v427 = vadd.f32 %v419, %v423
    %v428 = vadd.f32 %v420, %v423
    %v429 = vmax.f32 %v425, 0.0
    %v430 = vmax.f32 %v426, 0.0
    %v431 = vmax.f32 %v427, 0.0
    %v432 = vmax.f32 %v428, 0.0
    %433 = vst [vmem:[%s3] sm:$0xff] %v429
    %434 = vst [vmem:[%s3 + $0x8] sm:$0xff] %v430
    %435 = vst [vmem:[%s3 + $0x10] sm:$0xff] %v431
    %436 = vst [vmem:[%s3 + $0x18] sm:$0xff] %v432
  $region21: #{phasenet_forward.9} parent=0 // pred_fallthru
    _
  // Predicated region
  $region22: #{phasenet_forward.9} parent=0 // pred_check
    _
  $region23: #{phasenet_forward.9} parent=0 // pred_check_branch
    %438 = sbr.rel (0) target = $region25
  $region24: #{phasenet_forward.9} parent=0 // pred_region
    _
  $region25: #{phasenet_forward.9} parent=0 // pred_fallthru
    _
  // Predicated region
  $region26: #{phasenet_forward.9} parent=0 // pred_check
    _
  $region27: #{phasenet_forward.9} parent=0 // pred_check_branch
    %440 = sbr.rel (0) target = $region29
  $region28: #{phasenet_forward.9} parent=0 // pred_region
    _
  $region29: #{phasenet_forward.9} parent=0 // pred_fallthru
    _

// kernel: phasenet_forward.10
$region0: #{phasenet_forward.10}
  #allocation0 [shape = 'u32[]', space=smem, size = 0x4, offset = 0x4, fixed_abs, tag = 'smem constant byte address 0x4 - core index']
  #allocation1 [shape = 'u32[72,128]{1,0:T(1,128)}', space=vmem, size = 0x9000, scoped, tag = 'internal scratch']
  #allocation2 [shape = 'f32[32,128]{1,0:T(8,128)}', space=vmem, size = 0x4000, scoped, tag = 'scratch operand']
  %s0 = inlined_call_operand.vmem [shape: bf16[32,384], index: 0, kind: input, shape index: {}]
  %s1 = inlined_call_operand.vmem [shape: bf16[384,128], index: 1, kind: input, shape index: {}]
  %s2 = inlined_call_operand.vmem [shape: f32[1,128], index: 2, kind: input, shape index: {}]
  %s3 = inlined_call_operand.vmem [shape: f32[32,128], index: 3, kind: output, shape index: {}]
  %s4 = sld [smem:[#allocation0]]
  $region30: #{phasenet_forward.10} parent=0
    _
  %s6 = ssub.s32 1, %s4
  %s7 = scalar_select 0, %s6, %s4
  // Predicated region
  $region2: #{phasenet_forward.10} parent=0 // pred_check
    _
  $region3: #{phasenet_forward.10} parent=0 // pred_check_branch
    %9 = sbr.rel (0) target = $region5
  $region4: #{phasenet_forward.10} parent=0 // pred_region
    _
  $region5: #{phasenet_forward.10} parent=0 // pred_fallthru
    _
  // Predicated region
  $region6: #{phasenet_forward.10} parent=0 // pred_check
    _
  $region7: #{phasenet_forward.10} parent=0 // pred_check_branch
    %11 = sbr.rel (0) target = $region9
  $region8: #{phasenet_forward.10} parent=0 // pred_region
    _
  $region9: #{phasenet_forward.10} parent=0 // pred_fallthru
    _
  // Predicated region
  $region10: #{phasenet_forward.10} parent=0 // pred_check
    _
  $region11: #{phasenet_forward.10} parent=0 // pred_check_branch
    %13 = sbr.rel (0) target = $region13
  $region12: #{phasenet_forward.10} parent=0 // pred_region
    _
  $region13: #{phasenet_forward.10} parent=0 // pred_fallthru
    _
  %p14 = scmp.eq.s32.totalorder 0, 0
  // Predicated region
  $region14: #{phasenet_forward.10} parent=0 // pred_check
    %p15 = pneg %p14
  $region15: #{phasenet_forward.10} parent=0 // pred_check_branch
    %17 = sbr.rel (%p15) target = $region17
  $region16: #{phasenet_forward.10} parent=0 // pred_region
    %18 = vst [vmem:[#allocation2] sm:$0xff] 0.0
    %19 = vst [vmem:[#allocation2 + $0x8] sm:$0xff] 0.0
    %20 = vst [vmem:[#allocation2 + $0x10] sm:$0xff] 0.0
    %21 = vst [vmem:[#allocation2 + $0x18] sm:$0xff] 0.0
  $region17: #{phasenet_forward.10} parent=0 // pred_fallthru
    _
  %v22 = vld [vmem:[#allocation2] sm:$0xff]
  %v23 = vld [vmem:[#allocation2 + $0x8] sm:$0xff]
  %v24 = vld [vmem:[#allocation2 + $0x10] sm:$0xff]
  %v25 = vld [vmem:[#allocation2 + $0x18] sm:$0xff]
  %v26 = vld [vmem:[%s0] sm:$0xff]
  %v27 = vld [vmem:[%s0 + $0x8] sm:$0xf]
  %v28 = vld [vmem:[%s0 + $0xc] sm:$0xff]
  %v29 = vld [vmem:[%s0 + $0x14] sm:$0xf]
  %v30 = vld [vmem:[%s0 + $0x18] sm:$0xff]
  %v31 = vld [vmem:[%s0 + $0x20] sm:$0xf]
  %v32 = vld [vmem:[%s0 + $0x24] sm:$0xff]
  %v33 = vld [vmem:[%s0 + $0x2c] sm:$0xf]
  %v34 = vld [vmem:[%s1] sm:$0xf]
  %v35 = vld [vmem:[%s1 + $0x4] sm:$0xf]
  %v36 = vld [vmem:[%s1 + $0x8] sm:$0xf]
  %v37 = vld [vmem:[%s1 + $0xc] sm:$0xf]
  %v38 = vld [vmem:[%s1 + $0x10] sm:$0xf]
  %v39 = vld [vmem:[%s1 + $0x14] sm:$0xf]
  %v40 = vld [vmem:[%s1 + $0x18] sm:$0xf]
  %v41 = vld [vmem:[%s1 + $0x1c] sm:$0xf]
  %v42 = vld [vmem:[%s1 + $0x20] sm:$0xf]
  %v43 = vld [vmem:[%s1 + $0x24] sm:$0xf]
  %v44 = vld [vmem:[%s1 + $0x28] sm:$0xf]
  %v45 = vld [vmem:[%s1 + $0x2c] sm:$0xf]
  %v46 = vld [vmem:[%s1 + $0x30] sm:$0xf]
  %v47 = vld [vmem:[%s1 + $0x34] sm:$0xf]
  %v48 = vld [vmem:[%s1 + $0x38] sm:$0xf]
  %v49 = vld [vmem:[%s1 + $0x3c] sm:$0xf]
  %v50 = vld [vmem:[%s1 + $0x40] sm:$0xf]
  %v51 = vld [vmem:[%s1 + $0x44] sm:$0xf]
  %v52 = vld [vmem:[%s1 + $0x48] sm:$0xf]
  %v53 = vld [vmem:[%s1 + $0x4c] sm:$0xf]
  %v54 = vld [vmem:[%s1 + $0x50] sm:$0xf]
  %v55 = vld [vmem:[%s1 + $0x54] sm:$0xf]
  %v56 = vld [vmem:[%s1 + $0x58] sm:$0xf]
  %v57 = vld [vmem:[%s1 + $0x5c] sm:$0xf]
  %v58 = vld [vmem:[%s1 + $0x60] sm:$0xf]
  %v59 = vld [vmem:[%s1 + $0x64] sm:$0xf]
  %v60 = vld [vmem:[%s1 + $0x68] sm:$0xf]
  %v61 = vld [vmem:[%s1 + $0x6c] sm:$0xf]
  %v62 = vld [vmem:[%s1 + $0x70] sm:$0xf]
  %v63 = vld [vmem:[%s1 + $0x74] sm:$0xf]
  %v64 = vld [vmem:[%s1 + $0x78] sm:$0xf]
  %v65 = vld [vmem:[%s1 + $0x7c] sm:$0xf]
  %v66 = vld [vmem:[%s1 + $0x80] sm:$0xf]
  %v67 = vld [vmem:[%s1 + $0x84] sm:$0xf]
  %v68 = vld [vmem:[%s1 + $0x88] sm:$0xf]
  %v69 = vld [vmem:[%s1 + $0x8c] sm:$0xf]
  %v70 = vld [vmem:[%s1 + $0x90] sm:$0xf]
  %v71 = vld [vmem:[%s1 + $0x94] sm:$0xf]
  %v72 = vld [vmem:[%s1 + $0x98] sm:$0xf]
  %v73 = vld [vmem:[%s1 + $0x9c] sm:$0xf]
  %v74 = vld [vmem:[%s1 + $0xa0] sm:$0xf]
  %v75 = vld [vmem:[%s1 + $0xa4] sm:$0xf]
  %v76 = vld [vmem:[%s1 + $0xa8] sm:$0xf]
  %v77 = vld [vmem:[%s1 + $0xac] sm:$0xf]
  %v78 = vld [vmem:[%s1 + $0xb0] sm:$0xf]
  %v79 = vld [vmem:[%s1 + $0xb4] sm:$0xf]
  %v80 = vld [vmem:[%s1 + $0xb8] sm:$0xf]
  %v81 = vld [vmem:[%s1 + $0xbc] sm:$0xf]
  %v90 = vunpack.c.l.b16 %v26
  %v91 = vunpack.c.h.b16 %v26
  %v92 = vunpack.c.l.b16 %v27
  %v93 = vunpack.c.l.b16 %v28
  %v94 = vunpack.c.h.b16 %v28
  %v95 = vunpack.c.l.b16 %v29
  %v96 = vunpack.c.l.b16 %v30
  %v97 = vunpack.c.h.b16 %v30
  %v98 = vunpack.c.l.b16 %v31
  %v99 = vunpack.c.l.b16 %v32
  %v100 = vunpack.c.h.b16 %v32
  %v101 = vunpack.c.l.b16 %v33
  %v102 = vpack.c.b16 %v93, %v90
  %v103 = vpack.c.b16 %v94, %v91
  %v104 = vpack.c.b16 %v95, %v92
  %v105 = vpack.c.b16 %v99, %v96
  %v106 = vpack.c.b16 %v100, %v97
  %v107 = vpack.c.b16 %v101, %v98
  %v162 = vunpack.c.l.b16 %v34
  %v163 = vunpack.c.l.b16 %v35
  %v164 = vunpack.c.l.b16 %v36
  %v165 = vunpack.c.l.b16 %v37
  %v166 = vunpack.c.l.b16 %v38
  %v167 = vunpack.c.l.b16 %v39
  %v168 = vunpack.c.l.b16 %v40
  %v169 = vunpack.c.l.b16 %v41
  %v170 = vunpack.c.l.b16 %v42
  %v171 = vunpack.c.l.b16 %v43
  %v172 = vunpack.c.l.b16 %v44
  %v173 = vunpack.c.l.b16 %v45
  %v174 = vunpack.c.l.b16 %v46
  %v175 = vunpack.c.l.b16 %v47
  %v176 = vunpack.c.l.b16 %v48
  %v177 = vunpack.c.l.b16 %v49
  %v178 = vunpack.c.l.b16 %v50
  %v179 = vunpack.c.l.b16 %v51
  %v180 = vunpack.c.l.b16 %v52
  %v181 = vunpack.c.l.b16 %v53
  %v182 = vunpack.c.l.b16 %v54
  %v183 = vunpack.c.l.b16 %v55
  %v184 = vunpack.c.l.b16 %v56
  %v185 = vunpack.c.l.b16 %v57
  %v186 = vunpack.c.l.b16 %v58
  %v187 = vunpack.c.l.b16 %v59
  %v188 = vunpack.c.l.b16 %v60
  %v189 = vunpack.c.l.b16 %v61
  %v190 = vunpack.c.l.b16 %v62
  %v191 = vunpack.c.l.b16 %v63
  %v192 = vunpack.c.l.b16 %v64
  %v193 = vunpack.c.l.b16 %v65
  %v194 = vunpack.c.l.b16 %v66
  %v195 = vunpack.c.l.b16 %v67
  %v196 = vunpack.c.l.b16 %v68
  %v197 = vunpack.c.l.b16 %v69
  %v198 = vunpack.c.l.b16 %v70
  %v199 = vunpack.c.l.b16 %v71
  %v200 = vunpack.c.l.b16 %v72
  %v201 = vunpack.c.l.b16 %v73
  %v202 = vunpack.c.l.b16 %v74
  %v203 = vunpack.c.l.b16 %v75
  %v204 = vunpack.c.l.b16 %v76
  %v205 = vunpack.c.l.b16 %v77
  %v206 = vunpack.c.l.b16 %v78
  %v207 = vunpack.c.l.b16 %v79
  %v208 = vunpack.c.l.b16 %v80
  %v209 = vunpack.c.l.b16 %v81
  %v210 = vpack.c.b16 %v163, %v162
  %v211 = vpack.c.b16 %v165, %v164
  %v212 = vpack.c.b16 %v167, %v166
  %v213 = vpack.c.b16 %v169, %v168
  %v214 = vpack.c.b16 %v171, %v170
  %v215 = vpack.c.b16 %v173, %v172
  %v216 = vpack.c.b16 %v175, %v174
  %v217 = vpack.c.b16 %v177, %v176
  %v218 = vpack.c.b16 %v179, %v178
  %v219 = vpack.c.b16 %v181, %v180
  %v220 = vpack.c.b16 %v183, %v182
  %v221 = vpack.c.b16 %v185, %v184
  %v222 = vpack.c.b16 %v187, %v186
  %v223 = vpack.c.b16 %v189, %v188
  %v224 = vpack.c.b16 %v191, %v190
  %v225 = vpack.c.b16 %v193, %v192
  %v226 = vpack.c.b16 %v195, %v194
  %v227 = vpack.c.b16 %v197, %v196
  %v228 = vpack.c.b16 %v199, %v198
  %v229 = vpack.c.b16 %v201, %v200
  %v230 = vpack.c.b16 %v203, %v202
  %v231 = vpack.c.b16 %v205, %v204
  %v232 = vpack.c.b16 %v207, %v206
  %v233 = vpack.c.b16 %v209, %v208
  %258 = vmatpush.bf16.msra.mxu0 %v217
  %259 = vmatpush.bf16.msra.mxu0 %v216
  %260 = vmatpush.bf16.msra.mxu0 %v215
  %261 = vmatpush.bf16.msra.mxu0 %v214
  %262 = vmatpush.bf16.msra.mxu0 %v213
  %263 = vmatpush.bf16.msra.mxu0 %v212
  %264 = vmatpush.bf16.msra.mxu0 %v211
  %265 = vmatpush.bf16.msra.mxu0 %v210
  %266 = vmatmul.bf16.gmra.mxu0 %v102
  %v267 = vpop.f32.mrf.mxu0
  %v268 = vadd.f32 0.0, %v267
  %v269 = vpop.f32.mrf.mxu0
  %v270 = vadd.f32 0.0, %v269
  %271 = vmatmul.bf16.gmra.mxu0 %v105
  %v272 = vpop.f32.mrf.mxu0
  %v273 = vadd.f32 0.0, %v272
  %v274 = vpop.f32.mrf.mxu0
  %v275 = vadd.f32 0.0, %v274
  %276 = vdwg.mxu0
  %277 = vmatpush.bf16.msra.mxu0 %v225
  %278 = vmatpush.bf16.msra.mxu0 %v224
  %279 = vmatpush.bf16.msra.mxu0 %v223
  %280 = vmatpush.bf16.msra.mxu0 %v222
  %281 = vmatpush.bf16.msra.mxu0 %v221
  %282 = vmatpush.bf16.msra.mxu0 %v220
  %283 = vmatpush.bf16.msra.mxu0 %v219
  %284 = vmatpush.bf16.msra.mxu0 %v218
  %285 = vmatmul.bf16.gmra.mxu0 %v103
  %v286 = vpop.f32.mrf.mxu0
  %v287 = vadd.f32 %v268, %v286
  %v288 = vpop.f32.mrf.mxu0
  %v289 = vadd.f32 %v270, %v288
  %290 = vmatmul.bf16.gmra.mxu0 %v106
  %v291 = vpop.f32.mrf.mxu0
  %v292 = vadd.f32 %v273, %v291
  %v293 = vpop.f32.mrf.mxu0
  %v294 = vadd.f32 %v275, %v293
  %295 = vdwg.mxu0
  %296 = vmatpush.bf16.msra.mxu0 %v233
  %297 = vmatpush.bf16.msra.mxu0 %v232
  %298 = vmatpush.bf16.msra.mxu0 %v231
  %299 = vmatpush.bf16.msra.mxu0 %v230
  %300 = vmatpush.bf16.msra.mxu0 %v229
  %301 = vmatpush.bf16.msra.mxu0 %v228
  %302 = vmatpush.bf16.msra.mxu0 %v227
  %303 = vmatpush.bf16.msra.mxu0 %v226
  %304 = vmatmul.bf16.gmra.mxu0 %v104
  %v305 = vpop.f32.mrf.mxu0
  %v306 = vadd.f32 %v287, %v305
  %v307 = vpop.f32.mrf.mxu0
  %v308 = vadd.f32 %v289, %v307
  %309 = vmatmul.bf16.gmra.mxu0 %v107
  %v310 = vpop.f32.mrf.mxu0
  %v311 = vadd.f32 %v292, %v310
  %v312 = vpop.f32.mrf.mxu0
  %v313 = vadd.f32 %v294, %v312
  %314 = vdwg.mxu0
  %v315 = vadd.f32 %v22, %v306
  %v316 = vadd.f32 %v23, %v308
  %v317 = vadd.f32 %v24, %v311
  %v318 = vadd.f32 %v25, %v313
  %319 = vst [vmem:[#allocation2] sm:$0xff] %v315
  %320 = vst [vmem:[#allocation2 + $0x8] sm:$0xff] %v316
  %321 = vst [vmem:[#allocation2 + $0x10] sm:$0xff] %v317
  %322 = vst [vmem:[#allocation2 + $0x18] sm:$0xff] %v318
  // Predicated region
  $region18: #{phasenet_forward.10} parent=0 // pred_check
    %p323 = pneg %p14
  $region19: #{phasenet_forward.10} parent=0 // pred_check_branch
    %325 = sbr.rel (%p323) target = $region21
  $region20: #{phasenet_forward.10} parent=0 // pred_region
    %v326 = vld [vmem:[#allocation2] sm:$0xff]
    %v327 = vld [vmem:[#allocation2 + $0x8] sm:$0xff]
    %v328 = vld [vmem:[#allocation2 + $0x10] sm:$0xff]
    %v329 = vld [vmem:[#allocation2 + $0x18] sm:$0xff]
    %v330 = vld [vmem:[%s2] sm:$0x1]
    %v332 = vperm.slane %v330, 0
    %v334 = vadd.f32 %v326, %v332
    %v335 = vadd.f32 %v327, %v332
    %v336 = vadd.f32 %v328, %v332
    %v337 = vadd.f32 %v329, %v332
    %338 = vst [vmem:[%s3] sm:$0xff] %v334
    %339 = vst [vmem:[%s3 + $0x8] sm:$0xff] %v335
    %340 = vst [vmem:[%s3 + $0x10] sm:$0xff] %v336
    %341 = vst [vmem:[%s3 + $0x18] sm:$0xff] %v337
  $region21: #{phasenet_forward.10} parent=0 // pred_fallthru
    _
  // Predicated region
  $region22: #{phasenet_forward.10} parent=0 // pred_check
    _
  $region23: #{phasenet_forward.10} parent=0 // pred_check_branch
    %343 = sbr.rel (0) target = $region25
  $region24: #{phasenet_forward.10} parent=0 // pred_region
    _
  $region25: #{phasenet_forward.10} parent=0 // pred_fallthru
    _
  // Predicated region
  $region26: #{phasenet_forward.10} parent=0 // pred_check
    _
  $region27: #{phasenet_forward.10} parent=0 // pred_check_branch
    %345 = sbr.rel (0) target = $region29
  $region28: #{phasenet_forward.10} parent=0 // pred_region
    _
  $region29: #{phasenet_forward.10} parent=0 // pred_fallthru
    _

// kernel: phasenet_forward.11
$region0: #{phasenet_forward.11}
  #allocation0 [shape = 'u32[]', space=smem, size = 0x4, offset = 0x4, fixed_abs, tag = 'smem constant byte address 0x4 - core index']
  #allocation1 [shape = 'u32[72,128]{1,0:T(1,128)}', space=vmem, size = 0x9000, scoped, tag = 'internal scratch']
  #allocation2 [shape = 'f32[16,256]{1,0:T(8,128)}', space=vmem, size = 0x4000, scoped, tag = 'scratch operand']
  %s0 = inlined_call_operand.vmem [shape: bf16[16,384], index: 0, kind: input, shape index: {}]
  %s1 = inlined_call_operand.vmem [shape: bf16[384,256], index: 1, kind: input, shape index: {}]
  %s2 = inlined_call_operand.vmem [shape: f32[1,256], index: 2, kind: input, shape index: {}]
  %s3 = inlined_call_operand.vmem [shape: f32[16,256], index: 3, kind: output, shape index: {}]
  %s4 = sld [smem:[#allocation0]]
  $region30: #{phasenet_forward.11} parent=0
    _
  %s6 = ssub.s32 1, %s4
  %s7 = scalar_select 0, %s6, %s4
  // Predicated region
  $region2: #{phasenet_forward.11} parent=0 // pred_check
    _
  $region3: #{phasenet_forward.11} parent=0 // pred_check_branch
    %9 = sbr.rel (0) target = $region5
  $region4: #{phasenet_forward.11} parent=0 // pred_region
    _
  $region5: #{phasenet_forward.11} parent=0 // pred_fallthru
    _
  // Predicated region
  $region6: #{phasenet_forward.11} parent=0 // pred_check
    _
  $region7: #{phasenet_forward.11} parent=0 // pred_check_branch
    %11 = sbr.rel (0) target = $region9
  $region8: #{phasenet_forward.11} parent=0 // pred_region
    _
  $region9: #{phasenet_forward.11} parent=0 // pred_fallthru
    _
  // Predicated region
  $region10: #{phasenet_forward.11} parent=0 // pred_check
    _
  $region11: #{phasenet_forward.11} parent=0 // pred_check_branch
    %13 = sbr.rel (0) target = $region13
  $region12: #{phasenet_forward.11} parent=0 // pred_region
    _
  $region13: #{phasenet_forward.11} parent=0 // pred_fallthru
    _
  %p14 = scmp.eq.s32.totalorder 0, 0
  // Predicated region
  $region14: #{phasenet_forward.11} parent=0 // pred_check
    %p15 = pneg %p14
  $region15: #{phasenet_forward.11} parent=0 // pred_check_branch
    %17 = sbr.rel (%p15) target = $region17
  $region16: #{phasenet_forward.11} parent=0 // pred_region
    %18 = vst [vmem:[#allocation2] sm:$0xff] 0.0
    %19 = vst [vmem:[#allocation2 + $0x8] sm:$0xff] 0.0
    %20 = vst [vmem:[#allocation2 + $0x10] sm:$0xff] 0.0
    %21 = vst [vmem:[#allocation2 + $0x18] sm:$0xff] 0.0
  $region17: #{phasenet_forward.11} parent=0 // pred_fallthru
    _
  %v22 = vld [vmem:[#allocation2] sm:$0xff]
  %v23 = vld [vmem:[#allocation2 + $0x8] sm:$0xff]
  %v24 = vld [vmem:[#allocation2 + $0x10] sm:$0xff]
  %v25 = vld [vmem:[#allocation2 + $0x18] sm:$0xff]
  %v26 = vld [vmem:[%s0] sm:$0xff]
  %v27 = vld [vmem:[%s0 + $0x8] sm:$0xf]
  %v28 = vld [vmem:[%s0 + $0xc] sm:$0xff]
  %v29 = vld [vmem:[%s0 + $0x14] sm:$0xf]
  %v30 = vld [vmem:[%s1] sm:$0xff]
  %v31 = vld [vmem:[%s1 + $0x8] sm:$0xff]
  %v32 = vld [vmem:[%s1 + $0x10] sm:$0xff]
  %v33 = vld [vmem:[%s1 + $0x18] sm:$0xff]
  %v34 = vld [vmem:[%s1 + $0x20] sm:$0xff]
  %v35 = vld [vmem:[%s1 + $0x28] sm:$0xff]
  %v36 = vld [vmem:[%s1 + $0x30] sm:$0xff]
  %v37 = vld [vmem:[%s1 + $0x38] sm:$0xff]
  %v38 = vld [vmem:[%s1 + $0x40] sm:$0xff]
  %v39 = vld [vmem:[%s1 + $0x48] sm:$0xff]
  %v40 = vld [vmem:[%s1 + $0x50] sm:$0xff]
  %v41 = vld [vmem:[%s1 + $0x58] sm:$0xff]
  %v42 = vld [vmem:[%s1 + $0x60] sm:$0xff]
  %v43 = vld [vmem:[%s1 + $0x68] sm:$0xff]
  %v44 = vld [vmem:[%s1 + $0x70] sm:$0xff]
  %v45 = vld [vmem:[%s1 + $0x78] sm:$0xff]
  %v46 = vld [vmem:[%s1 + $0x80] sm:$0xff]
  %v47 = vld [vmem:[%s1 + $0x88] sm:$0xff]
  %v48 = vld [vmem:[%s1 + $0x90] sm:$0xff]
  %v49 = vld [vmem:[%s1 + $0x98] sm:$0xff]
  %v50 = vld [vmem:[%s1 + $0xa0] sm:$0xff]
  %v51 = vld [vmem:[%s1 + $0xa8] sm:$0xff]
  %v52 = vld [vmem:[%s1 + $0xb0] sm:$0xff]
  %v53 = vld [vmem:[%s1 + $0xb8] sm:$0xff]
  %v54 = vld [vmem:[%s1 + $0xc0] sm:$0xff]
  %v55 = vld [vmem:[%s1 + $0xc8] sm:$0xff]
  %v56 = vld [vmem:[%s1 + $0xd0] sm:$0xff]
  %v57 = vld [vmem:[%s1 + $0xd8] sm:$0xff]
  %v58 = vld [vmem:[%s1 + $0xe0] sm:$0xff]
  %v59 = vld [vmem:[%s1 + $0xe8] sm:$0xff]
  %v60 = vld [vmem:[%s1 + $0xf0] sm:$0xff]
  %v61 = vld [vmem:[%s1 + $0xf8] sm:$0xff]
  %v62 = vld [vmem:[%s1 + $0x100] sm:$0xff]
  %v63 = vld [vmem:[%s1 + $0x108] sm:$0xff]
  %v64 = vld [vmem:[%s1 + $0x110] sm:$0xff]
  %v65 = vld [vmem:[%s1 + $0x118] sm:$0xff]
  %v66 = vld [vmem:[%s1 + $0x120] sm:$0xff]
  %v67 = vld [vmem:[%s1 + $0x128] sm:$0xff]
  %v68 = vld [vmem:[%s1 + $0x130] sm:$0xff]
  %v69 = vld [vmem:[%s1 + $0x138] sm:$0xff]
  %v70 = vld [vmem:[%s1 + $0x140] sm:$0xff]
  %v71 = vld [vmem:[%s1 + $0x148] sm:$0xff]
  %v72 = vld [vmem:[%s1 + $0x150] sm:$0xff]
  %v73 = vld [vmem:[%s1 + $0x158] sm:$0xff]
  %v74 = vld [vmem:[%s1 + $0x160] sm:$0xff]
  %v75 = vld [vmem:[%s1 + $0x168] sm:$0xff]
  %v76 = vld [vmem:[%s1 + $0x170] sm:$0xff]
  %v77 = vld [vmem:[%s1 + $0x178] sm:$0xff]
  %v82 = vunpack.c.l.b16 %v26
  %v83 = vunpack.c.h.b16 %v26
  %v84 = vunpack.c.l.b16 %v27
  %v85 = vunpack.c.l.b16 %v28
  %v86 = vunpack.c.h.b16 %v28
  %v87 = vunpack.c.l.b16 %v29
  %v88 = vpack.c.b16 %v85, %v82
  %v89 = vpack.c.b16 %v86, %v83
  %v90 = vpack.c.b16 %v87, %v84
  %v142 = vunpack.c.l.b16 %v30
  %v143 = vunpack.c.h.b16 %v30
  %v144 = vunpack.c.l.b16 %v31
  %v145 = vunpack.c.h.b16 %v31
  %v146 = vunpack.c.l.b16 %v32
  %v147 = vunpack.c.h.b16 %v32
  %v148 = vunpack.c.l.b16 %v33
  %v149 = vunpack.c.h.b16 %v33
  %v150 = vunpack.c.l.b16 %v34
  %v151 = vunpack.c.h.b16 %v34
  %v152 = vunpack.c.l.b16 %v35
  %v153 = vunpack.c.h.b16 %v35
  %v154 = vunpack.c.l.b16 %v36
  %v155 = vunpack.c.h.b16 %v36
  %v156 = vunpack.c.l.b16 %v37
  %v157 = vunpack.c.h.b16 %v37
  %v158 = vunpack.c.l.b16 %v38
  %v159 = vunpack.c.h.b16 %v38
  %v160 = vunpack.c.l.b16 %v39
  %v161 = vunpack.c.h.b16 %v39
  %v162 = vunpack.c.l.b16 %v40
  %v163 = vunpack.c.h.b16 %v40
  %v164 = vunpack.c.l.b16 %v41
  %v165 = vunpack.c.h.b16 %v41
  %v166 = vunpack.c.l.b16 %v42
  %v167 = vunpack.c.h.b16 %v42
  %v168 = vunpack.c.l.b16 %v43
  %v169 = vunpack.c.h.b16 %v43
  %v170 = vunpack.c.l.b16 %v44
  %v171 = vunpack.c.h.b16 %v44
  %v172 = vunpack.c.l.b16 %v45
  %v173 = vunpack.c.h.b16 %v45
  %v174 = vunpack.c.l.b16 %v46
  %v175 = vunpack.c.h.b16 %v46
  %v176 = vunpack.c.l.b16 %v47
  %v177 = vunpack.c.h.b16 %v47
  %v178 = vunpack.c.l.b16 %v48
  %v179 = vunpack.c.h.b16 %v48
  %v180 = vunpack.c.l.b16 %v49
  %v181 = vunpack.c.h.b16 %v49
  %v182 = vunpack.c.l.b16 %v50
  %v183 = vunpack.c.h.b16 %v50
  %v184 = vunpack.c.l.b16 %v51
  %v185 = vunpack.c.h.b16 %v51
  %v186 = vunpack.c.l.b16 %v52
  %v187 = vunpack.c.h.b16 %v52
  %v188 = vunpack.c.l.b16 %v53
  %v189 = vunpack.c.h.b16 %v53
  %v190 = vunpack.c.l.b16 %v54
  %v191 = vunpack.c.h.b16 %v54
  %v192 = vunpack.c.l.b16 %v55
  %v193 = vunpack.c.h.b16 %v55
  %v194 = vunpack.c.l.b16 %v56
  %v195 = vunpack.c.h.b16 %v56
  %v196 = vunpack.c.l.b16 %v57
  %v197 = vunpack.c.h.b16 %v57
  %v198 = vunpack.c.l.b16 %v58
  %v199 = vunpack.c.h.b16 %v58
  %v200 = vunpack.c.l.b16 %v59
  %v201 = vunpack.c.h.b16 %v59
  %v202 = vunpack.c.l.b16 %v60
  %v203 = vunpack.c.h.b16 %v60
  %v204 = vunpack.c.l.b16 %v61
  %v205 = vunpack.c.h.b16 %v61
  %v206 = vunpack.c.l.b16 %v62
  %v207 = vunpack.c.h.b16 %v62
  %v208 = vunpack.c.l.b16 %v63
  %v209 = vunpack.c.h.b16 %v63
  %v210 = vunpack.c.l.b16 %v64
  %v211 = vunpack.c.h.b16 %v64
  %v212 = vunpack.c.l.b16 %v65
  %v213 = vunpack.c.h.b16 %v65
  %v214 = vunpack.c.l.b16 %v66
  %v215 = vunpack.c.h.b16 %v66
  %v216 = vunpack.c.l.b16 %v67
  %v217 = vunpack.c.h.b16 %v67
  %v218 = vunpack.c.l.b16 %v68
  %v219 = vunpack.c.h.b16 %v68
  %v220 = vunpack.c.l.b16 %v69
  %v221 = vunpack.c.h.b16 %v69
  %v222 = vunpack.c.l.b16 %v70
  %v223 = vunpack.c.h.b16 %v70
  %v224 = vunpack.c.l.b16 %v71
  %v225 = vunpack.c.h.b16 %v71
  %v226 = vunpack.c.l.b16 %v72
  %v227 = vunpack.c.h.b16 %v72
  %v228 = vunpack.c.l.b16 %v73
  %v229 = vunpack.c.h.b16 %v73
  %v230 = vunpack.c.l.b16 %v74
  %v231 = vunpack.c.h.b16 %v74
  %v232 = vunpack.c.l.b16 %v75
  %v233 = vunpack.c.h.b16 %v75
  %v234 = vunpack.c.l.b16 %v76
  %v235 = vunpack.c.h.b16 %v76
  %v236 = vunpack.c.l.b16 %v77
  %v237 = vunpack.c.h.b16 %v77
  %v238 = vpack.c.b16 %v144, %v142
  %v239 = vpack.c.b16 %v145, %v143
  %v240 = vpack.c.b16 %v148, %v146
  %v241 = vpack.c.b16 %v149, %v147
  %v242 = vpack.c.b16 %v152, %v150
  %v243 = vpack.c.b16 %v153, %v151
  %v244 = vpack.c.b16 %v156, %v154
  %v245 = vpack.c.b16 %v157, %v155
  %v246 = vpack.c.b16 %v160, %v158
  %v247 = vpack.c.b16 %v161, %v159
  %v248 = vpack.c.b16 %v164, %v162
  %v249 = vpack.c.b16 %v165, %v163
  %v250 = vpack.c.b16 %v168, %v166
  %v251 = vpack.c.b16 %v169, %v167
  %v252 = vpack.c.b16 %v172, %v170
  %v253 = vpack.c.b16 %v173, %v171
  %v254 = vpack.c.b16 %v176, %v174
  %v255 = vpack.c.b16 %v177, %v175
  %v256 = vpack.c.b16 %v180, %v178
  %v257 = vpack.c.b16 %v181, %v179
  %v258 = vpack.c.b16 %v184, %v182
  %v259 = vpack.c.b16 %v185, %v183
  %v260 = vpack.c.b16 %v188, %v186
  %v261 = vpack.c.b16 %v189, %v187
  %v262 = vpack.c.b16 %v192, %v190
  %v263 = vpack.c.b16 %v193, %v191
  %v264 = vpack.c.b16 %v196, %v194
  %v265 = vpack.c.b16 %v197, %v195
  %v266 = vpack.c.b16 %v200, %v198
  %v267 = vpack.c.b16 %v201, %v199
  %v268 = vpack.c.b16 %v204, %v202
  %v269 = vpack.c.b16 %v205, %v203
  %v270 = vpack.c.b16 %v208, %v206
  %v271 = vpack.c.b16 %v209, %v207
  %v272 = vpack.c.b16 %v212, %v210
  %v273 = vpack.c.b16 %v213, %v211
  %v274 = vpack.c.b16 %v216, %v214
  %v275 = vpack.c.b16 %v217, %v215
  %v276 = vpack.c.b16 %v220, %v218
  %v277 = vpack.c.b16 %v221, %v219
  %v278 = vpack.c.b16 %v224, %v222
  %v279 = vpack.c.b16 %v225, %v223
  %v280 = vpack.c.b16 %v228, %v226
  %v281 = vpack.c.b16 %v229, %v227
  %v282 = vpack.c.b16 %v232, %v230
  %v283 = vpack.c.b16 %v233, %v231
  %v284 = vpack.c.b16 %v236, %v234
  %v285 = vpack.c.b16 %v237, %v235
  %334 = vmatpush.bf16.msra.mxu0 %v252
  %335 = vmatpush.bf16.msra.mxu0 %v250
  %336 = vmatpush.bf16.msra.mxu0 %v248
  %337 = vmatpush.bf16.msra.mxu0 %v246
  %338 = vmatpush.bf16.msra.mxu0 %v244
  %339 = vmatpush.bf16.msra.mxu0 %v242
  %340 = vmatpush.bf16.msra.mxu0 %v240
  %341 = vmatpush.bf16.msra.mxu0 %v238
  %342 = vmatmul.bf16.gmra.mxu0 %v88
  %v343 = vpop.f32.mrf.mxu0
  %v344 = vadd.f32 0.0, %v343
  %v345 = vpop.f32.mrf.mxu0
  %v346 = vadd.f32 0.0, %v345
  %347 = vdwg.mxu0
  %348 = vmatpush.bf16.msra.mxu0 %v268
  %349 = vmatpush.bf16.msra.mxu0 %v266
  %350 = vmatpush.bf16.msra.mxu0 %v264
  %351 = vmatpush.bf16.msra.mxu0 %v262
  %352 = vmatpush.bf16.msra.mxu0 %v260
  %353 = vmatpush.bf16.msra.mxu0 %v258
  %354 = vmatpush.bf16.msra.mxu0 %v256
  %355 = vmatpush.bf16.msra.mxu0 %v254
  %356 = vmatmul.bf16.gmra.mxu0 %v89
  %v357 = vpop.f32.mrf.mxu0
  %v358 = vadd.f32 %v344, %v357
  %v359 = vpop.f32.mrf.mxu0
  %v360 = vadd.f32 %v346, %v359
  %361 = vdwg.mxu0
  %362 = vmatpush.bf16.msra.mxu0 %v284
  %363 = vmatpush.bf16.msra.mxu0 %v282
  %364 = vmatpush.bf16.msra.mxu0 %v280
  %365 = vmatpush.bf16.msra.mxu0 %v278
  %366 = vmatpush.bf16.msra.mxu0 %v276
  %367 = vmatpush.bf16.msra.mxu0 %v274
  %368 = vmatpush.bf16.msra.mxu0 %v272
  %369 = vmatpush.bf16.msra.mxu0 %v270
  %370 = vmatmul.bf16.gmra.mxu0 %v90
  %v371 = vpop.f32.mrf.mxu0
  %v372 = vadd.f32 %v358, %v371
  %v373 = vpop.f32.mrf.mxu0
  %v374 = vadd.f32 %v360, %v373
  %375 = vdwg.mxu0
  %376 = vmatpush.bf16.msra.mxu0 %v253
  %377 = vmatpush.bf16.msra.mxu0 %v251
  %378 = vmatpush.bf16.msra.mxu0 %v249
  %379 = vmatpush.bf16.msra.mxu0 %v247
  %380 = vmatpush.bf16.msra.mxu0 %v245
  %381 = vmatpush.bf16.msra.mxu0 %v243
  %382 = vmatpush.bf16.msra.mxu0 %v241
  %383 = vmatpush.bf16.msra.mxu0 %v239
  %384 = vmatmul.bf16.gmra.mxu0 %v88
  %v385 = vpop.f32.mrf.mxu0
  %v386 = vadd.f32 0.0, %v385
  %v387 = vpop.f32.mrf.mxu0
  %v388 = vadd.f32 0.0, %v387
  %389 = vdwg.mxu0
  %390 = vmatpush.bf16.msra.mxu0 %v269
  %391 = vmatpush.bf16.msra.mxu0 %v267
  %392 = vmatpush.bf16.msra.mxu0 %v265
  %393 = vmatpush.bf16.msra.mxu0 %v263
  %394 = vmatpush.bf16.msra.mxu0 %v261
  %395 = vmatpush.bf16.msra.mxu0 %v259
  %396 = vmatpush.bf16.msra.mxu0 %v257
  %397 = vmatpush.bf16.msra.mxu0 %v255
  %398 = vmatmul.bf16.gmra.mxu0 %v89
  %v399 = vpop.f32.mrf.mxu0
  %v400 = vadd.f32 %v386, %v399
  %v401 = vpop.f32.mrf.mxu0
  %v402 = vadd.f32 %v388, %v401
  %403 = vdwg.mxu0
  %404 = vmatpush.bf16.msra.mxu0 %v285
  %405 = vmatpush.bf16.msra.mxu0 %v283
  %406 = vmatpush.bf16.msra.mxu0 %v281
  %407 = vmatpush.bf16.msra.mxu0 %v279
  %408 = vmatpush.bf16.msra.mxu0 %v277
  %409 = vmatpush.bf16.msra.mxu0 %v275
  %410 = vmatpush.bf16.msra.mxu0 %v273
  %411 = vmatpush.bf16.msra.mxu0 %v271
  %412 = vmatmul.bf16.gmra.mxu0 %v90
  %v413 = vpop.f32.mrf.mxu0
  %v414 = vadd.f32 %v400, %v413
  %v415 = vpop.f32.mrf.mxu0
  %v416 = vadd.f32 %v402, %v415
  %417 = vdwg.mxu0
  %v418 = vadd.f32 %v22, %v372
  %v419 = vadd.f32 %v23, %v414
  %v420 = vadd.f32 %v24, %v374
  %v421 = vadd.f32 %v25, %v416
  %422 = vst [vmem:[#allocation2] sm:$0xff] %v418
  %423 = vst [vmem:[#allocation2 + $0x8] sm:$0xff] %v419
  %424 = vst [vmem:[#allocation2 + $0x10] sm:$0xff] %v420
  %425 = vst [vmem:[#allocation2 + $0x18] sm:$0xff] %v421
  // Predicated region
  $region18: #{phasenet_forward.11} parent=0 // pred_check
    %p426 = pneg %p14
  $region19: #{phasenet_forward.11} parent=0 // pred_check_branch
    %428 = sbr.rel (%p426) target = $region21
  $region20: #{phasenet_forward.11} parent=0 // pred_region
    %v429 = vld [vmem:[#allocation2] sm:$0xff]
    %v430 = vld [vmem:[#allocation2 + $0x8] sm:$0xff]
    %v431 = vld [vmem:[#allocation2 + $0x10] sm:$0xff]
    %v432 = vld [vmem:[#allocation2 + $0x18] sm:$0xff]
    %v433 = vld [vmem:[%s2] sm:$0x3]
    %v435 = vperm.slane %v433, 0
    %v436 = vperm.slane %v433, 1
    %v439 = vadd.f32 %v429, %v435
    %v440 = vadd.f32 %v430, %v436
    %v441 = vadd.f32 %v431, %v435
    %v442 = vadd.f32 %v432, %v436
    %v443 = vmax.f32 %v439, 0.0
    %v444 = vmax.f32 %v440, 0.0
    %v445 = vmax.f32 %v441, 0.0
    %v446 = vmax.f32 %v442, 0.0
    %447 = vst [vmem:[%s3] sm:$0xff] %v443
    %448 = vst [vmem:[%s3 + $0x8] sm:$0xff] %v444
    %449 = vst [vmem:[%s3 + $0x10] sm:$0xff] %v445
    %450 = vst [vmem:[%s3 + $0x18] sm:$0xff] %v446
  $region21: #{phasenet_forward.11} parent=0 // pred_fallthru
    _
  // Predicated region
  $region22: #{phasenet_forward.11} parent=0 // pred_check
    _
  $region23: #{phasenet_forward.11} parent=0 // pred_check_branch
    %452 = sbr.rel (0) target = $region25
  $region24: #{phasenet_forward.11} parent=0 // pred_region
    _
  $region25: #{phasenet_forward.11} parent=0 // pred_fallthru
    _
  // Predicated region
  $region26: #{phasenet_forward.11} parent=0 // pred_check
    _
  $region27: #{phasenet_forward.11} parent=0 // pred_check_branch
    %454 = sbr.rel (0) target = $region29
  $region28: #{phasenet_forward.11} parent=0 // pred_region
    _
  $region29: #{phasenet_forward.11} parent=0 // pred_fallthru
    _

</llo_original>
